<compile_context>
chip_gen: v6e
topology: v6e:2x2x1
jax: 0.10.0
libtpu: 0.0.40
codegen_flags: <defaults>
</compile_context>

<pallas_src>
import functools
import math

import jax
import jax.numpy as jnp
from jax.experimental import pallas as pl
from jax.experimental.pallas import tpu as pltpu


def _pick_tile(dim, candidates):
    """First candidate that evenly divides `dim`, else the full dim (legal:
    block == full array dim)."""
    for c in candidates:
        if dim % c == 0:
            return c
    return dim


# ----------------------------------------------------------------------------
# Kernel 1: tiled GEMM   y = x @ w  (+ bias) (+ relu) (+ residual & LayerNorm)
#   - operand tiles cast to bf16 in-kernel, f32 accumulation in VMEM scratch
#   - optional fused epilogue (requires tn == N for the LayerNorm)
# ----------------------------------------------------------------------------
def _make_linear_kernel(has_bias, relu, has_ln, eps):
    def kernel(*refs):
        idx = 0
        x_ref = refs[idx]; idx += 1
        w_ref = refs[idx]; idx += 1
        b_ref = res_ref = g_ref = beta_ref = None
        if has_bias:
            b_ref = refs[idx]; idx += 1
        if has_ln:
            res_ref = refs[idx]; g_ref = refs[idx + 1]; beta_ref = refs[idx + 2]
            idx += 3
        o_ref, acc_ref = refs[idx], refs[idx + 1]

        @pl.when(pl.program_id(2) == 0)
        def _():
            acc_ref[...] = jnp.zeros_like(acc_ref)

        acc_ref[...] += jnp.dot(x_ref[...].astype(jnp.bfloat16),
                                w_ref[...].astype(jnp.bfloat16),
                                preferred_element_type=jnp.float32)

        @pl.when(pl.program_id(2) == pl.num_programs(2) - 1)
        def _():
            y = acc_ref[...]
            if has_bias:
                y = y + b_ref[...]
            if relu:
                y = jnp.maximum(y, 0.0)
            if has_ln:
                y = y + res_ref[...].astype(jnp.float32)
                mu = jnp.mean(y, axis=-1, keepdims=True)
                yc = y - mu
                var = jnp.mean(yc * yc, axis=-1, keepdims=True)
                y = yc * jax.lax.rsqrt(var + eps)
                y = y * g_ref[...] + beta_ref[...]
            o_ref[...] = y.astype(o_ref.dtype)

    return kernel


def linear(x, w, b=None, *, relu=False, residual=None, ln_w=None, ln_b=None,
           out_dtype=jnp.bfloat16, eps=1e-5):
    """y = x @ w (+b) (+relu) (+residual, LayerNorm).  w is (K, N), i.e. already
    transposed / fused once in prepare_params."""
    M, K = x.shape
    _, N = w.shape
    has_bias = b is not None
    has_ln = ln_w is not None

    tm = _pick_tile(M, (256, 128, 64, 32, 16, 8))
    tk = _pick_tile(K, (512, 256, 128))
    tn = N if has_ln else _pick_tile(N, (512, 256, 128))
    grid = (M // tm, N // tn, K // tk)

    in_specs = [pl.BlockSpec((tm, tk), lambda i, j, kk: (i, kk)),
                pl.BlockSpec((tk, tn), lambda i, j, kk: (kk, j))]
    args = [x, w]
    if has_bias:  # skip the bias DMA entirely when absent
        in_specs.append(pl.BlockSpec((1, tn), lambda i, j, kk: (0, j)))
        args.append(b.reshape(1, N).astype(jnp.float32))
    if has_ln:
        in_specs.append(pl.BlockSpec((tm, N), lambda i, j, kk: (i, 0)))
        args.append(residual)
        in_specs.append(pl.BlockSpec((1, N), lambda i, j, kk: (0, 0)))
        args.append(ln_w.reshape(1, N).astype(jnp.float32))
        in_specs.append(pl.BlockSpec((1, N), lambda i, j, kk: (0, 0)))
        args.append(ln_b.reshape(1, N).astype(jnp.float32))

    return pl.pallas_call(
        _make_linear_kernel(has_bias, relu, has_ln, eps),
        out_shape=jax.ShapeDtypeStruct((M, N), out_dtype),
        grid=grid,
        in_specs=in_specs,
        out_specs=pl.BlockSpec((tm, tn), lambda i, j, kk: (i, j)),
        scratch_shapes=[pltpu.VMEM((tm, tn), jnp.float32)],
        compiler_params=pltpu.CompilerParams(
            dimension_semantics=("parallel", "parallel", "arbitrary")),
    )(*args)


# ----------------------------------------------------------------------------
# Kernel 2: attention core.  Grid = (B, S/tq, S/tk); ALL heads per grid point
# so `know` is streamed from HBM exactly once.  Online softmax per head with
# f32 running max / denominator / accumulator in VMEM scratch.
#   q,k,vs,vo : (B, S, E)  bf16, head-packed along E
#   qkn       : (B, S, nhead, E) bf16  — per-head q projected into know-space
#   know      : (B, S, S, E) f32 (raw input, cast to bf16 in-kernel)
#   adj, sm   : (B, nhead, S, S) f32
#   out       : (B, S, E) bf16
# ----------------------------------------------------------------------------
def _attn_kernel(q_ref, k_ref, vs_ref, vo_ref, qk_ref, kn_ref, adj_ref, sm_ref,
                 o_ref, m_sc, l_sc, acc_sc, *, nhead, head_dim, scaling):
    ki = pl.program_id(2)
    D = head_dim

    @pl.when(ki == 0)
    def _():
        m_sc[...] = jnp.full_like(m_sc, -jnp.inf)
        l_sc[...] = jnp.zeros_like(l_sc)
        acc_sc[...] = jnp.zeros_like(acc_sc)

    q = q_ref[0]                                    # (tq, E) bf16
    k = k_ref[0]                                    # (tk, E) bf16
    vs = vs_ref[0]                                  # (tk, E) bf16
    vo = vo_ref[0]                                  # (tk, E) bf16
    qk = qk_ref[0]                                  # (tq, nhead, E) bf16
    know = kn_ref[0].astype(jnp.bfloat16)           # (tq, tk, E): f32 read once

    # knowledge scores for all heads in one batched MXU contraction over E:
    #   s_kn[i, j, h] = sum_e know[i, j, e] * q_know[i, h, e]
    s_kn = jax.lax.dot_general(
        know, qk,
        dimension_numbers=(((2,), (2,)), ((0,), (0,))),
        preferred_element_type=jnp.float32)         # (tq, tk, nhead)

    for h in range(nhead):
        sl = slice(h * D, (h + 1) * D)
        # q . k^T on the MXU (trans-B lowers natively; no explicit transpose)
        s = jax.lax.dot_general(q[:, sl], k[:, sl],
                                dimension_numbers=(((1,), (1,)), ((), ())),
                                preferred_element_type=jnp.float32)  # (tq, tk)
        s = (s + s_kn[:, :, h]) * scaling
        adj = adj_ref[0, h]                         # (tq, tk)
        # mask_logic (DAG-ERC form): masked entries -> score - 1e30
        s = jnp.where(adj > 0.0, s, s - 1e30)

        # --- online softmax over the key axis ---
        m_prev = m_sc[h]                            # (tq, 1)
        m_new = jnp.maximum(m_prev, jnp.max(s, axis=-1, keepdims=True))
        alpha = jnp.exp(m_prev - m_new)
        p = jnp.exp(s - m_new)                      # (tq, tk)
        l_sc[h] = alpha * l_sc[h] + jnp.sum(p, axis=-1, keepdims=True)

        sm = sm_ref[0, h]                           # (tq, tk); o_mask = 1 - sm
        pv = (jnp.dot((p * sm).astype(jnp.bfloat16), vs[:, sl],
                      preferred_element_type=jnp.float32)
              + jnp.dot((p * (1.0 - sm)).astype(jnp.bfloat16), vo[:, sl],
                        preferred_element_type=jnp.float32))         # (tq, D)
        acc_sc[:, sl] = alpha * acc_sc[:, sl] + pv
        m_sc[h] = m_new

    @pl.when(ki == pl.num_programs(2) - 1)
    def _():
        tq = acc_sc.shape[0]
        l_full = jnp.concatenate(
            [jnp.broadcast_to(l_sc[h], (tq, D)) for h in range(nhead)], axis=-1)
        inv = pl.reciprocal(l_full, approx=True)
        o_ref[0] = (acc_sc[...] * inv).astype(o_ref.dtype)   # lane-dense store


def attention_core(q, k, vs, vo, qkn, know4, adj4, sm4, scaling, nhead):
    B, S, E = q.shape
    D = E // nhead

    # tk is the lane dim of the mask blocks: multiple of 128, or the full S.
    tk = 128 if S % 128 == 0 else S
    # TODO(synk): pad S to a multiple of 128 for large, non-128-aligned S.

    # tq: largest multiple-of-8 divisor of S keeping the f32 know block small
    # enough to double-buffer on v7x (<= ~4 MiB / buffer); smallest divisor
    # as a fallback, full S if nothing divides.
    budget = 4 * 1024 * 1024
    cands = [c for c in (256, 128, 64, 32, 16, 8) if S % c == 0]
    tq = S
    if cands:
        tq = cands[-1]
        for c in cands:
            if c * tk * E * know4.dtype.itemsize <= budget:
                tq = c
                break
    grid = (B, S // tq, S // tk)

    kern = functools.partial(_attn_kernel, nhead=nhead, head_dim=D,
                             scaling=scaling)
    return pl.pallas_call(
        kern,
        out_shape=jax.ShapeDtypeStruct((B, S, E), jnp.bfloat16),
        grid=grid,
        in_specs=[
            pl.BlockSpec((1, tq, E), lambda b, qi, ki: (b, qi, 0)),          # q
            pl.BlockSpec((1, tk, E), lambda b, qi, ki: (b, ki, 0)),          # k
            pl.BlockSpec((1, tk, E), lambda b, qi, ki: (b, ki, 0)),          # vs
            pl.BlockSpec((1, tk, E), lambda b, qi, ki: (b, ki, 0)),          # vo
            pl.BlockSpec((1, tq, nhead, E), lambda b, qi, ki: (b, qi, 0, 0)),  # q_know
            pl.BlockSpec((1, tq, tk, E), lambda b, qi, ki: (b, qi, ki, 0)),  # know
            pl.BlockSpec((1, nhead, tq, tk), lambda b, qi, ki: (b, 0, qi, ki)),  # adj
            pl.BlockSpec((1, nhead, tq, tk), lambda b, qi, ki: (b, 0, qi, ki)),  # s_mask
        ],
        out_specs=pl.BlockSpec((1, tq, E), lambda b, qi, ki: (b, qi, 0)),
        scratch_shapes=[pltpu.VMEM((nhead, tq, 1), jnp.float32),
                        pltpu.VMEM((nhead, tq, 1), jnp.float32),
                        pltpu.VMEM((tq, E), jnp.float32)],
        compiler_params=pltpu.CompilerParams(
            dimension_semantics=("parallel", "parallel", "arbitrary"),
            vmem_limit_bytes=48 * 1024 * 1024),
    )(q, k, vs, vo, qkn, know4, adj4, sm4)


# ----------------------------------------------------------------------------
# One-time parameter preparation (weight fusion / transpose / bf16 cast).
# ----------------------------------------------------------------------------
def prepare_params(p, nhead):
    E = p["q_w"].shape[0]
    D = E // nhead
    q_w, know_w = p["q_w"], p["know_w"]
    # Fold the knowledge projection onto the q side:  M_h = q_w_h^T @ know_w_h,
    # so q_know = x @ M_h and the projected `know` never exists in HBM.
    m_blocks = [q_w[h * D:(h + 1) * D, :].T @ know_w[h * D:(h + 1) * D, :]
                for h in range(nhead)]
    w_fused = jnp.concatenate(
        [p["q_w"].T, p["k_w"].T, p["vs_w"].T, p["vo_w"].T] + m_blocks, axis=1)
    return {
        "w_fused": w_fused.astype(jnp.bfloat16),        # (E, (4+nhead)E)
        "o_wt": p["o_w"].T.astype(jnp.bfloat16),        # (E, E)
        "lin1_wt": p["lin1_w"].T.astype(jnp.bfloat16),  # (E, FF)
        "lin1_b": p["lin1_b"],
        "lin2_wt": p["lin2_w"].T.astype(jnp.bfloat16),  # (FF, E)
        "lin2_b": p["lin2_b"],
        "norm_w": p["norm_w"], "norm_b": p["norm_b"],
        "mlp_norm_w": p["mlp_norm_w"], "mlp_norm_b": p["mlp_norm_b"],
    }


# ----------------------------------------------------------------------------
# Module forward
# ----------------------------------------------------------------------------
def transformer_layer_pallas(x, adj, s_mask, o_mask, know, pp, nhead):
    del o_mask  # reconstructed in-kernel as (1 - s_mask); see TODO at top
    S, B, E = x.shape
    D = E // nhead
    scaling = float(D) ** (-0.5)

    xb2d = jnp.transpose(x, (1, 0, 2)).reshape(B * S, E)       # batch-first once

    # one fused GEMM: q | k | v_s | v_o | per-head q->knowledge-space proj
    y = linear(xb2d, pp["w_fused"], out_dtype=jnp.bfloat16)    # (B*S, (4+nhead)E)
    q = y[:, 0 * E:1 * E].reshape(B, S, E)
    k = y[:, 1 * E:2 * E].reshape(B, S, E)
    vs = y[:, 2 * E:3 * E].reshape(B, S, E)
    vo = y[:, 3 * E:4 * E].reshape(B, S, E)
    qkn = y[:, 4 * E:].reshape(B, S, nhead, E)

    know4 = know.reshape(B, S, S, E)                           # free reshape (f32)
    adj4 = adj.reshape(B, nhead, S, S)
    sm4 = s_mask.reshape(B, nhead, S, S)

    attn = attention_core(q, k, vs, vo, qkn, know4, adj4, sm4, scaling, nhead)
    attn2d = attn.reshape(B * S, E)                            # bf16

    # dropout = identity (eval mode)
    # o-projection + residual + LayerNorm fused in the GEMM epilogue
    ss = linear(attn2d, pp["o_wt"], residual=xb2d,
                ln_w=pp["norm_w"], ln_b=pp["norm_b"], out_dtype=jnp.float32)

    # MLP (ff_net): lin1 + relu, then lin2 + residual + LayerNorm fused
    h = linear(ss, pp["lin1_wt"], pp["lin1_b"], relu=True,
               out_dtype=jnp.bfloat16)
    out2d = linear(h, pp["lin2_wt"], pp["lin2_b"], residual=ss,
                   ln_w=pp["mlp_norm_w"], ln_b=pp["mlp_norm_b"],
                   out_dtype=jnp.float32)

    out = out2d.reshape(B, S, E).transpose(1, 0, 2)            # back to (S, B, E)
    return out, None


# ----------------------------------------------------------------------------
# Pure-JAX reference (mirrors the PyTorch forward exactly) for validation
# ----------------------------------------------------------------------------
def _ln_ref(x, g, b, eps=1e-5):
    mu = x.mean(-1, keepdims=True)
    var = ((x - mu) ** 2).mean(-1, keepdims=True)
    return (x - mu) / jnp.sqrt(var + eps) * g + b


def reference_forward(x, adj, s_mask, o_mask, know, p, nhead):
    S, B, E = x.shape
    D = E // nhead
    BH = B * nhead
    scaling = float(D) ** (-0.5)

    kn = know.reshape(B * S * S, E) @ p["know_w"].T
    kn = kn.reshape(B, S * S, nhead, D).transpose(1, 0, 2, 3).reshape(S * S, BH, D)
    kn = kn.transpose(1, 0, 2).reshape(BH, S, S, D)

    x2d = x.reshape(S * B, E)
    q = (x2d @ p["q_w"].T).reshape(S, BH, D).transpose(1, 0, 2)[:, :, None, :]
    k = (x2d @ p["k_w"].T).reshape(S, BH, D).transpose(1, 0, 2)[:, None, :, :]
    vs = (x2d @ p["vs_w"].T).reshape(S, BH, D).transpose(1, 0, 2)[:, None, :, :]
    vo = (x2d @ p["vo_w"].T).reshape(S, BH, D).transpose(1, 0, 2)[:, None, :, :]

    aw = (q * (k + kn)).sum(3) * scaling
    aw = aw - (1.0 - adj) * 1e30
    aw = jax.nn.softmax(aw, axis=2)
    value = vs * s_mask + vo * o_mask
    attn_sum = (value * aw[..., None]).sum(2)
    attn_sum = attn_sum.transpose(1, 0, 2).reshape(S, B, E)
    x2 = (attn_sum.reshape(S * B, E) @ p["o_w"].T).reshape(S, B, E)

    ss = _ln_ref(x + x2, p["norm_w"], p["norm_b"])
    h = jax.nn.relu(ss.reshape(S * B, E) @ p["lin1_w"].T + p["lin1_b"])
    lin_out = (h @ p["lin2_w"].T + p["lin2_b"]).reshape(S, B, E)
    out = _ln_ref(lin_out + ss, p["mlp_norm_w"], p["mlp_norm_b"])
    return out


# ----------------------------------------------------------------------------
# Deterministic parameter init (PyTorch layout: weight = (out, in))
# ----------------------------------------------------------------------------
def _xavier(key, shape):
    fan_out, fan_in = shape
    limit = math.sqrt(6.0 / (fan_in + fan_out))
    return jax.random.uniform(key, shape, jnp.float32, -limit, limit)


def make_params(key, emb_dim, ff_dim):
    keys = jax.random.split(key, 12)
    return {
        "q_w": _xavier(keys[0], (emb_dim, emb_dim)),
        "k_w": _xavier(keys[1], (emb_dim, emb_dim)),
        "vs_w": _xavier(keys[2], (emb_dim, emb_dim)),
        "vo_w": _xavier(keys[3], (emb_dim, emb_dim)),
        "o_w": _xavier(keys[4], (emb_dim, emb_dim)),
        "know_w": _xavier(keys[5], (emb_dim, emb_dim)),
        "norm_w": jnp.ones((emb_dim,), jnp.float32)
                  + 0.01 * jax.random.normal(keys[6], (emb_dim,)),
        "norm_b": 0.01 * jax.random.normal(keys[7], (emb_dim,)),
        "lin1_w": _xavier(keys[8], (ff_dim, emb_dim)),
        "lin1_b": 0.01 * jax.random.normal(keys[9], (ff_dim,)),
        "lin2_w": _xavier(keys[10], (emb_dim, ff_dim)),
        "lin2_b": 0.01 * jax.random.normal(keys[11], (emb_dim,)),
        "mlp_norm_w": jnp.ones((emb_dim,), jnp.float32),
        "mlp_norm_b": jnp.zeros((emb_dim,), jnp.float32),
    }


if __name__ == "__main__":
    slen, bsz, emb_dim, nhead, ff_dim = 8, 2, 32, 4, 64
    BH = bsz * nhead

    key = jax.random.PRNGKey(0)
    k_x, k_know, k_adj, k_sm, k_p = jax.random.split(key, 5)

    x = jax.random.normal(k_x, (slen, bsz, emb_dim), jnp.float32)
    know = jax.random.normal(k_know, (bsz, slen * slen, emb_dim), jnp.float32)

    adj = (jax.random.uniform(k_adj, (BH, slen, slen)) > 0.5).astype(jnp.float32)
    adj = jnp.maximum(adj, jnp.eye(slen, dtype=jnp.float32)[None])  # valid rows

    s_mask = (jax.random.uniform(k_sm, (BH, slen, slen, 1)) > 0.5).astype(jnp.float32)
    o_mask = 1.0 - s_mask

    params = make_params(k_p, emb_dim, ff_dim)
    pp = prepare_params(params, nhead)   # one-time weight fusion / bf16 cast

    fwd = jax.jit(functools.partial(transformer_layer_pallas, nhead=nhead))
    out, _weight = fwd(x, adj, s_mask, o_mask, know, pp)
    out = jax.block_until_ready(out)

    ref = reference_forward(x, adj, s_mask, o_mask, know, params, nhead)
    assert out.shape == (slen, bsz, emb_dim)
    # bf16 matmul inputs with f32 accumulation -> bf16-level tolerance vs the
    # pure-f32 reference.
    assert jnp.allclose(out, ref, atol=5e-2, rtol=5e-2), (
        f"max abs err = {jnp.max(jnp.abs(out - ref))}")

    print("KERNEL_OK")
</pallas_src>

<mosaic_0001>
module attributes {stable_mosaic.version = 11 : i64} {
  func.func @kernel(%arg0: i32, %arg1: i32, %arg2: i32, %arg3: memref<16x32xf32, #tpu.memory_space<vmem>>, %arg4: memref<32x256xbf16, #tpu.memory_space<vmem>>, %arg5: memref<16x256xbf16, #tpu.memory_space<vmem>>, %arg6: memref<16x256xf32, #tpu.memory_space<vmem>>) attributes {dimension_semantics = [#tpu.dimension_semantics<parallel>, #tpu.dimension_semantics<parallel>, #tpu.dimension_semantics<arbitrary>], iteration_bounds = array<i64: 1, 1, 1>, scalar_prefetch = 0 : i64, scratch_operands = 1 : i64, tpu.core_type = #tpu.core_type<tc>, window_params = [{transform_indices = @transform_0, window_bounds = array<i64: 16, 32>}, {transform_indices = @transform_1, window_bounds = array<i64: 32, 256>}, {transform_indices = @transform_2, window_bounds = array<i64: 16, 256>}]} {
    %c0_i32 = arith.constant 0 : i32
    %0 = arith.cmpi eq, %arg2, %c0_i32 : i32
    %1 = arith.extui %0 : i1 to i32
    %c0_i32_0 = arith.constant 0 : i32
    %2 = arith.cmpi ne, %1, %c0_i32_0 : i32
    scf.if %2 {
      %cst_10 = arith.constant 0.000000e+00 : f32
      %13 = vector.broadcast %cst_10 : f32 to vector<16x256xf32>
      %c0_11 = arith.constant 0 : index
      %c0_12 = arith.constant 0 : index
      %14 = vector.load %arg6[%c0_11, %c0_12] : memref<16x256xf32, #tpu.memory_space<vmem>>, vector<16x256xf32>
      tpu.vector_store %arg6[%c0_11, %c0_12], %13 {strides = array<i32>} : memref<16x256xf32, #tpu.memory_space<vmem>>, vector<16x256xf32>,
    } else {
    }
    %c0 = arith.constant 0 : index
    %c0_1 = arith.constant 0 : index
    %3 = vector.load %arg6[%c0, %c0_1] : memref<16x256xf32, #tpu.memory_space<vmem>>, vector<16x256xf32>
    %c0_2 = arith.constant 0 : index
    %c0_3 = arith.constant 0 : index
    %4 = vector.load %arg3[%c0_2, %c0_3] : memref<16x32xf32, #tpu.memory_space<vmem>>, vector<16x32xf32>
    %5 = arith.truncf %4 : vector<16x32xf32> to vector<16x32xbf16>
    %c0_4 = arith.constant 0 : index
    %c0_5 = arith.constant 0 : index
    %6 = vector.load %arg4[%c0_4, %c0_5] : memref<32x256xbf16, #tpu.memory_space<vmem>>, vector<32x256xbf16>
    %cst = arith.constant dense<0.000000e+00> : vector<16x256xf32>
    %7 = tpu.matmul %5, %6, %cst {dimension_numbers = #tpu.dot_dimension_numbers<[1], [0], [0], [1], [0, 0, 1, 1], [], []>} : vector<16x32xbf16>, vector<32x256xbf16>, vector<16x256xf32> -> vector<16x256xf32>
    %8 = arith.addf %3, %7 : vector<16x256xf32>
    %c0_6 = arith.constant 0 : index
    %c0_7 = arith.constant 0 : index
    %9 = vector.load %arg6[%c0_6, %c0_7] : memref<16x256xf32, #tpu.memory_space<vmem>>, vector<16x256xf32>
    tpu.vector_store %arg6[%c0_6, %c0_7], %8 {strides = array<i32>} : memref<16x256xf32, #tpu.memory_space<vmem>>, vector<16x256xf32>,
    %c0_i32_8 = arith.constant 0 : i32
    %10 = arith.cmpi eq, %arg2, %c0_i32_8 : i32
    %11 = arith.extui %10 : i1 to i32
    %c0_i32_9 = arith.constant 0 : i32
    %12 = arith.cmpi ne, %11, %c0_i32_9 : i32
    scf.if %12 {
      %c0_10 = arith.constant 0 : index
      %c0_11 = arith.constant 0 : index
      %13 = vector.load %arg6[%c0_10, %c0_11] : memref<16x256xf32, #tpu.memory_space<vmem>>, vector<16x256xf32>
      %14 = arith.truncf %13 : vector<16x256xf32> to vector<16x256xbf16>
      %c0_12 = arith.constant 0 : index
      %c0_13 = arith.constant 0 : index
      %15 = vector.load %arg5[%c0_12, %c0_13] : memref<16x256xbf16, #tpu.memory_space<vmem>>, vector<16x256xbf16>
      tpu.vector_store %arg5[%c0_12, %c0_13], %14 {strides = array<i32>} : memref<16x256xbf16, #tpu.memory_space<vmem>>, vector<16x256xbf16>,
    } else {
    }
    return
  }
  func.func @transform_0(%arg0: i32, %arg1: i32, %arg2: i32) -> (i32, i32) {
    %c0_i32 = arith.constant 0 : i32
    return %arg0, %arg2 : i32, i32
  }
  func.func @transform_1(%arg0: i32, %arg1: i32, %arg2: i32) -> (i32, i32) {
    %c0_i32 = arith.constant 0 : i32
    return %arg2, %arg1 : i32, i32
  }
  func.func @transform_2(%arg0: i32, %arg1: i32, %arg2: i32) -> (i32, i32) {
    %c0_i32 = arith.constant 0 : i32
    return %arg0, %arg1 : i32, i32
  }
}

module attributes {stable_mosaic.version = 11 : i64} {
  func.func @kernel(%arg0: i32, %arg1: i32, %arg2: i32, %arg3: memref<16x32xf32, #tpu.memory_space<vmem>>, %arg4: memref<32x64xbf16, #tpu.memory_space<vmem>>, %arg5: memref<1x64xf32, #tpu.memory_space<vmem>>, %arg6: memref<16x64xbf16, #tpu.memory_space<vmem>>, %arg7: memref<16x64xf32, #tpu.memory_space<vmem>>) attributes {dimension_semantics = [#tpu.dimension_semantics<parallel>, #tpu.dimension_semantics<parallel>, #tpu.dimension_semantics<arbitrary>], iteration_bounds = array<i64: 1, 1, 1>, scalar_prefetch = 0 : i64, scratch_operands = 1 : i64, tpu.core_type = #tpu.core_type<tc>, window_params = [{transform_indices = @transform_0, window_bounds = array<i64: 16, 32>}, {transform_indices = @transform_1, window_bounds = array<i64: 32, 64>}, {transform_indices = @transform_2, window_bounds = array<i64: 1, 64>}, {transform_indices = @transform_3, window_bounds = array<i64: 16, 64>}]} {
    %c0_i32 = arith.constant 0 : i32
    %0 = arith.cmpi eq, %arg2, %c0_i32 : i32
    %1 = arith.extui %0 : i1 to i32
    %c0_i32_0 = arith.constant 0 : i32
    %2 = arith.cmpi ne, %1, %c0_i32_0 : i32
    scf.if %2 {
      %cst_10 = arith.constant 0.000000e+00 : f32
      %13 = vector.broadcast %cst_10 : f32 to vector<16x64xf32>
      %c0_11 = arith.constant 0 : index
      %c0_12 = arith.constant 0 : index
      %14 = vector.load %arg7[%c0_11, %c0_12] : memref<16x64xf32, #tpu.memory_space<vmem>>, vector<16x64xf32>
      tpu.vector_store %arg7[%c0_11, %c0_12], %13 {strides = array<i32>} : memref<16x64xf32, #tpu.memory_space<vmem>>, vector<16x64xf32>,
    } else {
    }
    %c0 = arith.constant 0 : index
    %c0_1 = arith.constant 0 : index
    %3 = vector.load %arg7[%c0, %c0_1] : memref<16x64xf32, #tpu.memory_space<vmem>>, vector<16x64xf32>
    %c0_2 = arith.constant 0 : index
    %c0_3 = arith.constant 0 : index
    %4 = vector.load %arg3[%c0_2, %c0_3] : memref<16x32xf32, #tpu.memory_space<vmem>>, vector<16x32xf32>
    %5 = arith.truncf %4 : vector<16x32xf32> to vector<16x32xbf16>
    %c0_4 = arith.constant 0 : index
    %c0_5 = arith.constant 0 : index
    %6 = vector.load %arg4[%c0_4, %c0_5] : memref<32x64xbf16, #tpu.memory_space<vmem>>, vector<32x64xbf16>
    %cst = arith.constant dense<0.000000e+00> : vector<16x64xf32>
    %7 = tpu.matmul %5, %6, %cst {dimension_numbers = #tpu.dot_dimension_numbers<[1], [0], [0], [1], [0, 0, 1, 1], [], []>} : vector<16x32xbf16>, vector<32x64xbf16>, vector<16x64xf32> -> vector<16x64xf32>
    %8 = arith.addf %3, %7 : vector<16x64xf32>
    %c0_6 = arith.constant 0 : index
    %c0_7 = arith.constant 0 : index
    %9 = vector.load %arg7[%c0_6, %c0_7] : memref<16x64xf32, #tpu.memory_space<vmem>>, vector<16x64xf32>
    tpu.vector_store %arg7[%c0_6, %c0_7], %8 {strides = array<i32>} : memref<16x64xf32, #tpu.memory_space<vmem>>, vector<16x64xf32>,
    %c0_i32_8 = arith.constant 0 : i32
    %10 = arith.cmpi eq, %arg2, %c0_i32_8 : i32
    %11 = arith.extui %10 : i1 to i32
    %c0_i32_9 = arith.constant 0 : i32
    %12 = arith.cmpi ne, %11, %c0_i32_9 : i32
    scf.if %12 {
      %c0_10 = arith.constant 0 : index
      %c0_11 = arith.constant 0 : index
      %13 = vector.load %arg7[%c0_10, %c0_11] : memref<16x64xf32, #tpu.memory_space<vmem>>, vector<16x64xf32>
      %c0_12 = arith.constant 0 : index
      %c0_13 = arith.constant 0 : index
      %14 = vector.load %arg5[%c0_12, %c0_13] : memref<1x64xf32, #tpu.memory_space<vmem>>, vector<1x64xf32>
      %15 = vector.broadcast %14 : vector<1x64xf32> to vector<16x64xf32>
      %16 = arith.addf %13, %15 : vector<16x64xf32>
      %cst_14 = arith.constant 0.000000e+00 : f32
      %17 = vector.broadcast %cst_14 : f32 to vector<16x64xf32>
      %18 = arith.maximumf %16, %17 : vector<16x64xf32>
      %19 = arith.truncf %18 : vector<16x64xf32> to vector<16x64xbf16>
      %c0_15 = arith.constant 0 : index
      %c0_16 = arith.constant 0 : index
      %20 = vector.load %arg6[%c0_15, %c0_16] : memref<16x64xbf16, #tpu.memory_space<vmem>>, vector<16x64xbf16>
      tpu.vector_store %arg6[%c0_15, %c0_16], %19 {strides = array<i32>} : memref<16x64xbf16, #tpu.memory_space<vmem>>, vector<16x64xbf16>,
    } else {
    }
    return
  }
  func.func @transform_0(%arg0: i32, %arg1: i32, %arg2: i32) -> (i32, i32) {
    %c0_i32 = arith.constant 0 : i32
    return %arg0, %arg2 : i32, i32
  }
  func.func @transform_1(%arg0: i32, %arg1: i32, %arg2: i32) -> (i32, i32) {
    %c0_i32 = arith.constant 0 : i32
    return %arg2, %arg1 : i32, i32
  }
  func.func @transform_2(%arg0: i32, %arg1: i32, %arg2: i32) -> (i32, i32) {
    %c0_i32 = arith.constant 0 : i32
    %c0_i32_0 = arith.constant 0 : i32
    return %c0_i32, %arg1 : i32, i32
  }
  func.func @transform_3(%arg0: i32, %arg1: i32, %arg2: i32) -> (i32, i32) {
    %c0_i32 = arith.constant 0 : i32
    return %arg0, %arg1 : i32, i32
  }
}

module attributes {stable_mosaic.version = 11 : i64} {
  func.func @kernel(%arg0: i32, %arg1: i32, %arg2: i32, %arg3: memref<16x32xbf16, #tpu.memory_space<vmem>>, %arg4: memref<32x32xbf16, #tpu.memory_space<vmem>>, %arg5: memref<16x32xf32, #tpu.memory_space<vmem>>, %arg6: memref<1x32xf32, #tpu.memory_space<vmem>>, %arg7: memref<1x32xf32, #tpu.memory_space<vmem>>, %arg8: memref<16x32xf32, #tpu.memory_space<vmem>>, %arg9: memref<16x32xf32, #tpu.memory_space<vmem>>) attributes {dimension_semantics = [#tpu.dimension_semantics<parallel>, #tpu.dimension_semantics<parallel>, #tpu.dimension_semantics<arbitrary>], iteration_bounds = array<i64: 1, 1, 1>, scalar_prefetch = 0 : i64, scratch_operands = 1 : i64, tpu.core_type = #tpu.core_type<tc>, window_params = [{transform_indices = @transform_0, window_bounds = array<i64: 16, 32>}, {transform_indices = @transform_1, window_bounds = array<i64: 32, 32>}, {transform_indices = @transform_2, window_bounds = array<i64: 16, 32>}, {pipeline_mode = #tpu.pipeline_mode<synchronous>, transform_indices = @transform_3, window_bounds = array<i64: 1, 32>}, {pipeline_mode = #tpu.pipeline_mode<synchronous>, transform_indices = @transform_4, window_bounds = array<i64: 1, 32>}, {transform_indices = @transform_5, window_bounds = array<i64: 16, 32>}]} {
    %c0_i32 = arith.constant 0 : i32
    %0 = arith.cmpi eq, %arg2, %c0_i32 : i32
    %1 = arith.extui %0 : i1 to i32
    %c0_i32_0 = arith.constant 0 : i32
    %2 = arith.cmpi ne, %1, %c0_i32_0 : i32
    scf.if %2 {
      %cst_10 = arith.constant 0.000000e+00 : f32
      %12 = vector.broadcast %cst_10 : f32 to vector<16x32xf32>
      %c0_11 = arith.constant 0 : index
      %c0_12 = arith.constant 0 : index
      %13 = vector.load %arg9[%c0_11, %c0_12] : memref<16x32xf32, #tpu.memory_space<vmem>>, vector<16x32xf32>
      tpu.vector_store %arg9[%c0_11, %c0_12], %12 {strides = array<i32>} : memref<16x32xf32, #tpu.memory_space<vmem>>, vector<16x32xf32>,
    } else {
    }
    %c0 = arith.constant 0 : index
    %c0_1 = arith.constant 0 : index
    %3 = vector.load %arg9[%c0, %c0_1] : memref<16x32xf32, #tpu.memory_space<vmem>>, vector<16x32xf32>
    %c0_2 = arith.constant 0 : index
    %c0_3 = arith.constant 0 : index
    %4 = vector.load %arg3[%c0_2, %c0_3] : memref<16x32xbf16, #tpu.memory_space<vmem>>, vector<16x32xbf16>
    %c0_4 = arith.constant 0 : index
    %c0_5 = arith.constant 0 : index
    %5 = vector.load %arg4[%c0_4, %c0_5] : memref<32x32xbf16, #tpu.memory_space<vmem>>, vector<32x32xbf16>
    %cst = arith.constant dense<0.000000e+00> : vector<16x32xf32>
    %6 = tpu.matmul %4, %5, %cst {dimension_numbers = #tpu.dot_dimension_numbers<[1], [0], [0], [1], [0, 0, 1, 1], [], []>} : vector<16x32xbf16>, vector<32x32xbf16>, vector<16x32xf32> -> vector<16x32xf32>
    %7 = arith.addf %3, %6 : vector<16x32xf32>
    %c0_6 = arith.constant 0 : index
    %c0_7 = arith.constant 0 : index
    %8 = vector.load %arg9[%c0_6, %c0_7] : memref<16x32xf32, #tpu.memory_space<vmem>>, vector<16x32xf32>
    tpu.vector_store %arg9[%c0_6, %c0_7], %7 {strides = array<i32>} : memref<16x32xf32, #tpu.memory_space<vmem>>, vector<16x32xf32>,
    %c0_i32_8 = arith.constant 0 : i32
    %9 = arith.cmpi eq, %arg2, %c0_i32_8 : i32
    %10 = arith.extui %9 : i1 to i32
    %c0_i32_9 = arith.constant 0 : i32
    %11 = arith.cmpi ne, %10, %c0_i32_9 : i32
    scf.if %11 {
      %c0_10 = arith.constant 0 : index
      %c0_11 = arith.constant 0 : index
      %12 = vector.load %arg9[%c0_10, %c0_11] : memref<16x32xf32, #tpu.memory_space<vmem>>, vector<16x32xf32>
      %c0_12 = arith.constant 0 : index
      %c0_13 = arith.constant 0 : index
      %13 = vector.load %arg5[%c0_12, %c0_13] : memref<16x32xf32, #tpu.memory_space<vmem>>, vector<16x32xf32>
      %14 = arith.addf %12, %13 : vector<16x32xf32>
      %cst_14 = arith.constant dense<0.000000e+00> : vector<16xf32>
      %15 = vector.multi_reduction <add>, %14, %cst_14 [1] : vector<16x32xf32> to vector<16xf32>
      %16 = vector.shape_cast %15 : vector<16xf32> to vector<16x1xf32>
      %cst_15 = arith.constant 3.200000e+01 : f32
      %17 = vector.broadcast %cst_15 : f32 to vector<16x1xf32>
      %18 = arith.divf %16, %17 : vector<16x1xf32>
      %19 = vector.broadcast %18 : vector<16x1xf32> to vector<16x32xf32>
      %20 = arith.subf %14, %19 : vector<16x32xf32>
      %21 = arith.mulf %20, %20 : vector<16x32xf32>
      %cst_16 = arith.constant dense<0.000000e+00> : vector<16xf32>
      %22 = vector.multi_reduction <add>, %21, %cst_16 [1] : vector<16x32xf32> to vector<16xf32>
      %23 = vector.shape_cast %22 : vector<16xf32> to vector<16x1xf32>
      %cst_17 = arith.constant 3.200000e+01 : f32
      %24 = vector.broadcast %cst_17 : f32 to vector<16x1xf32>
      %25 = arith.divf %23, %24 : vector<16x1xf32>
      %cst_18 = arith.constant 9.99999974E-6 : f32
      %26 = vector.broadcast %cst_18 : f32 to vector<16x1xf32>
      %27 = arith.addf %25, %26 : vector<16x1xf32>
      %28 = math.rsqrt %27 : vector<16x1xf32>
      %29 = vector.broadcast %28 : vector<16x1xf32> to vector<16x32xf32>
      %30 = arith.mulf %20, %29 : vector<16x32xf32>
      %c0_19 = arith.constant 0 : index
      %c0_20 = arith.constant 0 : index
      %31 = vector.load %arg6[%c0_19, %c0_20] : memref<1x32xf32, #tpu.memory_space<vmem>>, vector<1x32xf32>
      %32 = vector.broadcast %31 : vector<1x32xf32> to vector<16x32xf32>
      %33 = arith.mulf %30, %32 : vector<16x32xf32>
      %c0_21 = arith.constant 0 : index
      %c0_22 = arith.constant 0 : index
      %34 = vector.load %arg7[%c0_21, %c0_22] : memref<1x32xf32, #tpu.memory_space<vmem>>, vector<1x32xf32>
      %35 = vector.broadcast %34 : vector<1x32xf32> to vector<16x32xf32>
      %36 = arith.addf %33, %35 : vector<16x32xf32>
      %c0_23 = arith.constant 0 : index
      %c0_24 = arith.constant 0 : index
      %37 = vector.load %arg8[%c0_23, %c0_24] : memref<16x32xf32, #tpu.memory_space<vmem>>, vector<16x32xf32>
      tpu.vector_store %arg8[%c0_23, %c0_24], %36 {strides = array<i32>} : memref<16x32xf32, #tpu.memory_space<vmem>>, vector<16x32xf32>,
    } else {
    }
    return
  }
  func.func @transform_0(%arg0: i32, %arg1: i32, %arg2: i32) -> (i32, i32) {
    %c0_i32 = arith.constant 0 : i32
    return %arg0, %arg2 : i32, i32
  }
  func.func @transform_1(%arg0: i32, %arg1: i32, %arg2: i32) -> (i32, i32) {
    %c0_i32 = arith.constant 0 : i32
    return %arg2, %arg1 : i32, i32
  }
  func.func @transform_2(%arg0: i32, %arg1: i32, %arg2: i32) -> (i32, i32) {
    %c0_i32 = arith.constant 0 : i32
    %c0_i32_0 = arith.constant 0 : i32
    return %arg0, %c0_i32 : i32, i32
  }
  func.func @transform_3(%arg0: i32, %arg1: i32, %arg2: i32) -> (i32, i32) {
    %c0_i32 = arith.constant 0 : i32
    %c0_i32_0 = arith.constant 0 : i32
    %c0_i32_1 = arith.constant 0 : i32
    return %c0_i32, %c0_i32_0 : i32, i32
  }
  func.func @transform_4(%arg0: i32, %arg1: i32, %arg2: i32) -> (i32, i32) {
    %c0_i32 = arith.constant 0 : i32
    %c0_i32_0 = arith.constant 0 : i32
    %c0_i32_1 = arith.constant 0 : i32
    return %c0_i32, %c0_i32_0 : i32, i32
  }
  func.func @transform_5(%arg0: i32, %arg1: i32, %arg2: i32) -> (i32, i32) {
    %c0_i32 = arith.constant 0 : i32
    return %arg0, %arg1 : i32, i32
  }
}

module attributes {stable_mosaic.version = 11 : i64} {
  func.func @_attn_kernel(%arg0: i32, %arg1: i32, %arg2: i32, %arg3: memref<1x8x32xbf16, #tpu.memory_space<vmem>>, %arg4: memref<1x8x32xbf16, #tpu.memory_space<vmem>>, %arg5: memref<1x8x32xbf16, #tpu.memory_space<vmem>>, %arg6: memref<1x8x32xbf16, #tpu.memory_space<vmem>>, %arg7: memref<1x8x4x32xbf16, #tpu.memory_space<vmem>>, %arg8: memref<1x8x8x32xf32, #tpu.memory_space<vmem>>, %arg9: memref<1x4x8x8xf32, #tpu.memory_space<vmem>>, %arg10: memref<1x4x8x8xf32, #tpu.memory_space<vmem>>, %arg11: memref<1x8x32xbf16, #tpu.memory_space<vmem>>, %arg12: memref<4x8x1xf32, #tpu.memory_space<vmem>>, %arg13: memref<4x8x1xf32, #tpu.memory_space<vmem>>, %arg14: memref<8x32xf32, #tpu.memory_space<vmem>>) attributes {dimension_semantics = [#tpu.dimension_semantics<parallel>, #tpu.dimension_semantics<parallel>, #tpu.dimension_semantics<arbitrary>], iteration_bounds = array<i64: 2, 1, 1>, scalar_prefetch = 0 : i64, scratch_operands = 3 : i64, tpu.core_type = #tpu.core_type<tc>, window_params = [{transform_indices = @transform_0, window_bounds = array<i64: 1, 8, 32>}, {transform_indices = @transform_1, window_bounds = array<i64: 1, 8, 32>}, {transform_indices = @transform_2, window_bounds = array<i64: 1, 8, 32>}, {transform_indices = @transform_3, window_bounds = array<i64: 1, 8, 32>}, {transform_indices = @transform_4, window_bounds = array<i64: 1, 8, 4, 32>}, {transform_indices = @transform_5, window_bounds = array<i64: 1, 8, 8, 32>}, {transform_indices = @transform_6, window_bounds = array<i64: 1, 4, 8, 8>}, {transform_indices = @transform_7, window_bounds = array<i64: 1, 4, 8, 8>}, {transform_indices = @transform_8, window_bounds = array<i64: 1, 8, 32>}]} {
    %c0_i32 = arith.constant 0 : i32
    %0 = arith.cmpi eq, %arg2, %c0_i32 : i32
    %1 = arith.extui %0 : i1 to i32
    %c0_i32_0 = arith.constant 0 : i32
    %2 = arith.cmpi ne, %1, %c0_i32_0 : i32
    scf.if %2 {
      %cst_148 = arith.constant 0xFF800000 : f32
      %240 = vector.broadcast %cst_148 : f32 to vector<4x8x1xf32>
      %c0_149 = arith.constant 0 : index
      %c0_150 = arith.constant 0 : index
      %c0_151 = arith.constant 0 : index
      %241 = vector.load %arg12[%c0_149, %c0_150, %c0_151] : memref<4x8x1xf32, #tpu.memory_space<vmem>>, vector<4x8x1xf32>
      tpu.vector_store %arg12[%c0_149, %c0_150, %c0_151], %240 {strides = array<i32>} : memref<4x8x1xf32, #tpu.memory_space<vmem>>, vector<4x8x1xf32>,
      %cst_152 = arith.constant 0.000000e+00 : f32
      %242 = vector.broadcast %cst_152 : f32 to vector<4x8x1xf32>
      %c0_153 = arith.constant 0 : index
      %c0_154 = arith.constant 0 : index
      %c0_155 = arith.constant 0 : index
      %243 = vector.load %arg13[%c0_153, %c0_154, %c0_155] : memref<4x8x1xf32, #tpu.memory_space<vmem>>, vector<4x8x1xf32>
      tpu.vector_store %arg13[%c0_153, %c0_154, %c0_155], %242 {strides = array<i32>} : memref<4x8x1xf32, #tpu.memory_space<vmem>>, vector<4x8x1xf32>,
      %cst_156 = arith.constant 0.000000e+00 : f32
      %244 = vector.broadcast %cst_156 : f32 to vector<8x32xf32>
      %c0_157 = arith.constant 0 : index
      %c0_158 = arith.constant 0 : index
      %245 = vector.load %arg14[%c0_157, %c0_158] : memref<8x32xf32, #tpu.memory_space<vmem>>, vector<8x32xf32>
      tpu.vector_store %arg14[%c0_157, %c0_158], %244 {strides = array<i32>} : memref<8x32xf32, #tpu.memory_space<vmem>>, vector<8x32xf32>,
    } else {
    }
    %c0 = arith.constant 0 : index
    %c0_1 = arith.constant 0 : index
    %c0_2 = arith.constant 0 : index
    %3 = vector.load %arg3[%c0, %c0_1, %c0_2] : memref<1x8x32xbf16, #tpu.memory_space<vmem>>, vector<1x8x32xbf16>
    %4 = vector.shape_cast %3 : vector<1x8x32xbf16> to vector<8x32xbf16>
    %c0_3 = arith.constant 0 : index
    %c0_4 = arith.constant 0 : index
    %c0_5 = arith.constant 0 : index
    %5 = vector.load %arg4[%c0_3, %c0_4, %c0_5] : memref<1x8x32xbf16, #tpu.memory_space<vmem>>, vector<1x8x32xbf16>
    %6 = vector.shape_cast %5 : vector<1x8x32xbf16> to vector<8x32xbf16>
    %c0_6 = arith.constant 0 : index
    %c0_7 = arith.constant 0 : index
    %c0_8 = arith.constant 0 : index
    %7 = vector.load %arg5[%c0_6, %c0_7, %c0_8] : memref<1x8x32xbf16, #tpu.memory_space<vmem>>, vector<1x8x32xbf16>
    %8 = vector.shape_cast %7 : vector<1x8x32xbf16> to vector<8x32xbf16>
    %c0_9 = arith.constant 0 : index
    %c0_10 = arith.constant 0 : index
    %c0_11 = arith.constant 0 : index
    %9 = vector.load %arg6[%c0_9, %c0_10, %c0_11] : memref<1x8x32xbf16, #tpu.memory_space<vmem>>, vector<1x8x32xbf16>
    %10 = vector.shape_cast %9 : vector<1x8x32xbf16> to vector<8x32xbf16>
    %c0_12 = arith.constant 0 : index
    %c0_13 = arith.constant 0 : index
    %c0_14 = arith.constant 0 : index
    %c0_15 = arith.constant 0 : index
    %11 = vector.load %arg7[%c0_12, %c0_13, %c0_14, %c0_15] : memref<1x8x4x32xbf16, #tpu.memory_space<vmem>>, vector<1x8x4x32xbf16>
    %12 = vector.shape_cast %11 : vector<1x8x4x32xbf16> to vector<8x4x32xbf16>
    %c0_16 = arith.constant 0 : index
    %c0_17 = arith.constant 0 : index
    %c0_18 = arith.constant 0 : index
    %c0_19 = arith.constant 0 : index
    %13 = vector.load %arg8[%c0_16, %c0_17, %c0_18, %c0_19] : memref<1x8x8x32xf32, #tpu.memory_space<vmem>>, vector<1x8x8x32xf32>
    %14 = vector.shape_cast %13 : vector<1x8x8x32xf32> to vector<8x8x32xf32>
    %15 = arith.truncf %14 : vector<8x8x32xf32> to vector<8x8x32xbf16>
    %cst = arith.constant dense<0.000000e+00> : vector<8x8x4xf32>
    %16 = tpu.matmul %15, %12, %cst {dimension_numbers = #tpu.dot_dimension_numbers<[2], [2], [1], [1], [0, 0, 0, 1, 1, 1], [0], [0]>} : vector<8x8x32xbf16>, vector<8x4x32xbf16>, vector<8x8x4xf32> -> vector<8x8x4xf32>
    %17 = vector.extract_strided_slice %4 {offsets = [0, 0], sizes = [8, 8], strides = [1, 1]} : vector<8x32xbf16> to vector<8x8xbf16>
    %18 = vector.extract_strided_slice %6 {offsets = [0, 0], sizes = [8, 8], strides = [1, 1]} : vector<8x32xbf16> to vector<8x8xbf16>
    %cst_20 = arith.constant dense<0.000000e+00> : vector<8x8xf32>
    %19 = tpu.matmul %17, %18, %cst_20 {dimension_numbers = #tpu.dot_dimension_numbers<[1], [1], [0], [0], [0, 0, 1, 0], [], []>} : vector<8x8xbf16>, vector<8x8xbf16>, vector<8x8xf32> -> vector<8x8xf32>
    %20 = vector.extract_strided_slice %16 {offsets = [0, 0, 0], sizes = [8, 8, 1], strides = [1, 1, 1]} : vector<8x8x4xf32> to vector<8x8x1xf32>
    %21 = vector.shape_cast %20 : vector<8x8x1xf32> to vector<8x8xf32>
    %22 = arith.addf %19, %21 : vector<8x8xf32>
    %cst_21 = arith.constant 0.353553385 : f32
    %23 = vector.broadcast %cst_21 : f32 to vector<8x8xf32>
    %24 = arith.mulf %22, %23 : vector<8x8xf32>
    %c0_22 = arith.constant 0 : index
    %c0_23 = arith.constant 0 : index
    %c0_24 = arith.constant 0 : index
    %c0_25 = arith.constant 0 : index
    %25 = vector.load %arg9[%c0_22, %c0_23, %c0_24, %c0_25] : memref<1x4x8x8xf32, #tpu.memory_space<vmem>>, vector<1x1x8x8xf32>
    %26 = vector.shape_cast %25 : vector<1x1x8x8xf32> to vector<8x8xf32>
    %cst_26 = arith.constant 0.000000e+00 : f32
    %27 = vector.broadcast %cst_26 : f32 to vector<8x8xf32>
    %28 = arith.cmpf ogt, %26, %27 : vector<8x8xf32>
    %cst_27 = arith.constant 1.000000e+30 : f32
    %29 = vector.broadcast %cst_27 : f32 to vector<8x8xf32>
    %30 = arith.subf %24, %29 : vector<8x8xf32>
    %31 = arith.select %28, %24, %30 : vector<8x8xi1>, vector<8x8xf32>
    %c0_28 = arith.constant 0 : index
    %c0_29 = arith.constant 0 : index
    %c0_30 = arith.constant 0 : index
    %32 = vector.load %arg12[%c0_28, %c0_29, %c0_30] : memref<4x8x1xf32, #tpu.memory_space<vmem>>, vector<1x8x1xf32>
    %33 = vector.shape_cast %32 : vector<1x8x1xf32> to vector<8x1xf32>
    %cst_31 = arith.constant dense<0xFF800000> : vector<8xf32>
    %34 = vector.multi_reduction <maximumf>, %31, %cst_31 [1] : vector<8x8xf32> to vector<8xf32>
    %35 = vector.shape_cast %34 : vector<8xf32> to vector<8x1xf32>
    %36 = arith.maximumf %33, %35 : vector<8x1xf32>
    %37 = arith.subf %33, %36 : vector<8x1xf32>
    %38 = math.exp %37 : vector<8x1xf32>
    %39 = vector.broadcast %36 : vector<8x1xf32> to vector<8x8xf32>
    %40 = arith.subf %31, %39 : vector<8x8xf32>
    %41 = math.exp %40 : vector<8x8xf32>
    %c0_32 = arith.constant 0 : index
    %c0_33 = arith.constant 0 : index
    %c0_34 = arith.constant 0 : index
    %42 = vector.load %arg13[%c0_32, %c0_33, %c0_34] : memref<4x8x1xf32, #tpu.memory_space<vmem>>, vector<1x8x1xf32>
    %43 = vector.shape_cast %42 : vector<1x8x1xf32> to vector<8x1xf32>
    %44 = arith.mulf %38, %43 : vector<8x1xf32>
    %cst_35 = arith.constant dense<0.000000e+00> : vector<8xf32>
    %45 = vector.multi_reduction <add>, %41, %cst_35 [1] : vector<8x8xf32> to vector<8xf32>
    %46 = vector.shape_cast %45 : vector<8xf32> to vector<8x1xf32>
    %47 = arith.addf %44, %46 : vector<8x1xf32>
    %c0_36 = arith.constant 0 : index
    %c0_37 = arith.constant 0 : index
    %c0_38 = arith.constant 0 : index
    %48 = vector.load %arg13[%c0_36, %c0_37, %c0_38] : memref<4x8x1xf32, #tpu.memory_space<vmem>>, vector<1x8x1xf32>
    %49 = vector.shape_cast %48 : vector<1x8x1xf32> to vector<8x1xf32>
    %50 = vector.shape_cast %47 : vector<8x1xf32> to vector<1x8x1xf32>
    tpu.vector_store %arg13[%c0_36, %c0_37, %c0_38], %50 {strides = array<i32>} : memref<4x8x1xf32, #tpu.memory_space<vmem>>, vector<1x8x1xf32>,
    %c0_39 = arith.constant 0 : index
    %c0_40 = arith.constant 0 : index
    %c0_41 = arith.constant 0 : index
    %c0_42 = arith.constant 0 : index
    %51 = vector.load %arg10[%c0_39, %c0_40, %c0_41, %c0_42] : memref<1x4x8x8xf32, #tpu.memory_space<vmem>>, vector<1x1x8x8xf32>
    %52 = vector.shape_cast %51 : vector<1x1x8x8xf32> to vector<8x8xf32>
    %53 = arith.mulf %41, %52 : vector<8x8xf32>
    %54 = arith.truncf %53 : vector<8x8xf32> to vector<8x8xbf16>
    %55 = vector.extract_strided_slice %8 {offsets = [0, 0], sizes = [8, 8], strides = [1, 1]} : vector<8x32xbf16> to vector<8x8xbf16>
    %cst_43 = arith.constant dense<0.000000e+00> : vector<8x8xf32>
    %56 = tpu.matmul %54, %55, %cst_43 {dimension_numbers = #tpu.dot_dimension_numbers<[1], [0], [0], [1], [0, 0, 1, 1], [], []>} : vector<8x8xbf16>, vector<8x8xbf16>, vector<8x8xf32> -> vector<8x8xf32>
    %cst_44 = arith.constant 1.000000e+00 : f32
    %57 = vector.broadcast %cst_44 : f32 to vector<8x8xf32>
    %58 = arith.subf %57, %52 : vector<8x8xf32>
    %59 = arith.mulf %41, %58 : vector<8x8xf32>
    %60 = arith.truncf %59 : vector<8x8xf32> to vector<8x8xbf16>
    %61 = vector.extract_strided_slice %10 {offsets = [0, 0], sizes = [8, 8], strides = [1, 1]} : vector<8x32xbf16> to vector<8x8xbf16>
    %cst_45 = arith.constant dense<0.000000e+00> : vector<8x8xf32>
    %62 = tpu.matmul %60, %61, %cst_45 {dimension_numbers = #tpu.dot_dimension_numbers<[1], [0], [0], [1], [0, 0, 1, 1], [], []>} : vector<8x8xbf16>, vector<8x8xbf16>, vector<8x8xf32> -> vector<8x8xf32>
    %63 = arith.addf %56, %62 : vector<8x8xf32>
    %c0_46 = arith.constant 0 : index
    %c0_47 = arith.constant 0 : index
    %64 = vector.load %arg14[%c0_46, %c0_47] : memref<8x32xf32, #tpu.memory_space<vmem>>, vector<8x8xf32>
    %65 = vector.broadcast %38 : vector<8x1xf32> to vector<8x8xf32>
    %66 = arith.mulf %65, %64 : vector<8x8xf32>
    %67 = arith.addf %66, %63 : vector<8x8xf32>
    %c0_48 = arith.constant 0 : index
    %c0_49 = arith.constant 0 : index
    %68 = vector.load %arg14[%c0_48, %c0_49] : memref<8x32xf32, #tpu.memory_space<vmem>>, vector<8x8xf32>
    tpu.vector_store %arg14[%c0_48, %c0_49], %67 {strides = array<i32>} : memref<8x32xf32, #tpu.memory_space<vmem>>, vector<8x8xf32>,
    %c0_50 = arith.constant 0 : index
    %c0_51 = arith.constant 0 : index
    %c0_52 = arith.constant 0 : index
    %69 = vector.load %arg12[%c0_50, %c0_51, %c0_52] : memref<4x8x1xf32, #tpu.memory_space<vmem>>, vector<1x8x1xf32>
    %70 = vector.shape_cast %69 : vector<1x8x1xf32> to vector<8x1xf32>
    %71 = vector.shape_cast %36 : vector<8x1xf32> to vector<1x8x1xf32>
    tpu.vector_store %arg12[%c0_50, %c0_51, %c0_52], %71 {strides = array<i32>} : memref<4x8x1xf32, #tpu.memory_space<vmem>>, vector<1x8x1xf32>,
    %72 = vector.extract_strided_slice %4 {offsets = [0, 8], sizes = [8, 8], strides = [1, 1]} : vector<8x32xbf16> to vector<8x8xbf16>
    %73 = vector.extract_strided_slice %6 {offsets = [0, 8], sizes = [8, 8], strides = [1, 1]} : vector<8x32xbf16> to vector<8x8xbf16>
    %cst_53 = arith.constant dense<0.000000e+00> : vector<8x8xf32>
    %74 = tpu.matmul %72, %73, %cst_53 {dimension_numbers = #tpu.dot_dimension_numbers<[1], [1], [0], [0], [0, 0, 1, 0], [], []>} : vector<8x8xbf16>, vector<8x8xbf16>, vector<8x8xf32> -> vector<8x8xf32>
    %75 = vector.extract_strided_slice %16 {offsets = [0, 0, 1], sizes = [8, 8, 1], strides = [1, 1, 1]} : vector<8x8x4xf32> to vector<8x8x1xf32>
    %76 = vector.shape_cast %75 : vector<8x8x1xf32> to vector<8x8xf32>
    %77 = arith.addf %74, %76 : vector<8x8xf32>
    %cst_54 = arith.constant 0.353553385 : f32
    %78 = vector.broadcast %cst_54 : f32 to vector<8x8xf32>
    %79 = arith.mulf %77, %78 : vector<8x8xf32>
    %c0_55 = arith.constant 0 : index
    %c1 = arith.constant 1 : index
    %c0_56 = arith.constant 0 : index
    %c0_57 = arith.constant 0 : index
    %80 = vector.load %arg9[%c0_55, %c1, %c0_56, %c0_57] : memref<1x4x8x8xf32, #tpu.memory_space<vmem>>, vector<1x1x8x8xf32>
    %81 = vector.shape_cast %80 : vector<1x1x8x8xf32> to vector<8x8xf32>
    %cst_58 = arith.constant 0.000000e+00 : f32
    %82 = vector.broadcast %cst_58 : f32 to vector<8x8xf32>
    %83 = arith.cmpf ogt, %81, %82 : vector<8x8xf32>
    %cst_59 = arith.constant 1.000000e+30 : f32
    %84 = vector.broadcast %cst_59 : f32 to vector<8x8xf32>
    %85 = arith.subf %79, %84 : vector<8x8xf32>
    %86 = arith.select %83, %79, %85 : vector<8x8xi1>, vector<8x8xf32>
    %c1_60 = arith.constant 1 : index
    %c0_61 = arith.constant 0 : index
    %c0_62 = arith.constant 0 : index
    %87 = vector.load %arg12[%c1_60, %c0_61, %c0_62] : memref<4x8x1xf32, #tpu.memory_space<vmem>>, vector<1x8x1xf32>
    %88 = vector.shape_cast %87 : vector<1x8x1xf32> to vector<8x1xf32>
    %cst_63 = arith.constant dense<0xFF800000> : vector<8xf32>
    %89 = vector.multi_reduction <maximumf>, %86, %cst_63 [1] : vector<8x8xf32> to vector<8xf32>
    %90 = vector.shape_cast %89 : vector<8xf32> to vector<8x1xf32>
    %91 = arith.maximumf %88, %90 : vector<8x1xf32>
    %92 = arith.subf %88, %91 : vector<8x1xf32>
    %93 = math.exp %92 : vector<8x1xf32>
    %94 = vector.broadcast %91 : vector<8x1xf32> to vector<8x8xf32>
    %95 = arith.subf %86, %94 : vector<8x8xf32>
    %96 = math.exp %95 : vector<8x8xf32>
    %c1_64 = arith.constant 1 : index
    %c0_65 = arith.constant 0 : index
    %c0_66 = arith.constant 0 : index
    %97 = vector.load %arg13[%c1_64, %c0_65, %c0_66] : memref<4x8x1xf32, #tpu.memory_space<vmem>>, vector<1x8x1xf32>
    %98 = vector.shape_cast %97 : vector<1x8x1xf32> to vector<8x1xf32>
    %99 = arith.mulf %93, %98 : vector<8x1xf32>
    %cst_67 = arith.constant dense<0.000000e+00> : vector<8xf32>
    %100 = vector.multi_reduction <add>, %96, %cst_67 [1] : vector<8x8xf32> to vector<8xf32>
    %101 = vector.shape_cast %100 : vector<8xf32> to vector<8x1xf32>
    %102 = arith.addf %99, %101 : vector<8x1xf32>
    %c1_68 = arith.constant 1 : index
    %c0_69 = arith.constant 0 : index
    %c0_70 = arith.constant 0 : index
    %103 = vector.load %arg13[%c1_68, %c0_69, %c0_70] : memref<4x8x1xf32, #tpu.memory_space<vmem>>, vector<1x8x1xf32>
    %104 = vector.shape_cast %103 : vector<1x8x1xf32> to vector<8x1xf32>
    %105 = vector.shape_cast %102 : vector<8x1xf32> to vector<1x8x1xf32>
    tpu.vector_store %arg13[%c1_68, %c0_69, %c0_70], %105 {strides = array<i32>} : memref<4x8x1xf32, #tpu.memory_space<vmem>>, vector<1x8x1xf32>,
    %c0_71 = arith.constant 0 : index
    %c1_72 = arith.constant 1 : index
    %c0_73 = arith.constant 0 : index
    %c0_74 = arith.constant 0 : index
    %106 = vector.load %arg10[%c0_71, %c1_72, %c0_73, %c0_74] : memref<1x4x8x8xf32, #tpu.memory_space<vmem>>, vector<1x1x8x8xf32>
    %107 = vector.shape_cast %106 : vector<1x1x8x8xf32> to vector<8x8xf32>
    %108 = arith.mulf %96, %107 : vector<8x8xf32>
    %109 = arith.truncf %108 : vector<8x8xf32> to vector<8x8xbf16>
    %110 = vector.extract_strided_slice %8 {offsets = [0, 8], sizes = [8, 8], strides = [1, 1]} : vector<8x32xbf16> to vector<8x8xbf16>
    %cst_75 = arith.constant dense<0.000000e+00> : vector<8x8xf32>
    %111 = tpu.matmul %109, %110, %cst_75 {dimension_numbers = #tpu.dot_dimension_numbers<[1], [0], [0], [1], [0, 0, 1, 1], [], []>} : vector<8x8xbf16>, vector<8x8xbf16>, vector<8x8xf32> -> vector<8x8xf32>
    %cst_76 = arith.constant 1.000000e+00 : f32
    %112 = vector.broadcast %cst_76 : f32 to vector<8x8xf32>
    %113 = arith.subf %112, %107 : vector<8x8xf32>
    %114 = arith.mulf %96, %113 : vector<8x8xf32>
    %115 = arith.truncf %114 : vector<8x8xf32> to vector<8x8xbf16>
    %116 = vector.extract_strided_slice %10 {offsets = [0, 8], sizes = [8, 8], strides = [1, 1]} : vector<8x32xbf16> to vector<8x8xbf16>
    %cst_77 = arith.constant dense<0.000000e+00> : vector<8x8xf32>
    %117 = tpu.matmul %115, %116, %cst_77 {dimension_numbers = #tpu.dot_dimension_numbers<[1], [0], [0], [1], [0, 0, 1, 1], [], []>} : vector<8x8xbf16>, vector<8x8xbf16>, vector<8x8xf32> -> vector<8x8xf32>
    %118 = arith.addf %111, %117 : vector<8x8xf32>
    %c0_78 = arith.constant 0 : index
    %c8 = arith.constant 8 : index
    %119 = vector.load %arg14[%c0_78, %c8] : memref<8x32xf32, #tpu.memory_space<vmem>>, vector<8x8xf32>
    %120 = vector.broadcast %93 : vector<8x1xf32> to vector<8x8xf32>
    %121 = arith.mulf %120, %119 : vector<8x8xf32>
    %122 = arith.addf %121, %118 : vector<8x8xf32>
    %c0_79 = arith.constant 0 : index
    %c8_80 = arith.constant 8 : index
    %123 = vector.load %arg14[%c0_79, %c8_80] : memref<8x32xf32, #tpu.memory_space<vmem>>, vector<8x8xf32>
    tpu.vector_store %arg14[%c0_79, %c8_80], %122 {strides = array<i32>} : memref<8x32xf32, #tpu.memory_space<vmem>>, vector<8x8xf32>,
    %c1_81 = arith.constant 1 : index
    %c0_82 = arith.constant 0 : index
    %c0_83 = arith.constant 0 : index
    %124 = vector.load %arg12[%c1_81, %c0_82, %c0_83] : memref<4x8x1xf32, #tpu.memory_space<vmem>>, vector<1x8x1xf32>
    %125 = vector.shape_cast %124 : vector<1x8x1xf32> to vector<8x1xf32>
    %126 = vector.shape_cast %91 : vector<8x1xf32> to vector<1x8x1xf32>
    tpu.vector_store %arg12[%c1_81, %c0_82, %c0_83], %126 {strides = array<i32>} : memref<4x8x1xf32, #tpu.memory_space<vmem>>, vector<1x8x1xf32>,
    %127 = vector.extract_strided_slice %4 {offsets = [0, 16], sizes = [8, 8], strides = [1, 1]} : vector<8x32xbf16> to vector<8x8xbf16>
    %128 = vector.extract_strided_slice %6 {offsets = [0, 16], sizes = [8, 8], strides = [1, 1]} : vector<8x32xbf16> to vector<8x8xbf16>
    %cst_84 = arith.constant dense<0.000000e+00> : vector<8x8xf32>
    %129 = tpu.matmul %127, %128, %cst_84 {dimension_numbers = #tpu.dot_dimension_numbers<[1], [1], [0], [0], [0, 0, 1, 0], [], []>} : vector<8x8xbf16>, vector<8x8xbf16>, vector<8x8xf32> -> vector<8x8xf32>
    %130 = vector.extract_strided_slice %16 {offsets = [0, 0, 2], sizes = [8, 8, 1], strides = [1, 1, 1]} : vector<8x8x4xf32> to vector<8x8x1xf32>
    %131 = vector.shape_cast %130 : vector<8x8x1xf32> to vector<8x8xf32>
    %132 = arith.addf %129, %131 : vector<8x8xf32>
    %cst_85 = arith.constant 0.353553385 : f32
    %133 = vector.broadcast %cst_85 : f32 to vector<8x8xf32>
    %134 = arith.mulf %132, %133 : vector<8x8xf32>
    %c0_86 = arith.constant 0 : index
    %c2 = arith.constant 2 : index
    %c0_87 = arith.constant 0 : index
    %c0_88 = arith.constant 0 : index
    %135 = vector.load %arg9[%c0_86, %c2, %c0_87, %c0_88] : memref<1x4x8x8xf32, #tpu.memory_space<vmem>>, vector<1x1x8x8xf32>
    %136 = vector.shape_cast %135 : vector<1x1x8x8xf32> to vector<8x8xf32>
    %cst_89 = arith.constant 0.000000e+00 : f32
    %137 = vector.broadcast %cst_89 : f32 to vector<8x8xf32>
    %138 = arith.cmpf ogt, %136, %137 : vector<8x8xf32>
    %cst_90 = arith.constant 1.000000e+30 : f32
    %139 = vector.broadcast %cst_90 : f32 to vector<8x8xf32>
    %140 = arith.subf %134, %139 : vector<8x8xf32>
    %141 = arith.select %138, %134, %140 : vector<8x8xi1>, vector<8x8xf32>
    %c2_91 = arith.constant 2 : index
    %c0_92 = arith.constant 0 : index
    %c0_93 = arith.constant 0 : index
    %142 = vector.load %arg12[%c2_91, %c0_92, %c0_93] : memref<4x8x1xf32, #tpu.memory_space<vmem>>, vector<1x8x1xf32>
    %143 = vector.shape_cast %142 : vector<1x8x1xf32> to vector<8x1xf32>
    %cst_94 = arith.constant dense<0xFF800000> : vector<8xf32>
    %144 = vector.multi_reduction <maximumf>, %141, %cst_94 [1] : vector<8x8xf32> to vector<8xf32>
    %145 = vector.shape_cast %144 : vector<8xf32> to vector<8x1xf32>
    %146 = arith.maximumf %143, %145 : vector<8x1xf32>
    %147 = arith.subf %143, %146 : vector<8x1xf32>
    %148 = math.exp %147 : vector<8x1xf32>
    %149 = vector.broadcast %146 : vector<8x1xf32> to vector<8x8xf32>
    %150 = arith.subf %141, %149 : vector<8x8xf32>
    %151 = math.exp %150 : vector<8x8xf32>
    %c2_95 = arith.constant 2 : index
    %c0_96 = arith.constant 0 : index
    %c0_97 = arith.constant 0 : index
    %152 = vector.load %arg13[%c2_95, %c0_96, %c0_97] : memref<4x8x1xf32, #tpu.memory_space<vmem>>, vector<1x8x1xf32>
    %153 = vector.shape_cast %152 : vector<1x8x1xf32> to vector<8x1xf32>
    %154 = arith.mulf %148, %153 : vector<8x1xf32>
    %cst_98 = arith.constant dense<0.000000e+00> : vector<8xf32>
    %155 = vector.multi_reduction <add>, %151, %cst_98 [1] : vector<8x8xf32> to vector<8xf32>
    %156 = vector.shape_cast %155 : vector<8xf32> to vector<8x1xf32>
    %157 = arith.addf %154, %156 : vector<8x1xf32>
    %c2_99 = arith.constant 2 : index
    %c0_100 = arith.constant 0 : index
    %c0_101 = arith.constant 0 : index
    %158 = vector.load %arg13[%c2_99, %c0_100, %c0_101] : memref<4x8x1xf32, #tpu.memory_space<vmem>>, vector<1x8x1xf32>
    %159 = vector.shape_cast %158 : vector<1x8x1xf32> to vector<8x1xf32>
    %160 = vector.shape_cast %157 : vector<8x1xf32> to vector<1x8x1xf32>
    tpu.vector_store %arg13[%c2_99, %c0_100, %c0_101], %160 {strides = array<i32>} : memref<4x8x1xf32, #tpu.memory_space<vmem>>, vector<1x8x1xf32>,
    %c0_102 = arith.constant 0 : index
    %c2_103 = arith.constant 2 : index
    %c0_104 = arith.constant 0 : index
    %c0_105 = arith.constant 0 : index
    %161 = vector.load %arg10[%c0_102, %c2_103, %c0_104, %c0_105] : memref<1x4x8x8xf32, #tpu.memory_space<vmem>>, vector<1x1x8x8xf32>
    %162 = vector.shape_cast %161 : vector<1x1x8x8xf32> to vector<8x8xf32>
    %163 = arith.mulf %151, %162 : vector<8x8xf32>
    %164 = arith.truncf %163 : vector<8x8xf32> to vector<8x8xbf16>
    %165 = vector.extract_strided_slice %8 {offsets = [0, 16], sizes = [8, 8], strides = [1, 1]} : vector<8x32xbf16> to vector<8x8xbf16>
    %cst_106 = arith.constant dense<0.000000e+00> : vector<8x8xf32>
    %166 = tpu.matmul %164, %165, %cst_106 {dimension_numbers = #tpu.dot_dimension_numbers<[1], [0], [0], [1], [0, 0, 1, 1], [], []>} : vector<8x8xbf16>, vector<8x8xbf16>, vector<8x8xf32> -> vector<8x8xf32>
    %cst_107 = arith.constant 1.000000e+00 : f32
    %167 = vector.broadcast %cst_107 : f32 to vector<8x8xf32>
    %168 = arith.subf %167, %162 : vector<8x8xf32>
    %169 = arith.mulf %151, %168 : vector<8x8xf32>
    %170 = arith.truncf %169 : vector<8x8xf32> to vector<8x8xbf16>
    %171 = vector.extract_strided_slice %10 {offsets = [0, 16], sizes = [8, 8], strides = [1, 1]} : vector<8x32xbf16> to vector<8x8xbf16>
    %cst_108 = arith.constant dense<0.000000e+00> : vector<8x8xf32>
    %172 = tpu.matmul %170, %171, %cst_108 {dimension_numbers = #tpu.dot_dimension_numbers<[1], [0], [0], [1], [0, 0, 1, 1], [], []>} : vector<8x8xbf16>, vector<8x8xbf16>, vector<8x8xf32> -> vector<8x8xf32>
    %173 = arith.addf %166, %172 : vector<8x8xf32>
    %c0_109 = arith.constant 0 : index
    %c16 = arith.constant 16 : index
    %174 = vector.load %arg14[%c0_109, %c16] : memref<8x32xf32, #tpu.memory_space<vmem>>, vector<8x8xf32>
    %175 = vector.broadcast %148 : vector<8x1xf32> to vector<8x8xf32>
    %176 = arith.mulf %175, %174 : vector<8x8xf32>
    %177 = arith.addf %176, %173 : vector<8x8xf32>
    %c0_110 = arith.constant 0 : index
    %c16_111 = arith.constant 16 : index
    %178 = vector.load %arg14[%c0_110, %c16_111] : memref<8x32xf32, #tpu.memory_space<vmem>>, vector<8x8xf32>
    tpu.vector_store %arg14[%c0_110, %c16_111], %177 {strides = array<i32>} : memref<8x32xf32, #tpu.memory_space<vmem>>, vector<8x8xf32>,
    %c2_112 = arith.constant 2 : index
    %c0_113 = arith.constant 0 : index
    %c0_114 = arith.constant 0 : index
    %179 = vector.load %arg12[%c2_112, %c0_113, %c0_114] : memref<4x8x1xf32, #tpu.memory_space<vmem>>, vector<1x8x1xf32>
    %180 = vector.shape_cast %179 : vector<1x8x1xf32> to vector<8x1xf32>
    %181 = vector.shape_cast %146 : vector<8x1xf32> to vector<1x8x1xf32>
    tpu.vector_store %arg12[%c2_112, %c0_113, %c0_114], %181 {strides = array<i32>} : memref<4x8x1xf32, #tpu.memory_space<vmem>>, vector<1x8x1xf32>,
    %182 = vector.extract_strided_slice %4 {offsets = [0, 24], sizes = [8, 8], strides = [1, 1]} : vector<8x32xbf16> to vector<8x8xbf16>
    %183 = vector.extract_strided_slice %6 {offsets = [0, 24], sizes = [8, 8], strides = [1, 1]} : vector<8x32xbf16> to vector<8x8xbf16>
    %cst_115 = arith.constant dense<0.000000e+00> : vector<8x8xf32>
    %184 = tpu.matmul %182, %183, %cst_115 {dimension_numbers = #tpu.dot_dimension_numbers<[1], [1], [0], [0], [0, 0, 1, 0], [], []>} : vector<8x8xbf16>, vector<8x8xbf16>, vector<8x8xf32> -> vector<8x8xf32>
    %185 = vector.extract_strided_slice %16 {offsets = [0, 0, 3], sizes = [8, 8, 1], strides = [1, 1, 1]} : vector<8x8x4xf32> to vector<8x8x1xf32>
    %186 = vector.shape_cast %185 : vector<8x8x1xf32> to vector<8x8xf32>
    %187 = arith.addf %184, %186 : vector<8x8xf32>
    %cst_116 = arith.constant 0.353553385 : f32
    %188 = vector.broadcast %cst_116 : f32 to vector<8x8xf32>
    %189 = arith.mulf %187, %188 : vector<8x8xf32>
    %c0_117 = arith.constant 0 : index
    %c3 = arith.constant 3 : index
    %c0_118 = arith.constant 0 : index
    %c0_119 = arith.constant 0 : index
    %190 = vector.load %arg9[%c0_117, %c3, %c0_118, %c0_119] : memref<1x4x8x8xf32, #tpu.memory_space<vmem>>, vector<1x1x8x8xf32>
    %191 = vector.shape_cast %190 : vector<1x1x8x8xf32> to vector<8x8xf32>
    %cst_120 = arith.constant 0.000000e+00 : f32
    %192 = vector.broadcast %cst_120 : f32 to vector<8x8xf32>
    %193 = arith.cmpf ogt, %191, %192 : vector<8x8xf32>
    %cst_121 = arith.constant 1.000000e+30 : f32
    %194 = vector.broadcast %cst_121 : f32 to vector<8x8xf32>
    %195 = arith.subf %189, %194 : vector<8x8xf32>
    %196 = arith.select %193, %189, %195 : vector<8x8xi1>, vector<8x8xf32>
    %c3_122 = arith.constant 3 : index
    %c0_123 = arith.constant 0 : index
    %c0_124 = arith.constant 0 : index
    %197 = vector.load %arg12[%c3_122, %c0_123, %c0_124] : memref<4x8x1xf32, #tpu.memory_space<vmem>>, vector<1x8x1xf32>
    %198 = vector.shape_cast %197 : vector<1x8x1xf32> to vector<8x1xf32>
    %cst_125 = arith.constant dense<0xFF800000> : vector<8xf32>
    %199 = vector.multi_reduction <maximumf>, %196, %cst_125 [1] : vector<8x8xf32> to vector<8xf32>
    %200 = vector.shape_cast %199 : vector<8xf32> to vector<8x1xf32>
    %201 = arith.maximumf %198, %200 : vector<8x1xf32>
    %202 = arith.subf %198, %201 : vector<8x1xf32>
    %203 = math.exp %202 : vector<8x1xf32>
    %204 = vector.broadcast %201 : vector<8x1xf32> to vector<8x8xf32>
    %205 = arith.subf %196, %204 : vector<8x8xf32>
    %206 = math.exp %205 : vector<8x8xf32>
    %c3_126 = arith.constant 3 : index
    %c0_127 = arith.constant 0 : index
    %c0_128 = arith.constant 0 : index
    %207 = vector.load %arg13[%c3_126, %c0_127, %c0_128] : memref<4x8x1xf32, #tpu.memory_space<vmem>>, vector<1x8x1xf32>
    %208 = vector.shape_cast %207 : vector<1x8x1xf32> to vector<8x1xf32>
    %209 = arith.mulf %203, %208 : vector<8x1xf32>
    %cst_129 = arith.constant dense<0.000000e+00> : vector<8xf32>
    %210 = vector.multi_reduction <add>, %206, %cst_129 [1] : vector<8x8xf32> to vector<8xf32>
    %211 = vector.shape_cast %210 : vector<8xf32> to vector<8x1xf32>
    %212 = arith.addf %209, %211 : vector<8x1xf32>
    %c3_130 = arith.constant 3 : index
    %c0_131 = arith.constant 0 : index
    %c0_132 = arith.constant 0 : index
    %213 = vector.load %arg13[%c3_130, %c0_131, %c0_132] : memref<4x8x1xf32, #tpu.memory_space<vmem>>, vector<1x8x1xf32>
    %214 = vector.shape_cast %213 : vector<1x8x1xf32> to vector<8x1xf32>
    %215 = vector.shape_cast %212 : vector<8x1xf32> to vector<1x8x1xf32>
    tpu.vector_store %arg13[%c3_130, %c0_131, %c0_132], %215 {strides = array<i32>} : memref<4x8x1xf32, #tpu.memory_space<vmem>>, vector<1x8x1xf32>,
    %c0_133 = arith.constant 0 : index
    %c3_134 = arith.constant 3 : index
    %c0_135 = arith.constant 0 : index
    %c0_136 = arith.constant 0 : index
    %216 = vector.load %arg10[%c0_133, %c3_134, %c0_135, %c0_136] : memref<1x4x8x8xf32, #tpu.memory_space<vmem>>, vector<1x1x8x8xf32>
    %217 = vector.shape_cast %216 : vector<1x1x8x8xf32> to vector<8x8xf32>
    %218 = arith.mulf %206, %217 : vector<8x8xf32>
    %219 = arith.truncf %218 : vector<8x8xf32> to vector<8x8xbf16>
    %220 = vector.extract_strided_slice %8 {offsets = [0, 24], sizes = [8, 8], strides = [1, 1]} : vector<8x32xbf16> to vector<8x8xbf16>
    %cst_137 = arith.constant dense<0.000000e+00> : vector<8x8xf32>
    %221 = tpu.matmul %219, %220, %cst_137 {dimension_numbers = #tpu.dot_dimension_numbers<[1], [0], [0], [1], [0, 0, 1, 1], [], []>} : vector<8x8xbf16>, vector<8x8xbf16>, vector<8x8xf32> -> vector<8x8xf32>
    %cst_138 = arith.constant 1.000000e+00 : f32
    %222 = vector.broadcast %cst_138 : f32 to vector<8x8xf32>
    %223 = arith.subf %222, %217 : vector<8x8xf32>
    %224 = arith.mulf %206, %223 : vector<8x8xf32>
    %225 = arith.truncf %224 : vector<8x8xf32> to vector<8x8xbf16>
    %226 = vector.extract_strided_slice %10 {offsets = [0, 24], sizes = [8, 8], strides = [1, 1]} : vector<8x32xbf16> to vector<8x8xbf16>
    %cst_139 = arith.constant dense<0.000000e+00> : vector<8x8xf32>
    %227 = tpu.matmul %225, %226, %cst_139 {dimension_numbers = #tpu.dot_dimension_numbers<[1], [0], [0], [1], [0, 0, 1, 1], [], []>} : vector<8x8xbf16>, vector<8x8xbf16>, vector<8x8xf32> -> vector<8x8xf32>
    %228 = arith.addf %221, %227 : vector<8x8xf32>
    %c0_140 = arith.constant 0 : index
    %c24 = arith.constant 24 : index
    %229 = vector.load %arg14[%c0_140, %c24] : memref<8x32xf32, #tpu.memory_space<vmem>>, vector<8x8xf32>
    %230 = vector.broadcast %203 : vector<8x1xf32> to vector<8x8xf32>
    %231 = arith.mulf %230, %229 : vector<8x8xf32>
    %232 = arith.addf %231, %228 : vector<8x8xf32>
    %c0_141 = arith.constant 0 : index
    %c24_142 = arith.constant 24 : index
    %233 = vector.load %arg14[%c0_141, %c24_142] : memref<8x32xf32, #tpu.memory_space<vmem>>, vector<8x8xf32>
    tpu.vector_store %arg14[%c0_141, %c24_142], %232 {strides = array<i32>} : memref<8x32xf32, #tpu.memory_space<vmem>>, vector<8x8xf32>,
    %c3_143 = arith.constant 3 : index
    %c0_144 = arith.constant 0 : index
    %c0_145 = arith.constant 0 : index
    %234 = vector.load %arg12[%c3_143, %c0_144, %c0_145] : memref<4x8x1xf32, #tpu.memory_space<vmem>>, vector<1x8x1xf32>
    %235 = vector.shape_cast %234 : vector<1x8x1xf32> to vector<8x1xf32>
    %236 = vector.shape_cast %201 : vector<8x1xf32> to vector<1x8x1xf32>
    tpu.vector_store %arg12[%c3_143, %c0_144, %c0_145], %236 {strides = array<i32>} : memref<4x8x1xf32, #tpu.memory_space<vmem>>, vector<1x8x1xf32>,
    %c0_i32_146 = arith.constant 0 : i32
    %237 = arith.cmpi eq, %arg2, %c0_i32_146 : i32
    %238 = arith.extui %237 : i1 to i32
    %c0_i32_147 = arith.constant 0 : i32
    %239 = arith.cmpi ne, %238, %c0_i32_147 : i32
    scf.if %239 {
      %c0_148 = arith.constant 0 : index
      %c0_149 = arith.constant 0 : index
      %c0_150 = arith.constant 0 : index
      %240 = vector.load %arg13[%c0_148, %c0_149, %c0_150] : memref<4x8x1xf32, #tpu.memory_space<vmem>>, vector<1x8x1xf32>
      %241 = vector.shape_cast %240 : vector<1x8x1xf32> to vector<8x1xf32>
      %242 = vector.shape_cast %241 : vector<8x1xf32> to vector<8x1xf32>
      %243 = vector.broadcast %242 : vector<8x1xf32> to vector<8x8xf32>
      %c1_151 = arith.constant 1 : index
      %c0_152 = arith.constant 0 : index
      %c0_153 = arith.constant 0 : index
      %244 = vector.load %arg13[%c1_151, %c0_152, %c0_153] : memref<4x8x1xf32, #tpu.memory_space<vmem>>, vector<1x8x1xf32>
      %245 = vector.shape_cast %244 : vector<1x8x1xf32> to vector<8x1xf32>
      %246 = vector.shape_cast %245 : vector<8x1xf32> to vector<8x1xf32>
      %247 = vector.broadcast %246 : vector<8x1xf32> to vector<8x8xf32>
      %c2_154 = arith.constant 2 : index
      %c0_155 = arith.constant 0 : index
      %c0_156 = arith.constant 0 : index
      %248 = vector.load %arg13[%c2_154, %c0_155, %c0_156] : memref<4x8x1xf32, #tpu.memory_space<vmem>>, vector<1x8x1xf32>
      %249 = vector.shape_cast %248 : vector<1x8x1xf32> to vector<8x1xf32>
      %250 = vector.shape_cast %249 : vector<8x1xf32> to vector<8x1xf32>
      %251 = vector.broadcast %250 : vector<8x1xf32> to vector<8x8xf32>
      %c3_157 = arith.constant 3 : index
      %c0_158 = arith.constant 0 : index
      %c0_159 = arith.constant 0 : index
      %252 = vector.load %arg13[%c3_157, %c0_158, %c0_159] : memref<4x8x1xf32, #tpu.memory_space<vmem>>, vector<1x8x1xf32>
      %253 = vector.shape_cast %252 : vector<1x8x1xf32> to vector<8x1xf32>
      %254 = vector.shape_cast %253 : vector<8x1xf32> to vector<8x1xf32>
      %255 = vector.broadcast %254 : vector<8x1xf32> to vector<8x8xf32>
      %256 = tpu.concatenate %243, %247, %251, %255 in 1 : vector<8x8xf32>, vector<8x8xf32>, vector<8x8xf32>, vector<8x8xf32> -> vector<8x32xf32>
      %257 = tpu.reciprocal %256 {approx = true} : vector<8x32xf32> -> vector<8x32xf32>
      %c0_160 = arith.constant 0 : index
      %c0_161 = arith.constant 0 : index
      %258 = vector.load %arg14[%c0_160, %c0_161] : memref<8x32xf32, #tpu.memory_space<vmem>>, vector<8x32xf32>
      %259 = arith.mulf %258, %257 : vector<8x32xf32>
      %260 = arith.truncf %259 : vector<8x32xf32> to vector<8x32xbf16>
      %c0_162 = arith.constant 0 : index
      %c0_163 = arith.constant 0 : index
      %c0_164 = arith.constant 0 : index
      %261 = vector.load %arg11[%c0_162, %c0_163, %c0_164] : memref<1x8x32xbf16, #tpu.memory_space<vmem>>, vector<1x8x32xbf16>
      %262 = vector.shape_cast %261 : vector<1x8x32xbf16> to vector<8x32xbf16>
      %263 = vector.shape_cast %260 : vector<8x32xbf16> to vector<1x8x32xbf16>
      tpu.vector_store %arg11[%c0_162, %c0_163, %c0_164], %263 {strides = array<i32>} : memref<1x8x32xbf16, #tpu.memory_space<vmem>>, vector<1x8x32xbf16>,
    } else {
    }
    return
  }
  func.func @transform_0(%arg0: i32, %arg1: i32, %arg2: i32) -> (i32, i32, i32) {
    %c0_i32 = arith.constant 0 : i32
    %c0_i32_0 = arith.constant 0 : i32
    return %arg0, %arg1, %c0_i32 : i32, i32, i32
  }
  func.func @transform_1(%arg0: i32, %arg1: i32, %arg2: i32) -> (i32, i32, i32) {
    %c0_i32 = arith.constant 0 : i32
    %c0_i32_0 = arith.constant 0 : i32
    return %arg0, %arg2, %c0_i32 : i32, i32, i32
  }
  func.func @transform_2(%arg0: i32, %arg1: i32, %arg2: i32) -> (i32, i32, i32) {
    %c0_i32 = arith.constant 0 : i32
    %c0_i32_0 = arith.constant 0 : i32
    return %arg0, %arg2, %c0_i32 : i32, i32, i32
  }
  func.func @transform_3(%arg0: i32, %arg1: i32, %arg2: i32) -> (i32, i32, i32) {
    %c0_i32 = arith.constant 0 : i32
    %c0_i32_0 = arith.constant 0 : i32
    return %arg0, %arg2, %c0_i32 : i32, i32, i32
  }
  func.func @transform_4(%arg0: i32, %arg1: i32, %arg2: i32) -> (i32, i32, i32, i32) {
    %c0_i32 = arith.constant 0 : i32
    %c0_i32_0 = arith.constant 0 : i32
    %c0_i32_1 = arith.constant 0 : i32
    return %arg0, %arg1, %c0_i32, %c0_i32_0 : i32, i32, i32, i32
  }
  func.func @transform_5(%arg0: i32, %arg1: i32, %arg2: i32) -> (i32, i32, i32, i32) {
    %c0_i32 = arith.constant 0 : i32
    %c0_i32_0 = arith.constant 0 : i32
    return %arg0, %arg1, %arg2, %c0_i32 : i32, i32, i32, i32
  }
  func.func @transform_6(%arg0: i32, %arg1: i32, %arg2: i32) -> (i32, i32, i32, i32) {
    %c0_i32 = arith.constant 0 : i32
    %c0_i32_0 = arith.constant 0 : i32
    return %arg0, %c0_i32, %arg1, %arg2 : i32, i32, i32, i32
  }
  func.func @transform_7(%arg0: i32, %arg1: i32, %arg2: i32) -> (i32, i32, i32, i32) {
    %c0_i32 = arith.constant 0 : i32
    %c0_i32_0 = arith.constant 0 : i32
    return %arg0, %c0_i32, %arg1, %arg2 : i32, i32, i32, i32
  }
  func.func @transform_8(%arg0: i32, %arg1: i32, %arg2: i32) -> (i32, i32, i32) {
    %c0_i32 = arith.constant 0 : i32
    %c0_i32_0 = arith.constant 0 : i32
    return %arg0, %arg1, %c0_i32 : i32, i32, i32
  }
}

module attributes {stable_mosaic.version = 11 : i64} {
  func.func @kernel(%arg0: i32, %arg1: i32, %arg2: i32, %arg3: memref<16x64xbf16, #tpu.memory_space<vmem>>, %arg4: memref<64x32xbf16, #tpu.memory_space<vmem>>, %arg5: memref<1x32xf32, #tpu.memory_space<vmem>>, %arg6: memref<16x32xf32, #tpu.memory_space<vmem>>, %arg7: memref<1x32xf32, #tpu.memory_space<vmem>>, %arg8: memref<1x32xf32, #tpu.memory_space<vmem>>, %arg9: memref<16x32xf32, #tpu.memory_space<vmem>>, %arg10: memref<16x32xf32, #tpu.memory_space<vmem>>) attributes {dimension_semantics = [#tpu.dimension_semantics<parallel>, #tpu.dimension_semantics<parallel>, #tpu.dimension_semantics<arbitrary>], iteration_bounds = array<i64: 1, 1, 1>, scalar_prefetch = 0 : i64, scratch_operands = 1 : i64, tpu.core_type = #tpu.core_type<tc>, window_params = [{transform_indices = @transform_0, window_bounds = array<i64: 16, 64>}, {transform_indices = @transform_1, window_bounds = array<i64: 64, 32>}, {transform_indices = @transform_2, window_bounds = array<i64: 1, 32>}, {transform_indices = @transform_3, window_bounds = array<i64: 16, 32>}, {pipeline_mode = #tpu.pipeline_mode<synchronous>, transform_indices = @transform_4, window_bounds = array<i64: 1, 32>}, {pipeline_mode = #tpu.pipeline_mode<synchronous>, transform_indices = @transform_5, window_bounds = array<i64: 1, 32>}, {transform_indices = @transform_6, window_bounds = array<i64: 16, 32>}]} {
    %c0_i32 = arith.constant 0 : i32
    %0 = arith.cmpi eq, %arg2, %c0_i32 : i32
    %1 = arith.extui %0 : i1 to i32
    %c0_i32_0 = arith.constant 0 : i32
    %2 = arith.cmpi ne, %1, %c0_i32_0 : i32
    scf.if %2 {
      %cst_10 = arith.constant 0.000000e+00 : f32
      %12 = vector.broadcast %cst_10 : f32 to vector<16x32xf32>
      %c0_11 = arith.constant 0 : index
      %c0_12 = arith.constant 0 : index
      %13 = vector.load %arg10[%c0_11, %c0_12] : memref<16x32xf32, #tpu.memory_space<vmem>>, vector<16x32xf32>
      tpu.vector_store %arg10[%c0_11, %c0_12], %12 {strides = array<i32>} : memref<16x32xf32, #tpu.memory_space<vmem>>, vector<16x32xf32>,
    } else {
    }
    %c0 = arith.constant 0 : index
    %c0_1 = arith.constant 0 : index
    %3 = vector.load %arg10[%c0, %c0_1] : memref<16x32xf32, #tpu.memory_space<vmem>>, vector<16x32xf32>
    %c0_2 = arith.constant 0 : index
    %c0_3 = arith.constant 0 : index
    %4 = vector.load %arg3[%c0_2, %c0_3] : memref<16x64xbf16, #tpu.memory_space<vmem>>, vector<16x64xbf16>
    %c0_4 = arith.constant 0 : index
    %c0_5 = arith.constant 0 : index
    %5 = vector.load %arg4[%c0_4, %c0_5] : memref<64x32xbf16, #tpu.memory_space<vmem>>, vector<64x32xbf16>
    %cst = arith.constant dense<0.000000e+00> : vector<16x32xf32>
    %6 = tpu.matmul %4, %5, %cst {dimension_numbers = #tpu.dot_dimension_numbers<[1], [0], [0], [1], [0, 0, 1, 1], [], []>} : vector<16x64xbf16>, vector<64x32xbf16>, vector<16x32xf32> -> vector<16x32xf32>
    %7 = arith.addf %3, %6 : vector<16x32xf32>
    %c0_6 = arith.constant 0 : index
    %c0_7 = arith.constant 0 : index
    %8 = vector.load %arg10[%c0_6, %c0_7] : memref<16x32xf32, #tpu.memory_space<vmem>>, vector<16x32xf32>
    tpu.vector_store %arg10[%c0_6, %c0_7], %7 {strides = array<i32>} : memref<16x32xf32, #tpu.memory_space<vmem>>, vector<16x32xf32>,
    %c0_i32_8 = arith.constant 0 : i32
    %9 = arith.cmpi eq, %arg2, %c0_i32_8 : i32
    %10 = arith.extui %9 : i1 to i32
    %c0_i32_9 = arith.constant 0 : i32
    %11 = arith.cmpi ne, %10, %c0_i32_9 : i32
    scf.if %11 {
      %c0_10 = arith.constant 0 : index
      %c0_11 = arith.constant 0 : index
      %12 = vector.load %arg10[%c0_10, %c0_11] : memref<16x32xf32, #tpu.memory_space<vmem>>, vector<16x32xf32>
      %c0_12 = arith.constant 0 : index
      %c0_13 = arith.constant 0 : index
      %13 = vector.load %arg5[%c0_12, %c0_13] : memref<1x32xf32, #tpu.memory_space<vmem>>, vector<1x32xf32>
      %14 = vector.broadcast %13 : vector<1x32xf32> to vector<16x32xf32>
      %15 = arith.addf %12, %14 : vector<16x32xf32>
      %c0_14 = arith.constant 0 : index
      %c0_15 = arith.constant 0 : index
      %16 = vector.load %arg6[%c0_14, %c0_15] : memref<16x32xf32, #tpu.memory_space<vmem>>, vector<16x32xf32>
      %17 = arith.addf %15, %16 : vector<16x32xf32>
      %cst_16 = arith.constant dense<0.000000e+00> : vector<16xf32>
      %18 = vector.multi_reduction <add>, %17, %cst_16 [1] : vector<16x32xf32> to vector<16xf32>
      %19 = vector.shape_cast %18 : vector<16xf32> to vector<16x1xf32>
      %cst_17 = arith.constant 3.200000e+01 : f32
      %20 = vector.broadcast %cst_17 : f32 to vector<16x1xf32>
      %21 = arith.divf %19, %20 : vector<16x1xf32>
      %22 = vector.broadcast %21 : vector<16x1xf32> to vector<16x32xf32>
      %23 = arith.subf %17, %22 : vector<16x32xf32>
      %24 = arith.mulf %23, %23 : vector<16x32xf32>
      %cst_18 = arith.constant dense<0.000000e+00> : vector<16xf32>
      %25 = vector.multi_reduction <add>, %24, %cst_18 [1] : vector<16x32xf32> to vector<16xf32>
      %26 = vector.shape_cast %25 : vector<16xf32> to vector<16x1xf32>
      %cst_19 = arith.constant 3.200000e+01 : f32
      %27 = vector.broadcast %cst_19 : f32 to vector<16x1xf32>
      %28 = arith.divf %26, %27 : vector<16x1xf32>
      %cst_20 = arith.constant 9.99999974E-6 : f32
      %29 = vector.broadcast %cst_20 : f32 to vector<16x1xf32>
      %30 = arith.addf %28, %29 : vector<16x1xf32>
      %31 = math.rsqrt %30 : vector<16x1xf32>
      %32 = vector.broadcast %31 : vector<16x1xf32> to vector<16x32xf32>
      %33 = arith.mulf %23, %32 : vector<16x32xf32>
      %c0_21 = arith.constant 0 : index
      %c0_22 = arith.constant 0 : index
      %34 = vector.load %arg7[%c0_21, %c0_22] : memref<1x32xf32, #tpu.memory_space<vmem>>, vector<1x32xf32>
      %35 = vector.broadcast %34 : vector<1x32xf32> to vector<16x32xf32>
      %36 = arith.mulf %33, %35 : vector<16x32xf32>
      %c0_23 = arith.constant 0 : index
      %c0_24 = arith.constant 0 : index
      %37 = vector.load %arg8[%c0_23, %c0_24] : memref<1x32xf32, #tpu.memory_space<vmem>>, vector<1x32xf32>
      %38 = vector.broadcast %37 : vector<1x32xf32> to vector<16x32xf32>
      %39 = arith.addf %36, %38 : vector<16x32xf32>
      %c0_25 = arith.constant 0 : index
      %c0_26 = arith.constant 0 : index
      %40 = vector.load %arg9[%c0_25, %c0_26] : memref<16x32xf32, #tpu.memory_space<vmem>>, vector<16x32xf32>
      tpu.vector_store %arg9[%c0_25, %c0_26], %39 {strides = array<i32>} : memref<16x32xf32, #tpu.memory_space<vmem>>, vector<16x32xf32>,
    } else {
    }
    return
  }
  func.func @transform_0(%arg0: i32, %arg1: i32, %arg2: i32) -> (i32, i32) {
    %c0_i32 = arith.constant 0 : i32
    return %arg0, %arg2 : i32, i32
  }
  func.func @transform_1(%arg0: i32, %arg1: i32, %arg2: i32) -> (i32, i32) {
    %c0_i32 = arith.constant 0 : i32
    return %arg2, %arg1 : i32, i32
  }
  func.func @transform_2(%arg0: i32, %arg1: i32, %arg2: i32) -> (i32, i32) {
    %c0_i32 = arith.constant 0 : i32
    %c0_i32_0 = arith.constant 0 : i32
    return %c0_i32, %arg1 : i32, i32
  }
  func.func @transform_3(%arg0: i32, %arg1: i32, %arg2: i32) -> (i32, i32) {
    %c0_i32 = arith.constant 0 : i32
    %c0_i32_0 = arith.constant 0 : i32
    return %arg0, %c0_i32 : i32, i32
  }
  func.func @transform_4(%arg0: i32, %arg1: i32, %arg2: i32) -> (i32, i32) {
    %c0_i32 = arith.constant 0 : i32
    %c0_i32_0 = arith.constant 0 : i32
    %c0_i32_1 = arith.constant 0 : i32
    return %c0_i32, %c0_i32_0 : i32, i32
  }
  func.func @transform_5(%arg0: i32, %arg1: i32, %arg2: i32) -> (i32, i32) {
    %c0_i32 = arith.constant 0 : i32
    %c0_i32_0 = arith.constant 0 : i32
    %c0_i32_1 = arith.constant 0 : i32
    return %c0_i32, %c0_i32_0 : i32, i32
  }
  func.func @transform_6(%arg0: i32, %arg1: i32, %arg2: i32) -> (i32, i32) {
    %c0_i32 = arith.constant 0 : i32
    return %arg0, %arg1 : i32, i32
  }
}

</mosaic_0001>

<llo_original>
// kernel: transformer_layer_pallas.5
$region0: #{transformer_layer_pallas.5}
  #allocation0 [shape = 'u32[]', space=smem, size = 0x4, offset = 0x4, fixed_abs, tag = 'smem constant byte address 0x4 - core index']
  #allocation1 [shape = 'u32[144,128]{1,0:T(1,128)}', space=vmem, size = 0x12000, scoped, tag = 'internal scratch']
  #allocation2 [shape = 'f32[16,256]{1,0:T(8,128)}', space=vmem, size = 0x4000, scoped, tag = 'scratch operand']
  %s0 = inlined_call_operand.vmem [shape: f32[16,32], index: 0, kind: input, shape index: {}]
  %s1 = inlined_call_operand.vmem [shape: bf16[32,256], index: 1, kind: input, shape index: {}]
  %s2 = inlined_call_operand.vmem [shape: bf16[16,256], index: 2, kind: output, shape index: {}]
  %s3 = sld [smem:[#allocation0]]
  $region26: #{transformer_layer_pallas.5} parent=0
    _
  %s5 = ssub.s32 1, %s3
  %s6 = scalar_select 0, %s5, %s3
  // Predicated region
  $region2: #{transformer_layer_pallas.5} parent=0 // pred_check
    _
  $region3: #{transformer_layer_pallas.5} parent=0 // pred_check_branch
    %8 = sbr.rel (0) target = $region5
  $region4: #{transformer_layer_pallas.5} parent=0 // pred_region
    _
  $region5: #{transformer_layer_pallas.5} parent=0 // pred_fallthru
    _
  // Predicated region
  $region6: #{transformer_layer_pallas.5} parent=0 // pred_check
    _
  $region7: #{transformer_layer_pallas.5} parent=0 // pred_check_branch
    %10 = sbr.rel (0) target = $region9
  $region8: #{transformer_layer_pallas.5} parent=0 // pred_region
    _
  $region9: #{transformer_layer_pallas.5} parent=0 // pred_fallthru
    _
  %p12 = scmp.eq.s32.totalorder 0, 0
  // Predicated region
  $region10: #{transformer_layer_pallas.5} parent=0 // pred_check
    %p13 = pneg %p12
  $region11: #{transformer_layer_pallas.5} parent=0 // pred_check_branch
    %15 = sbr.rel (%p13) target = $region13
  $region12: #{transformer_layer_pallas.5} parent=0 // pred_region
    %16 = vst [vmem:[#allocation2] sm:$0xff] 0.0
    %17 = vst [vmem:[#allocation2 + $0x8] sm:$0xff] 0.0
    %18 = vst [vmem:[#allocation2 + $0x10] sm:$0xff] 0.0
    %19 = vst [vmem:[#allocation2 + $0x18] sm:$0xff] 0.0
  $region13: #{transformer_layer_pallas.5} parent=0 // pred_fallthru
    _
  %v20 = vld [vmem:[#allocation2] sm:$0xff]
  %v21 = vld [vmem:[#allocation2 + $0x8] sm:$0xff]
  %v22 = vld [vmem:[#allocation2 + $0x10] sm:$0xff]
  %v23 = vld [vmem:[#allocation2 + $0x18] sm:$0xff]
  %v24 = vld [vmem:[%s0] sm:$0xff]
  %v25 = vld [vmem:[%s0 + $0x8] sm:$0xff]
  %v26 = vpack.c.bf16 %v25, %v24
  %v27 = vld [vmem:[%s1] sm:$0xff]
  %v28 = vld [vmem:[%s1 + $0x8] sm:$0xff]
  %v29 = vld [vmem:[%s1 + $0x10] sm:$0xff]
  %v30 = vld [vmem:[%s1 + $0x18] sm:$0xff]
  %v35 = vunpack.c.l.b16 %v27
  %v36 = vunpack.c.h.b16 %v27
  %v37 = vunpack.c.l.b16 %v28
  %v38 = vunpack.c.h.b16 %v28
  %v39 = vunpack.c.l.b16 %v29
  %v40 = vunpack.c.h.b16 %v29
  %v41 = vunpack.c.l.b16 %v30
  %v42 = vunpack.c.h.b16 %v30
  %v43 = vpack.c.b16 %v37, %v35
  %v44 = vpack.c.b16 %v38, %v36
  %v45 = vpack.c.b16 %v41, %v39
  %v46 = vpack.c.b16 %v42, %v40
  %vm51 = vcmask 261120
  %v53 = vsel %vm51, %v26, 0
  %55 = vmatprep.subr.bf16.mxu0 0
  %56 = vmatpush1.bf16.msra.mxu0 0
  %57 = vmatprep.subr.bf16.mxu0 0
  %58 = vmatpush1.bf16.msra.mxu0 0
  %59 = vmatprep.subr.bf16.mxu0 0
  %60 = vmatpush1.bf16.msra.mxu0 0
  %61 = vmatprep.subr.bf16.mxu0 0
  %62 = vmatpush1.bf16.msra.mxu0 0
  %63 = vmatprep.subr.bf16.mxu0 0
  %64 = vmatpush1.bf16.msra.mxu0 0
  %65 = vmatprep.subr.bf16.mxu0 0
  %66 = vmatpush1.bf16.msra.mxu0 0
  %67 = vmatprep.subr.bf16.mxu0 %v46
  %68 = vmatpush1.bf16.msra.mxu0 %v45
  %69 = vmatprep.subr.bf16.mxu0 %v44
  %70 = vmatpush1.bf16.msra.mxu0 %v43
  %71 = vmatprep.subr.bf16.mxu0 0
  %72 = vmatpush2.bf16.msra.mxu0 0
  %73 = vmatprep.subr.bf16.mxu0 0
  %74 = vmatpush2.bf16.msra.mxu0 0
  %75 = vmatprep.subr.bf16.mxu0 0
  %76 = vmatpush2.bf16.msra.mxu0 0
  %77 = vmatprep.subr.bf16.mxu0 0
  %78 = vmatpush2.bf16.msra.mxu0 0
  %79 = vmatprep.subr.bf16.mxu0 0
  %80 = vmatpush2.bf16.msra.mxu0 0
  %81 = vmatprep.subr.bf16.mxu0 0
  %82 = vmatpush2.bf16.msra.mxu0 0
  %83 = vmatprep.subr.bf16.mxu0 0
  %84 = vmatpush2.bf16.msra.mxu0 0
  %85 = vmatprep.subr.bf16.mxu0 0
  %86 = vmatpush2.bf16.msra.mxu0 0
  %87 = vmatprep.mubr.bf16.mxu0 0
  %88 = vmatmul.mubr.bf16.gmra.mxu0 %v53
  %v89 = vpop.f32.mrf.mxu0
  %v90 = vadd.f32 0.0, %v89
  %v91 = vpop.f32.mrf.mxu0
  %v92 = vadd.f32 0.0, %v91
  %v93 = vpop.f32.mrf.mxu0
  %v94 = vadd.f32 0.0, %v93
  %v95 = vpop.f32.mrf.mxu0
  %v96 = vadd.f32 0.0, %v95
  %97 = vdwg.mxu0
  %v98 = vadd.f32 %v20, %v90
  %v99 = vadd.f32 %v21, %v92
  %v100 = vadd.f32 %v22, %v94
  %v101 = vadd.f32 %v23, %v96
  %102 = vst [vmem:[#allocation2] sm:$0xff] %v98
  %103 = vst [vmem:[#allocation2 + $0x8] sm:$0xff] %v99
  %104 = vst [vmem:[#allocation2 + $0x10] sm:$0xff] %v100
  %105 = vst [vmem:[#allocation2 + $0x18] sm:$0xff] %v101
  // Predicated region
  $region14: #{transformer_layer_pallas.5} parent=0 // pred_check
    %p106 = pneg %p12
  $region15: #{transformer_layer_pallas.5} parent=0 // pred_check_branch
    %108 = sbr.rel (%p106) target = $region17
  $region16: #{transformer_layer_pallas.5} parent=0 // pred_region
    %v109 = vld [vmem:[#allocation2] sm:$0xff]
    %v110 = vld [vmem:[#allocation2 + $0x8] sm:$0xff]
    %v111 = vld [vmem:[#allocation2 + $0x10] sm:$0xff]
    %v112 = vld [vmem:[#allocation2 + $0x18] sm:$0xff]
    %v113 = vpack.c.bf16 %v111, %v109
    %v114 = vpack.c.bf16 %v112, %v110
    %v117 = vunpack.c.l.b16 %v113
    %v118 = vunpack.c.l.b16 %v114
    %v119 = vunpack.c.h.b16 %v113
    %v120 = vunpack.c.h.b16 %v114
    %v121 = vpack.c.b16 %v118, %v117
    %v122 = vpack.c.b16 %v120, %v119
    %125 = vst [vmem:[%s2] sm:$0xff] %v121
    %126 = vst [vmem:[%s2 + $0x8] sm:$0xff] %v122
  $region17: #{transformer_layer_pallas.5} parent=0 // pred_fallthru
    _
  // Predicated region
  $region18: #{transformer_layer_pallas.5} parent=0 // pred_check
    _
  $region19: #{transformer_layer_pallas.5} parent=0 // pred_check_branch
    %128 = sbr.rel (0) target = $region21
  $region20: #{transformer_layer_pallas.5} parent=0 // pred_region
    _
  $region21: #{transformer_layer_pallas.5} parent=0 // pred_fallthru
    _
  // Predicated region
  $region22: #{transformer_layer_pallas.5} parent=0 // pred_check
    _
  $region23: #{transformer_layer_pallas.5} parent=0 // pred_check_branch
    %130 = sbr.rel (0) target = $region25
  $region24: #{transformer_layer_pallas.5} parent=0 // pred_region
    _
  $region25: #{transformer_layer_pallas.5} parent=0 // pred_fallthru
    _

// kernel: transformer_layer_pallas.8
$region0: #{transformer_layer_pallas.8}
  #allocation0 [shape = 'u32[]', space=smem, size = 0x4, offset = 0x4, fixed_abs, tag = 'smem constant byte address 0x4 - core index']
  #allocation1 [shape = 'u32[144,128]{1,0:T(1,128)}', space=vmem, size = 0x12000, scoped, tag = 'internal scratch']
  #allocation2 [shape = 'f32[16,64]{1,0:T(8,128)}', space=vmem, size = 0x2000, scoped, tag = 'scratch operand']
  %s0 = inlined_call_operand.vmem [shape: f32[16,32], index: 0, kind: input, shape index: {}]
  %s1 = inlined_call_operand.vmem [shape: bf16[32,64], index: 1, kind: input, shape index: {}]
  %s2 = inlined_call_operand.vmem [shape: f32[1,64], index: 2, kind: input, shape index: {}]
  %s3 = inlined_call_operand.vmem [shape: bf16[16,64], index: 3, kind: output, shape index: {}]
  %s4 = sld [smem:[#allocation0]]
  $region30: #{transformer_layer_pallas.8} parent=0
    _
  %s6 = ssub.s32 1, %s4
  %s7 = scalar_select 0, %s6, %s4
  // Predicated region
  $region2: #{transformer_layer_pallas.8} parent=0 // pred_check
    _
  $region3: #{transformer_layer_pallas.8} parent=0 // pred_check_branch
    %9 = sbr.rel (0) target = $region5
  $region4: #{transformer_layer_pallas.8} parent=0 // pred_region
    _
  $region5: #{transformer_layer_pallas.8} parent=0 // pred_fallthru
    _
  // Predicated region
  $region6: #{transformer_layer_pallas.8} parent=0 // pred_check
    _
  $region7: #{transformer_layer_pallas.8} parent=0 // pred_check_branch
    %11 = sbr.rel (0) target = $region9
  $region8: #{transformer_layer_pallas.8} parent=0 // pred_region
    _
  $region9: #{transformer_layer_pallas.8} parent=0 // pred_fallthru
    _
  // Predicated region
  $region10: #{transformer_layer_pallas.8} parent=0 // pred_check
    _
  $region11: #{transformer_layer_pallas.8} parent=0 // pred_check_branch
    %13 = sbr.rel (0) target = $region13
  $region12: #{transformer_layer_pallas.8} parent=0 // pred_region
    _
  $region13: #{transformer_layer_pallas.8} parent=0 // pred_fallthru
    _
  %p15 = scmp.eq.s32.totalorder 0, 0
  // Predicated region
  $region14: #{transformer_layer_pallas.8} parent=0 // pred_check
    %p16 = pneg %p15
  $region15: #{transformer_layer_pallas.8} parent=0 // pred_check_branch
    %18 = sbr.rel (%p16) target = $region17
  $region16: #{transformer_layer_pallas.8} parent=0 // pred_region
    %vm19 = vcmask 523264
    %20 = vst.msk [vmem:[#allocation2] sm:$0xff] %vm19, 0.0
    %21 = vst.msk [vmem:[#allocation2 + $0x8] sm:$0xff] %vm19, 0.0
  $region17: #{transformer_layer_pallas.8} parent=0 // pred_fallthru
    _
  %v22 = vld [vmem:[#allocation2] sm:$0xff]
  %v23 = vld [vmem:[#allocation2 + $0x8] sm:$0xff]
  %v24 = vld [vmem:[%s0] sm:$0xff]
  %v25 = vld [vmem:[%s0 + $0x8] sm:$0xff]
  %v26 = vpack.c.bf16 %v25, %v24
  %v27 = vld [vmem:[%s1] sm:$0xf]
  %v28 = vld [vmem:[%s1 + $0x4] sm:$0xf]
  %v29 = vld [vmem:[%s1 + $0x8] sm:$0xf]
  %v30 = vld [vmem:[%s1 + $0xc] sm:$0xf]
  %v35 = vunpack.c.l.b16 %v27
  %v36 = vunpack.c.l.b16 %v28
  %v37 = vunpack.c.l.b16 %v29
  %v38 = vunpack.c.l.b16 %v30
  %v39 = vpack.c.b16 %v36, %v35
  %v40 = vpack.c.b16 %v38, %v37
  %vm43 = vcmask 261120
  %v45 = vsel %vm43, %v26, 0
  %47 = vmatprep.subr.bf16.mxu0 0
  %48 = vmatpush1.bf16.msra.mxu0 0
  %49 = vmatprep.subr.bf16.mxu0 0
  %50 = vmatpush1.bf16.msra.mxu0 0
  %51 = vmatprep.subr.bf16.mxu0 0
  %52 = vmatpush1.bf16.msra.mxu0 0
  %53 = vmatprep.subr.bf16.mxu0 0
  %54 = vmatpush1.bf16.msra.mxu0 0
  %55 = vmatprep.subr.bf16.mxu0 0
  %56 = vmatpush1.bf16.msra.mxu0 0
  %57 = vmatprep.subr.bf16.mxu0 0
  %58 = vmatpush1.bf16.msra.mxu0 0
  %59 = vmatprep.subr.bf16.mxu0 0
  %60 = vmatpush1.bf16.msra.mxu0 %v40
  %61 = vmatprep.subr.bf16.mxu0 0
  %62 = vmatpush1.bf16.msra.mxu0 %v39
  %63 = vmatprep.subr.bf16.mxu0 0
  %64 = vmatpush2.bf16.msra.mxu0 0
  %65 = vmatprep.subr.bf16.mxu0 0
  %66 = vmatpush2.bf16.msra.mxu0 0
  %67 = vmatprep.subr.bf16.mxu0 0
  %68 = vmatpush2.bf16.msra.mxu0 0
  %69 = vmatprep.subr.bf16.mxu0 0
  %70 = vmatpush2.bf16.msra.mxu0 0
  %71 = vmatprep.subr.bf16.mxu0 0
  %72 = vmatpush2.bf16.msra.mxu0 0
  %73 = vmatprep.subr.bf16.mxu0 0
  %74 = vmatpush2.bf16.msra.mxu0 0
  %75 = vmatprep.subr.bf16.mxu0 0
  %76 = vmatpush2.bf16.msra.mxu0 0
  %77 = vmatprep.subr.bf16.mxu0 0
  %78 = vmatpush2.bf16.msra.mxu0 0
  %79 = vmatprep.mubr.bf16.mxu0 0
  %80 = vmatmul.mubr.bf16.gmra.mxu0 %v45
  %v81 = vpop.f32.mrf.mxu0
  %v82 = vadd.f32 0.0, %v81
  %v83 = vpop.f32.mrf.mxu0
  %v84 = vpop.f32.mrf.mxu0
  %v85 = vadd.f32 0.0, %v84
  %v86 = vpop.f32.mrf.mxu0
  %87 = vdwg.mxu0
  %v88 = vadd.f32 %v22, %v82
  %v89 = vadd.f32 %v23, %v85
  %vm90 = vcmask 523264
  %91 = vst.msk [vmem:[#allocation2] sm:$0xff] %vm90, %v88
  %92 = vst.msk [vmem:[#allocation2 + $0x8] sm:$0xff] %vm90, %v89
  // Predicated region
  $region18: #{transformer_layer_pallas.8} parent=0 // pred_check
    %p93 = pneg %p15
  $region19: #{transformer_layer_pallas.8} parent=0 // pred_check_branch
    %95 = sbr.rel (%p93) target = $region21
  $region20: #{transformer_layer_pallas.8} parent=0 // pred_region
    %v96 = vld [vmem:[#allocation2] sm:$0xff]
    %v97 = vld [vmem:[#allocation2 + $0x8] sm:$0xff]
    %v98 = vld [vmem:[%s2] sm:$0x1]
    %v100 = vlaneseq
    %v101 = vshrl.u32 %v100, 7
    %v102 = vsub.s32 0, %v101
    %v103 = vrot.slane %v98, %v102
    %v105 = vadd.f32 %v96, %v103
    %v106 = vadd.f32 %v97, %v103
    %v107 = vmax.f32 %v105, 0.0
    %v108 = vmax.f32 %v106, 0.0
    %v109 = vpack.c.bf16 %v108, %v107
    %v111 = vunpack.c.l.b16 %v109
    %v112 = vunpack.c.h.b16 %v109
    %v113 = vpack.c.b16 %v111, %v111
    %v114 = vpack.c.b16 %v112, %v112
    %vm117 = vcmask 519168
    %118 = vst.msk [vmem:[%s3] sm:$0xf] %vm117, %v113
    %119 = vst.msk [vmem:[%s3 + $0x4] sm:$0xf] %vm117, %v114
  $region21: #{transformer_layer_pallas.8} parent=0 // pred_fallthru
    _
  // Predicated region
  $region22: #{transformer_layer_pallas.8} parent=0 // pred_check
    _
  $region23: #{transformer_layer_pallas.8} parent=0 // pred_check_branch
    %121 = sbr.rel (0) target = $region25
  $region24: #{transformer_layer_pallas.8} parent=0 // pred_region
    _
  $region25: #{transformer_layer_pallas.8} parent=0 // pred_fallthru
    _
  // Predicated region
  $region26: #{transformer_layer_pallas.8} parent=0 // pred_check
    _
  $region27: #{transformer_layer_pallas.8} parent=0 // pred_check_branch
    %123 = sbr.rel (0) target = $region29
  $region28: #{transformer_layer_pallas.8} parent=0 // pred_region
    _
  $region29: #{transformer_layer_pallas.8} parent=0 // pred_fallthru
    _

// kernel: transformer_layer_pallas.7
$region0: #{transformer_layer_pallas.7}
  #allocation0 [shape = 'u32[]', space=smem, size = 0x4, offset = 0x4, fixed_abs, tag = 'smem constant byte address 0x4 - core index']
  #allocation1 [shape = 'u32[144,128]{1,0:T(1,128)}', space=vmem, size = 0x12000, scoped, tag = 'internal scratch']
  #allocation2 [shape = 'f32[16,32]{1,0:T(8,128)}', space=vmem, size = 0x2000, scoped, tag = 'scratch operand']
  %s0 = inlined_call_operand.vmem [shape: bf16[16,32], index: 0, kind: input, shape index: {}]
  %s1 = inlined_call_operand.vmem [shape: bf16[32,32], index: 1, kind: input, shape index: {}]
  %s2 = inlined_call_operand.vmem [shape: f32[16,32], index: 2, kind: input, shape index: {}]
  %s3 = inlined_call_operand.vmem [shape: f32[1,32], index: 3, kind: input, shape index: {}]
  %s4 = inlined_call_operand.vmem [shape: f32[1,32], index: 4, kind: input, shape index: {}]
  %s5 = inlined_call_operand.vmem [shape: f32[16,32], index: 5, kind: output, shape index: {}]
  %s6 = sld [smem:[#allocation0]]
  $region38: #{transformer_layer_pallas.7} parent=0
    _
  %s8 = ssub.s32 1, %s6
  %s9 = scalar_select 0, %s8, %s6
  // Predicated region
  $region2: #{transformer_layer_pallas.7} parent=0 // pred_check
    _
  $region3: #{transformer_layer_pallas.7} parent=0 // pred_check_branch
    %11 = sbr.rel (0) target = $region5
  $region4: #{transformer_layer_pallas.7} parent=0 // pred_region
    _
  $region5: #{transformer_layer_pallas.7} parent=0 // pred_fallthru
    _
  // Predicated region
  $region6: #{transformer_layer_pallas.7} parent=0 // pred_check
    _
  $region7: #{transformer_layer_pallas.7} parent=0 // pred_check_branch
    %13 = sbr.rel (0) target = $region9
  $region8: #{transformer_layer_pallas.7} parent=0 // pred_region
    _
  $region9: #{transformer_layer_pallas.7} parent=0 // pred_fallthru
    _
  // Predicated region
  $region10: #{transformer_layer_pallas.7} parent=0 // pred_check
    _
  $region11: #{transformer_layer_pallas.7} parent=0 // pred_check_branch
    %15 = sbr.rel (0) target = $region13
  $region12: #{transformer_layer_pallas.7} parent=0 // pred_region
    _
  $region13: #{transformer_layer_pallas.7} parent=0 // pred_fallthru
    _
  // Predicated region
  $region14: #{transformer_layer_pallas.7} parent=0 // pred_check
    _
  $region15: #{transformer_layer_pallas.7} parent=0 // pred_check_branch
    %17 = sbr.rel (0) target = $region17
  $region16: #{transformer_layer_pallas.7} parent=0 // pred_region
    _
  $region17: #{transformer_layer_pallas.7} parent=0 // pred_fallthru
    _
  // Predicated region
  $region18: #{transformer_layer_pallas.7} parent=0 // pred_check
    _
  $region19: #{transformer_layer_pallas.7} parent=0 // pred_check_branch
    %19 = sbr.rel (0) target = $region21
  $region20: #{transformer_layer_pallas.7} parent=0 // pred_region
    _
  $region21: #{transformer_layer_pallas.7} parent=0 // pred_fallthru
    _
  %p21 = scmp.eq.s32.totalorder 0, 0
  // Predicated region
  $region22: #{transformer_layer_pallas.7} parent=0 // pred_check
    %p22 = pneg %p21
  $region23: #{transformer_layer_pallas.7} parent=0 // pred_check_branch
    %24 = sbr.rel (%p22) target = $region25
  $region24: #{transformer_layer_pallas.7} parent=0 // pred_region
    %vm25 = vcmask 261120
    %26 = vst.msk [vmem:[#allocation2] sm:$0xff] %vm25, 0.0
    %27 = vst.msk [vmem:[#allocation2 + $0x8] sm:$0xff] %vm25, 0.0
  $region25: #{transformer_layer_pallas.7} parent=0 // pred_fallthru
    _
  %v28 = vld [vmem:[#allocation2] sm:$0xff]
  %v29 = vld [vmem:[#allocation2 + $0x8] sm:$0xff]
  %v30 = vld [vmem:[%s0] sm:$0xf]
  %v31 = vld [vmem:[%s0 + $0x4] sm:$0xf]
  %v32 = vld [vmem:[%s1] sm:$0xf]
  %v33 = vld [vmem:[%s1 + $0x4] sm:$0xf]
  %v34 = vld [vmem:[%s1 + $0x8] sm:$0xf]
  %v35 = vld [vmem:[%s1 + $0xc] sm:$0xf]
  %v38 = vunpack.c.l.b16 %v30
  %v39 = vunpack.c.l.b16 %v31
  %v40 = vpack.c.b16 %v39, %v38
  %v45 = vunpack.c.l.b16 %v32
  %v46 = vunpack.c.l.b16 %v33
  %v47 = vunpack.c.l.b16 %v34
  %v48 = vunpack.c.l.b16 %v35
  %v49 = vpack.c.b16 %v46, %v45
  %v50 = vpack.c.b16 %v48, %v47
  %vm53 = vcmask 261120
  %v55 = vsel %vm53, %v40, 0
  %57 = vmatprep.subr.bf16.mxu0 0
  %58 = vmatpush1.bf16.msra.mxu0 0
  %59 = vmatprep.subr.bf16.mxu0 0
  %60 = vmatpush1.bf16.msra.mxu0 0
  %61 = vmatprep.subr.bf16.mxu0 0
  %62 = vmatpush1.bf16.msra.mxu0 0
  %63 = vmatprep.subr.bf16.mxu0 0
  %64 = vmatpush1.bf16.msra.mxu0 0
  %65 = vmatprep.subr.bf16.mxu0 0
  %66 = vmatpush1.bf16.msra.mxu0 0
  %67 = vmatprep.subr.bf16.mxu0 0
  %68 = vmatpush1.bf16.msra.mxu0 0
  %69 = vmatprep.subr.bf16.mxu0 0
  %70 = vmatpush1.bf16.msra.mxu0 %v50
  %71 = vmatprep.subr.bf16.mxu0 0
  %72 = vmatpush1.bf16.msra.mxu0 %v49
  %73 = vmatprep.subr.bf16.mxu0 0
  %74 = vmatpush2.bf16.msra.mxu0 0
  %75 = vmatprep.subr.bf16.mxu0 0
  %76 = vmatpush2.bf16.msra.mxu0 0
  %77 = vmatprep.subr.bf16.mxu0 0
  %78 = vmatpush2.bf16.msra.mxu0 0
  %79 = vmatprep.subr.bf16.mxu0 0
  %80 = vmatpush2.bf16.msra.mxu0 0
  %81 = vmatprep.subr.bf16.mxu0 0
  %82 = vmatpush2.bf16.msra.mxu0 0
  %83 = vmatprep.subr.bf16.mxu0 0
  %84 = vmatpush2.bf16.msra.mxu0 0
  %85 = vmatprep.subr.bf16.mxu0 0
  %86 = vmatpush2.bf16.msra.mxu0 0
  %87 = vmatprep.subr.bf16.mxu0 0
  %88 = vmatpush2.bf16.msra.mxu0 0
  %89 = vmatprep.mubr.bf16.mxu0 0
  %90 = vmatmul.mubr.bf16.gmra.mxu0 %v55
  %v91 = vpop.f32.mrf.mxu0
  %v92 = vadd.f32 0.0, %v91
  %v93 = vpop.f32.mrf.mxu0
  %v94 = vpop.f32.mrf.mxu0
  %v95 = vadd.f32 0.0, %v94
  %v96 = vpop.f32.mrf.mxu0
  %97 = vdwg.mxu0
  %v98 = vadd.f32 %v28, %v92
  %v99 = vadd.f32 %v29, %v95
  %100 = vst.msk [vmem:[#allocation2] sm:$0xff] %vm53, %v98
  %101 = vst.msk [vmem:[#allocation2 + $0x8] sm:$0xff] %vm53, %v99
  // Predicated region
  $region26: #{transformer_layer_pallas.7} parent=0 // pred_check
    %p102 = pneg %p21
  $region27: #{transformer_layer_pallas.7} parent=0 // pred_check_branch
    %104 = sbr.rel (%p102) target = $region29
  $region28: #{transformer_layer_pallas.7} parent=0 // pred_region
    %v105 = vld [vmem:[#allocation2] sm:$0xff]
    %v106 = vld [vmem:[#allocation2 + $0x8] sm:$0xff]
    %v107 = vld [vmem:[%s2] sm:$0xff]
    %v108 = vld [vmem:[%s2 + $0x8] sm:$0xff]
    %v109 = vadd.f32 %v105, %v107
    %v110 = vadd.f32 %v106, %v108
    %v111 = vsel %vm53, %v109, 0.0
    %112 = vadd.xlane.f32.xlu0 %v111
    %v113 = vpop.xlane.xlu0 %112
    %v114 = vsel %vm53, %v110, 0.0
    %115 = vadd.xlane.f32.xlu0 %v114
    %v116 = vpop.xlane.xlu0 %115
    %v117 = vrcp.pop 32.0
    %v118 = vmul.f32 %v113, %v117
    %v119 = vmul.f32 %v116, %v117
    %v120 = vsub.f32 %v109, %v118
    %v121 = vsub.f32 %v110, %v119
    %v122 = vmul.f32 %v120, %v120
    %v123 = vmul.f32 %v121, %v121
    %v124 = vsel %vm53, %v122, 0.0
    %125 = vadd.xlane.f32.xlu0 %v124
    %v126 = vpop.xlane.xlu0 %125
    %v127 = vsel %vm53, %v123, 0.0
    %128 = vadd.xlane.f32.xlu0 %v127
    %v129 = vpop.xlane.xlu0 %128
    %v130 = vmul.f32 %v126, %v117
    %v131 = vmul.f32 %v129, %v117
    %v132 = vadd.f32 %v130, 1e-05
    %v133 = vadd.f32 %v131, 1e-05
    %v134 = vrsqrt.pop %v132
    %v135 = vrsqrt.pop %v133
    %v136 = vmul.f32 %v120, %v134
    %v137 = vmul.f32 %v121, %v135
    %v138 = vld [vmem:[%s3] sm:$0x1]
    %v140 = vlaneseq
    %v141 = vshrl.u32 %v140, 7
    %v142 = vsub.s32 0, %v141
    %v143 = vrot.slane %v138, %v142
    %v145 = vmul.f32 %v136, %v143
    %v146 = vmul.f32 %v137, %v143
    %v147 = vld [vmem:[%s4] sm:$0x1]
    %v149 = vlaneseq
    %v150 = vshrl.u32 %v149, 7
    %v151 = vsub.s32 0, %v150
    %v152 = vrot.slane %v147, %v151
    %v154 = vadd.f32 %v145, %v152
    %v155 = vadd.f32 %v146, %v152
    %156 = vst.msk [vmem:[%s5] sm:$0xff] %vm53, %v154
    %157 = vst.msk [vmem:[%s5 + $0x8] sm:$0xff] %vm53, %v155
  $region29: #{transformer_layer_pallas.7} parent=0 // pred_fallthru
    _
  // Predicated region
  $region30: #{transformer_layer_pallas.7} parent=0 // pred_check
    _
  $region31: #{transformer_layer_pallas.7} parent=0 // pred_check_branch
    %159 = sbr.rel (0) target = $region33
  $region32: #{transformer_layer_pallas.7} parent=0 // pred_region
    _
  $region33: #{transformer_layer_pallas.7} parent=0 // pred_fallthru
    _
  // Predicated region
  $region34: #{transformer_layer_pallas.7} parent=0 // pred_check
    _
  $region35: #{transformer_layer_pallas.7} parent=0 // pred_check_branch
    %161 = sbr.rel (0) target = $region37
  $region36: #{transformer_layer_pallas.7} parent=0 // pred_region
    _
  $region37: #{transformer_layer_pallas.7} parent=0 // pred_fallthru
    _

// kernel: transformer_layer_pallas.9
$region0: #{transformer_layer_pallas.9}
  #allocation0 [shape = 'u32[]', space=smem, size = 0x4, offset = 0x4, fixed_abs, tag = 'smem constant byte address 0x4 - core index']
  #allocation1 [shape = 'u32[144,128]{1,0:T(1,128)}', space=vmem, size = 0x12000, scoped, tag = 'internal scratch']
  #allocation2 [shape = 'f32[16,32]{1,0:T(8,128)}', space=vmem, size = 0x2000, scoped, tag = 'scratch operand']
  %s0 = inlined_call_operand.vmem [shape: bf16[16,64], index: 0, kind: input, shape index: {}]
  %s1 = inlined_call_operand.vmem [shape: bf16[64,32], index: 1, kind: input, shape index: {}]
  %s2 = inlined_call_operand.vmem [shape: f32[1,32], index: 2, kind: input, shape index: {}]
  %s3 = inlined_call_operand.vmem [shape: f32[16,32], index: 3, kind: input, shape index: {}]
  %s4 = inlined_call_operand.vmem [shape: f32[1,32], index: 4, kind: input, shape index: {}]
  %s5 = inlined_call_operand.vmem [shape: f32[1,32], index: 5, kind: input, shape index: {}]
  %s6 = inlined_call_operand.vmem [shape: f32[16,32], index: 6, kind: output, shape index: {}]
  %s7 = sld [smem:[#allocation0]]
  $region42: #{transformer_layer_pallas.9} parent=0
    _
  %s9 = ssub.s32 1, %s7
  %s10 = scalar_select 0, %s9, %s7
  // Predicated region
  $region2: #{transformer_layer_pallas.9} parent=0 // pred_check
    _
  $region3: #{transformer_layer_pallas.9} parent=0 // pred_check_branch
    %12 = sbr.rel (0) target = $region5
  $region4: #{transformer_layer_pallas.9} parent=0 // pred_region
    _
  $region5: #{transformer_layer_pallas.9} parent=0 // pred_fallthru
    _
  // Predicated region
  $region6: #{transformer_layer_pallas.9} parent=0 // pred_check
    _
  $region7: #{transformer_layer_pallas.9} parent=0 // pred_check_branch
    %14 = sbr.rel (0) target = $region9
  $region8: #{transformer_layer_pallas.9} parent=0 // pred_region
    _
  $region9: #{transformer_layer_pallas.9} parent=0 // pred_fallthru
    _
  // Predicated region
  $region10: #{transformer_layer_pallas.9} parent=0 // pred_check
    _
  $region11: #{transformer_layer_pallas.9} parent=0 // pred_check_branch
    %16 = sbr.rel (0) target = $region13
  $region12: #{transformer_layer_pallas.9} parent=0 // pred_region
    _
  $region13: #{transformer_layer_pallas.9} parent=0 // pred_fallthru
    _
  // Predicated region
  $region14: #{transformer_layer_pallas.9} parent=0 // pred_check
    _
  $region15: #{transformer_layer_pallas.9} parent=0 // pred_check_branch
    %18 = sbr.rel (0) target = $region17
  $region16: #{transformer_layer_pallas.9} parent=0 // pred_region
    _
  $region17: #{transformer_layer_pallas.9} parent=0 // pred_fallthru
    _
  // Predicated region
  $region18: #{transformer_layer_pallas.9} parent=0 // pred_check
    _
  $region19: #{transformer_layer_pallas.9} parent=0 // pred_check_branch
    %20 = sbr.rel (0) target = $region21
  $region20: #{transformer_layer_pallas.9} parent=0 // pred_region
    _
  $region21: #{transformer_layer_pallas.9} parent=0 // pred_fallthru
    _
  // Predicated region
  $region22: #{transformer_layer_pallas.9} parent=0 // pred_check
    _
  $region23: #{transformer_layer_pallas.9} parent=0 // pred_check_branch
    %22 = sbr.rel (0) target = $region25
  $region24: #{transformer_layer_pallas.9} parent=0 // pred_region
    _
  $region25: #{transformer_layer_pallas.9} parent=0 // pred_fallthru
    _
  %p24 = scmp.eq.s32.totalorder 0, 0
  // Predicated region
  $region26: #{transformer_layer_pallas.9} parent=0 // pred_check
    %p25 = pneg %p24
  $region27: #{transformer_layer_pallas.9} parent=0 // pred_check_branch
    %27 = sbr.rel (%p25) target = $region29
  $region28: #{transformer_layer_pallas.9} parent=0 // pred_region
    %vm28 = vcmask 261120
    %29 = vst.msk [vmem:[#allocation2] sm:$0xff] %vm28, 0.0
    %30 = vst.msk [vmem:[#allocation2 + $0x8] sm:$0xff] %vm28, 0.0
  $region29: #{transformer_layer_pallas.9} parent=0 // pred_fallthru
    _
  %v31 = vld [vmem:[#allocation2] sm:$0xff]
  %v32 = vld [vmem:[#allocation2 + $0x8] sm:$0xff]
  %v33 = vld [vmem:[%s0] sm:$0xf]
  %v34 = vld [vmem:[%s0 + $0x4] sm:$0xf]
  %v35 = vld [vmem:[%s1] sm:$0xf]
  %v36 = vld [vmem:[%s1 + $0x4] sm:$0xf]
  %v37 = vld [vmem:[%s1 + $0x8] sm:$0xf]
  %v38 = vld [vmem:[%s1 + $0xc] sm:$0xf]
  %v39 = vld [vmem:[%s1 + $0x10] sm:$0xf]
  %v40 = vld [vmem:[%s1 + $0x14] sm:$0xf]
  %v41 = vld [vmem:[%s1 + $0x18] sm:$0xf]
  %v42 = vld [vmem:[%s1 + $0x1c] sm:$0xf]
  %v45 = vunpack.c.l.b16 %v33
  %v46 = vunpack.c.l.b16 %v34
  %v47 = vpack.c.b16 %v46, %v45
  %v56 = vunpack.c.l.b16 %v35
  %v57 = vunpack.c.l.b16 %v36
  %v58 = vunpack.c.l.b16 %v37
  %v59 = vunpack.c.l.b16 %v38
  %v60 = vunpack.c.l.b16 %v39
  %v61 = vunpack.c.l.b16 %v40
  %v62 = vunpack.c.l.b16 %v41
  %v63 = vunpack.c.l.b16 %v42
  %v64 = vpack.c.b16 %v57, %v56
  %v65 = vpack.c.b16 %v59, %v58
  %v66 = vpack.c.b16 %v61, %v60
  %v67 = vpack.c.b16 %v63, %v62
  %vm72 = vcmask 523264
  %v74 = vsel %vm72, %v47, 0
  %76 = vmatprep.subr.bf16.mxu0 0
  %77 = vmatpush1.bf16.msra.mxu0 0
  %78 = vmatprep.subr.bf16.mxu0 0
  %79 = vmatpush1.bf16.msra.mxu0 0
  %80 = vmatprep.subr.bf16.mxu0 0
  %81 = vmatpush1.bf16.msra.mxu0 0
  %82 = vmatprep.subr.bf16.mxu0 0
  %83 = vmatpush1.bf16.msra.mxu0 0
  %84 = vmatprep.subr.bf16.mxu0 0
  %85 = vmatpush1.bf16.msra.mxu0 %v67
  %86 = vmatprep.subr.bf16.mxu0 0
  %87 = vmatpush1.bf16.msra.mxu0 %v66
  %88 = vmatprep.subr.bf16.mxu0 0
  %89 = vmatpush1.bf16.msra.mxu0 %v65
  %90 = vmatprep.subr.bf16.mxu0 0
  %91 = vmatpush1.bf16.msra.mxu0 %v64
  %92 = vmatprep.subr.bf16.mxu0 0
  %93 = vmatpush2.bf16.msra.mxu0 0
  %94 = vmatprep.subr.bf16.mxu0 0
  %95 = vmatpush2.bf16.msra.mxu0 0
  %96 = vmatprep.subr.bf16.mxu0 0
  %97 = vmatpush2.bf16.msra.mxu0 0
  %98 = vmatprep.subr.bf16.mxu0 0
  %99 = vmatpush2.bf16.msra.mxu0 0
  %100 = vmatprep.subr.bf16.mxu0 0
  %101 = vmatpush2.bf16.msra.mxu0 0
  %102 = vmatprep.subr.bf16.mxu0 0
  %103 = vmatpush2.bf16.msra.mxu0 0
  %104 = vmatprep.subr.bf16.mxu0 0
  %105 = vmatpush2.bf16.msra.mxu0 0
  %106 = vmatprep.subr.bf16.mxu0 0
  %107 = vmatpush2.bf16.msra.mxu0 0
  %108 = vmatprep.mubr.bf16.mxu0 0
  %109 = vmatmul.mubr.bf16.gmra.mxu0 %v74
  %v110 = vpop.f32.mrf.mxu0
  %v111 = vadd.f32 0.0, %v110
  %v112 = vpop.f32.mrf.mxu0
  %v113 = vpop.f32.mrf.mxu0
  %v114 = vadd.f32 0.0, %v113
  %v115 = vpop.f32.mrf.mxu0
  %116 = vdwg.mxu0
  %v117 = vadd.f32 %v31, %v111
  %v118 = vadd.f32 %v32, %v114
  %vm119 = vcmask 261120
  %120 = vst.msk [vmem:[#allocation2] sm:$0xff] %vm119, %v117
  %121 = vst.msk [vmem:[#allocation2 + $0x8] sm:$0xff] %vm119, %v118
  // Predicated region
  $region30: #{transformer_layer_pallas.9} parent=0 // pred_check
    %p122 = pneg %p24
  $region31: #{transformer_layer_pallas.9} parent=0 // pred_check_branch
    %124 = sbr.rel (%p122) target = $region33
  $region32: #{transformer_layer_pallas.9} parent=0 // pred_region
    %v125 = vld [vmem:[#allocation2] sm:$0xff]
    %v126 = vld [vmem:[#allocation2 + $0x8] sm:$0xff]
    %v127 = vld [vmem:[%s2] sm:$0x1]
    %v129 = vlaneseq
    %v130 = vshrl.u32 %v129, 7
    %v131 = vsub.s32 0, %v130
    %v132 = vrot.slane %v127, %v131
    %v134 = vadd.f32 %v125, %v132
    %v135 = vadd.f32 %v126, %v132
    %v136 = vld [vmem:[%s3] sm:$0xff]
    %v137 = vld [vmem:[%s3 + $0x8] sm:$0xff]
    %v138 = vadd.f32 %v134, %v136
    %v139 = vadd.f32 %v135, %v137
    %v140 = vsel %vm119, %v138, 0.0
    %141 = vadd.xlane.f32.xlu0 %v140
    %v142 = vpop.xlane.xlu0 %141
    %v143 = vsel %vm119, %v139, 0.0
    %144 = vadd.xlane.f32.xlu0 %v143
    %v145 = vpop.xlane.xlu0 %144
    %v146 = vrcp.pop 32.0
    %v147 = vmul.f32 %v142, %v146
    %v148 = vmul.f32 %v145, %v146
    %v149 = vsub.f32 %v138, %v147
    %v150 = vsub.f32 %v139, %v148
    %v151 = vmul.f32 %v149, %v149
    %v152 = vmul.f32 %v150, %v150
    %v153 = vsel %vm119, %v151, 0.0
    %154 = vadd.xlane.f32.xlu0 %v153
    %v155 = vpop.xlane.xlu0 %154
    %v156 = vsel %vm119, %v152, 0.0
    %157 = vadd.xlane.f32.xlu0 %v156
    %v158 = vpop.xlane.xlu0 %157
    %v159 = vmul.f32 %v155, %v146
    %v160 = vmul.f32 %v158, %v146
    %v161 = vadd.f32 %v159, 1e-05
    %v162 = vadd.f32 %v160, 1e-05
    %v163 = vrsqrt.pop %v161
    %v164 = vrsqrt.pop %v162
    %v165 = vmul.f32 %v149, %v163
    %v166 = vmul.f32 %v150, %v164
    %v167 = vld [vmem:[%s4] sm:$0x1]
    %v169 = vlaneseq
    %v170 = vshrl.u32 %v169, 7
    %v171 = vsub.s32 0, %v170
    %v172 = vrot.slane %v167, %v171
    %v174 = vmul.f32 %v165, %v172
    %v175 = vmul.f32 %v166, %v172
    %v176 = vld [vmem:[%s5] sm:$0x1]
    %v178 = vlaneseq
    %v179 = vshrl.u32 %v178, 7
    %v180 = vsub.s32 0, %v179
    %v181 = vrot.slane %v176, %v180
    %v183 = vadd.f32 %v174, %v181
    %v184 = vadd.f32 %v175, %v181
    %185 = vst.msk [vmem:[%s6] sm:$0xff] %vm119, %v183
    %186 = vst.msk [vmem:[%s6 + $0x8] sm:$0xff] %vm119, %v184
  $region33: #{transformer_layer_pallas.9} parent=0 // pred_fallthru
    _
  // Predicated region
  $region34: #{transformer_layer_pallas.9} parent=0 // pred_check
    _
  $region35: #{transformer_layer_pallas.9} parent=0 // pred_check_branch
    %188 = sbr.rel (0) target = $region37
  $region36: #{transformer_layer_pallas.9} parent=0 // pred_region
    _
  $region37: #{transformer_layer_pallas.9} parent=0 // pred_fallthru
    _
  // Predicated region
  $region38: #{transformer_layer_pallas.9} parent=0 // pred_check
    _
  $region39: #{transformer_layer_pallas.9} parent=0 // pred_check_branch
    %190 = sbr.rel (0) target = $region41
  $region40: #{transformer_layer_pallas.9} parent=0 // pred_region
    _
  $region41: #{transformer_layer_pallas.9} parent=0 // pred_fallthru
    _

// kernel: transformer_layer_pallas.6
$region0: #{transformer_layer_pallas.6}
  #allocation0 [shape = 'u32[]', space=smem, size = 0x4, offset = 0x4, fixed_abs, tag = 'smem constant byte address 0x4 - core index']
  #allocation1 [shape = 'u32[144,128]{1,0:T(1,128)}', space=vmem, size = 0x12000, scoped, tag = 'internal scratch']
  #allocation2 [shape = 'f32[4,8,1]{2,1,0:T(8,128)}', space=vmem, size = 0x4000, scoped, tag = 'scratch operand']
  #allocation3 [shape = 'f32[4,8,1]{2,1,0:T(8,128)}', space=vmem, size = 0x4000, scoped, tag = 'scratch operand']
  #allocation4 [shape = 'f32[8,32]{1,0:T(8,128)}', space=vmem, size = 0x1000, scoped, tag = 'scratch operand']
  %s0 = inlined_call_operand.vmem [shape: bf16[2,8,32], index: 0, kind: input, shape index: {}]
  %s1 = inlined_call_operand.vmem [shape: bf16[2,8,32], index: 1, kind: input, shape index: {}]
  %s2 = inlined_call_operand.vmem [shape: bf16[2,8,32], index: 2, kind: input, shape index: {}]
  %s3 = inlined_call_operand.vmem [shape: bf16[2,8,32], index: 3, kind: input, shape index: {}]
  %s4 = inlined_call_operand.vmem [shape: bf16[2,8,4,32], index: 4, kind: input, shape index: {}]
  %s5 = inlined_call_operand.vmem [shape: f32[2,8,8,32], index: 5, kind: input, shape index: {}]
  %s6 = inlined_call_operand.vmem [shape: f32[2,4,8,8], index: 6, kind: input, shape index: {}]
  %s7 = inlined_call_operand.vmem [shape: f32[2,4,8,8], index: 7, kind: input, shape index: {}]
  %s8 = inlined_call_operand.vmem [shape: bf16[2,8,32], index: 8, kind: output, shape index: {}]
  %s9 = sld [smem:[#allocation0]]
  $region73: #{transformer_layer_pallas.6} parent=0
    _
  %s11 = ssub.s32 1, %s9
  %s12 = scalar_select 0, %s11, %s9
  loop: start=0, step=1, limit=4
  $region2: #{transformer_layer_pallas.6} parent=0 // loop_pre_header
    _
  $region3: #{transformer_layer_pallas.6} parent=0 // loop_header
    %s14 = sphi 0, %s18
    %p15 = scmp.ge.s32.totalorder %s14, 4
    %s21 = sphi 0, %s40
    %s22 = sphi 0, %s36
    %s23 = sphi 0, %s32
    %s24 = sphi 0, %s21
    %s25 = sphi 0, %s22
    %s26 = sphi 0, %s23
    %s27 = sphi 0, %s24
    %s28 = sphi 0, %s25
    %s29 = sphi 0, %s26
    %s45 = sphi 0, %s47
    %s48 = sphi 0, %s45
    %s49 = sphi 0, %s48
    %s65 = sphi 0, %s49
    %s73 = sphi 0, %s75
    %s76 = sphi 0, %s73
    %s77 = sphi 0, %s76
    %s93 = sphi 0, %s77
    %s101 = sphi 0, %s103
    %s104 = sphi 0, %s101
    %s105 = sphi 0, %s104
    %s121 = sphi 0, %s105
    %s129 = sphi 0, %s131
    %s132 = sphi 0, %s129
    %s133 = sphi 0, %s132
    %s149 = sphi 0, %s133
    %s157 = sphi 0, %s159
    %s160 = sphi 0, %s157
    %s161 = sphi 0, %s160
    %s177 = sphi 0, %s161
    %s187 = sphi 0, %s189
    %s190 = sphi 0, %s187
    %s191 = sphi 0, %s190
    %s207 = sphi 0, %s191
    %s217 = sphi 0, %s219
    %s220 = sphi 0, %s217
    %s221 = sphi 0, %s220
    %s237 = sphi 0, %s221
    %s247 = sphi 0, %s249
    %s250 = sphi 0, %s247
    %s251 = sphi 0, %s250
    %s267 = sphi 0, %s251
    %s275 = sphi 0, %s277
    %s278 = sphi 0, %s275
    %s279 = sphi 0, %s278
    %s295 = sphi 0, %s279
  $region4: #{transformer_layer_pallas.6} parent=0 // loop_header_branch
    %17 = sbr.rel (%p15) target = $region8
  $region5: #{transformer_layer_pallas.6} parent=0 // loop_body
    %s19 = ssub.s32 %s14, 1
    %s20 = ssub.s32 %s14, 2
    %s30 = sadd.s32 1, %s23
    %p31 = scmp.ge.s32.totalorder %s30, 1
    %s32 = scalar_select %p31, 0, %s30
    %s33 = sadd.s32 1, %s22
    %s34 = scalar_select %p31, %s33, %s22
    %p35 = scmp.ge.s32.totalorder %s34, 1
    %s36 = scalar_select %p35, 0, %s34
    %s37 = sadd.s32 1, %s21
    %s38 = scalar_select %p35, %s37, %s21
    %p39 = scmp.ge.s32.totalorder %s38, 2
    %s40 = scalar_select %p39, 0, %s38
    %s41 = ssub.s32 %s21, %s40
    %s42 = ssub.s32 %s22, %s36
    %s43 = sor.u32 %s41, %s42
    %p44 = scmp.eq.s32.totalorder %s43, 0
    %s46 = sadd.s32 %s45, 1
    %s47 = scalar_select %p44, %s45, %s46
    %p50 = pneg %p44
    %p51 = scmp.eq.s32.totalorder %s14, 1
    %p52 = por %p50, %p51
    %p53 = scmp.ne.s32.totalorder %s45, %s48
    %p54 = scmp.eq.s32.totalorder %s14, 0
    %p55 = por %p53, %p54
    %p56 = scmp.ne.s32.totalorder %s45, %s48
    %p57 = scmp.eq.s32.totalorder %s19, 1
    %p58 = por %p56, %p57
    %p59 = scmp.ne.s32.totalorder %s48, %s49
    %p60 = scmp.eq.s32.totalorder %s19, 0
    %p61 = por %p59, %p60
    %p62 = scmp.ne.s32.totalorder %s48, %s49
    %p63 = scmp.eq.s32.totalorder %s20, 1
    %p64 = por %p62, %p63
    %p66 = scmp.ne.s32.totalorder %s49, %s65
    %p67 = scmp.eq.s32.totalorder %s20, 0
    %p68 = por %p66, %p67
    %s69 = ssub.s32 %s21, %s40
    %s70 = ssub.s32 %s23, %s32
    %s71 = sor.u32 %s69, %s70
    %p72 = scmp.eq.s32.totalorder %s71, 0
    %s74 = sadd.s32 %s73, 1
    %s75 = scalar_select %p72, %s73, %s74
    %p78 = pneg %p72
    %p79 = scmp.eq.s32.totalorder %s14, 1
    %p80 = por %p78, %p79
    %p81 = scmp.ne.s32.totalorder %s73, %s76
    %p82 = scmp.eq.s32.totalorder %s14, 0
    %p83 = por %p81, %p82
    %p84 = scmp.ne.s32.totalorder %s73, %s76
    %p85 = scmp.eq.s32.totalorder %s19, 1
    %p86 = por %p84, %p85
    %p87 = scmp.ne.s32.totalorder %s76, %s77
    %p88 = scmp.eq.s32.totalorder %s19, 0
    %p89 = por %p87, %p88
    %p90 = scmp.ne.s32.totalorder %s76, %s77
    %p91 = scmp.eq.s32.totalorder %s20, 1
    %p92 = por %p90, %p91
    %p94 = scmp.ne.s32.totalorder %s77, %s93
    %p95 = scmp.eq.s32.totalorder %s20, 0
    %p96 = por %p94, %p95
    %s97 = ssub.s32 %s21, %s40
    %s98 = ssub.s32 %s23, %s32
    %s99 = sor.u32 %s97, %s98
    %p100 = scmp.eq.s32.totalorder %s99, 0
    %s102 = sadd.s32 %s101, 1
    %s103 = scalar_select %p100, %s101, %s102
    %p106 = pneg %p100
    %p107 = scmp.eq.s32.totalorder %s14, 1
    %p108 = por %p106, %p107
    %p109 = scmp.ne.s32.totalorder %s101, %s104
    %p110 = scmp.eq.s32.totalorder %s14, 0
    %p111 = por %p109, %p110
    %p112 = scmp.ne.s32.totalorder %s101, %s104
    %p113 = scmp.eq.s32.totalorder %s19, 1
    %p114 = por %p112, %p113
    %p115 = scmp.ne.s32.totalorder %s104, %s105
    %p116 = scmp.eq.s32.totalorder %s19, 0
    %p117 = por %p115, %p116
    %p118 = scmp.ne.s32.totalorder %s104, %s105
    %p119 = scmp.eq.s32.totalorder %s20, 1
    %p120 = por %p118, %p119
    %p122 = scmp.ne.s32.totalorder %s105, %s121
    %p123 = scmp.eq.s32.totalorder %s20, 0
    %p124 = por %p122, %p123
    %s125 = ssub.s32 %s21, %s40
    %s126 = ssub.s32 %s23, %s32
    %s127 = sor.u32 %s125, %s126
    %p128 = scmp.eq.s32.totalorder %s127, 0
    %s130 = sadd.s32 %s129, 1
    %s131 = scalar_select %p128, %s129, %s130
    %p134 = pneg %p128
    %p135 = scmp.eq.s32.totalorder %s14, 1
    %p136 = por %p134, %p135
    %p137 = scmp.ne.s32.totalorder %s129, %s132
    %p138 = scmp.eq.s32.totalorder %s14, 0
    %p139 = por %p137, %p138
    %p140 = scmp.ne.s32.totalorder %s129, %s132
    %p141 = scmp.eq.s32.totalorder %s19, 1
    %p142 = por %p140, %p141
    %p143 = scmp.ne.s32.totalorder %s132, %s133
    %p144 = scmp.eq.s32.totalorder %s19, 0
    %p145 = por %p143, %p144
    %p146 = scmp.ne.s32.totalorder %s132, %s133
    %p147 = scmp.eq.s32.totalorder %s20, 1
    %p148 = por %p146, %p147
    %p150 = scmp.ne.s32.totalorder %s133, %s149
    %p151 = scmp.eq.s32.totalorder %s20, 0
    %p152 = por %p150, %p151
    %s153 = ssub.s32 %s21, %s40
    %s154 = ssub.s32 %s22, %s36
    %s155 = sor.u32 %s153, %s154
    %p156 = scmp.eq.s32.totalorder %s155, 0
    %s158 = sadd.s32 %s157, 1
    %s159 = scalar_select %p156, %s157, %s158
    %p162 = pneg %p156
    %p163 = scmp.eq.s32.totalorder %s14, 1
    %p164 = por %p162, %p163
    %p165 = scmp.ne.s32.totalorder %s157, %s160
    %p166 = scmp.eq.s32.totalorder %s14, 0
    %p167 = por %p165, %p166
    %p168 = scmp.ne.s32.totalorder %s157, %s160
    %p169 = scmp.eq.s32.totalorder %s19, 1
    %p170 = por %p168, %p169
    %p171 = scmp.ne.s32.totalorder %s160, %s161
    %p172 = scmp.eq.s32.totalorder %s19, 0
    %p173 = por %p171, %p172
    %p174 = scmp.ne.s32.totalorder %s160, %s161
    %p175 = scmp.eq.s32.totalorder %s20, 1
    %p176 = por %p174, %p175
    %p178 = scmp.ne.s32.totalorder %s161, %s177
    %p179 = scmp.eq.s32.totalorder %s20, 0
    %p180 = por %p178, %p179
    %s181 = ssub.s32 %s21, %s40
    %s182 = ssub.s32 %s22, %s36
    %s183 = sor.u32 %s181, %s182
    %s184 = ssub.s32 %s23, %s32
    %s185 = sor.u32 %s183, %s184
    %p186 = scmp.eq.s32.totalorder %s185, 0
    %s188 = sadd.s32 %s187, 1
    %s189 = scalar_select %p186, %s187, %s188
    %p192 = pneg %p186
    %p193 = scmp.eq.s32.totalorder %s14, 1
    %p194 = por %p192, %p193
    %p195 = scmp.ne.s32.totalorder %s187, %s190
    %p196 = scmp.eq.s32.totalorder %s14, 0
    %p197 = por %p195, %p196
    %p198 = scmp.ne.s32.totalorder %s187, %s190
    %p199 = scmp.eq.s32.totalorder %s19, 1
    %p200 = por %p198, %p199
    %p201 = scmp.ne.s32.totalorder %s190, %s191
    %p202 = scmp.eq.s32.totalorder %s19, 0
    %p203 = por %p201, %p202
    %p204 = scmp.ne.s32.totalorder %s190, %s191
    %p205 = scmp.eq.s32.totalorder %s20, 1
    %p206 = por %p204, %p205
    %p208 = scmp.ne.s32.totalorder %s191, %s207
    %p209 = scmp.eq.s32.totalorder %s20, 0
    %p210 = por %p208, %p209
    %s211 = ssub.s32 %s21, %s40
    %s212 = ssub.s32 %s22, %s36
    %s213 = sor.u32 %s211, %s212
    %s214 = ssub.s32 %s23, %s32
    %s215 = sor.u32 %s213, %s214
    %p216 = scmp.eq.s32.totalorder %s215, 0
    %s218 = sadd.s32 %s217, 1
    %s219 = scalar_select %p216, %s217, %s218
    %p222 = pneg %p216
    %p223 = scmp.eq.s32.totalorder %s14, 1
    %p224 = por %p222, %p223
    %p225 = scmp.ne.s32.totalorder %s217, %s220
    %p226 = scmp.eq.s32.totalorder %s14, 0
    %p227 = por %p225, %p226
    %p228 = scmp.ne.s32.totalorder %s217, %s220
    %p229 = scmp.eq.s32.totalorder %s19, 1
    %p230 = por %p228, %p229
    %p231 = scmp.ne.s32.totalorder %s220, %s221
    %p232 = scmp.eq.s32.totalorder %s19, 0
    %p233 = por %p231, %p232
    %p234 = scmp.ne.s32.totalorder %s220, %s221
    %p235 = scmp.eq.s32.totalorder %s20, 1
    %p236 = por %p234, %p235
    %p238 = scmp.ne.s32.totalorder %s221, %s237
    %p239 = scmp.eq.s32.totalorder %s20, 0
    %p240 = por %p238, %p239
    %s241 = ssub.s32 %s21, %s40
    %s242 = ssub.s32 %s22, %s36
    %s243 = sor.u32 %s241, %s242
    %s244 = ssub.s32 %s23, %s32
    %s245 = sor.u32 %s243, %s244
    %p246 = scmp.eq.s32.totalorder %s245, 0
    %s248 = sadd.s32 %s247, 1
    %s249 = scalar_select %p246, %s247, %s248
    %p252 = pneg %p246
    %p253 = scmp.eq.s32.totalorder %s14, 1
    %p254 = por %p252, %p253
    %p255 = scmp.ne.s32.totalorder %s247, %s250
    %p256 = scmp.eq.s32.totalorder %s14, 0
    %p257 = por %p255, %p256
    %p258 = scmp.ne.s32.totalorder %s247, %s250
    %p259 = scmp.eq.s32.totalorder %s19, 1
    %p260 = por %p258, %p259
    %p261 = scmp.ne.s32.totalorder %s250, %s251
    %p262 = scmp.eq.s32.totalorder %s19, 0
    %p263 = por %p261, %p262
    %p264 = scmp.ne.s32.totalorder %s250, %s251
    %p265 = scmp.eq.s32.totalorder %s20, 1
    %p266 = por %p264, %p265
    %p268 = scmp.ne.s32.totalorder %s251, %s267
    %p269 = scmp.eq.s32.totalorder %s20, 0
    %p270 = por %p268, %p269
    %s271 = ssub.s32 %s21, %s40
    %s272 = ssub.s32 %s22, %s36
    %s273 = sor.u32 %s271, %s272
    %p274 = scmp.eq.s32.totalorder %s273, 0
    %s276 = sadd.s32 %s275, 1
    %s277 = scalar_select %p274, %s275, %s276
    %p280 = pneg %p274
    %p281 = scmp.eq.s32.totalorder %s14, 1
    %p282 = por %p280, %p281
    %p283 = scmp.ne.s32.totalorder %s275, %s278
    %p284 = scmp.eq.s32.totalorder %s14, 0
    %p285 = por %p283, %p284
    %p286 = scmp.ne.s32.totalorder %s275, %s278
    %p287 = scmp.eq.s32.totalorder %s19, 1
    %p288 = por %p286, %p287
    %p289 = scmp.ne.s32.totalorder %s278, %s279
    %p290 = scmp.eq.s32.totalorder %s19, 0
    %p291 = por %p289, %p290
    %p292 = scmp.ne.s32.totalorder %s278, %s279
    %p293 = scmp.eq.s32.totalorder %s20, 1
    %p294 = por %p292, %p293
    %p296 = scmp.ne.s32.totalorder %s279, %s295
    %p297 = scmp.eq.s32.totalorder %s20, 0
    %p298 = por %p296, %p297
    %p299 = scmp.le.s32.totalorder 1, %s14
    %p300 = scmp.lt.s32.totalorder %s14, 3
    %p301 = pnand %p299, %p300
    %p302 = pneg %p301
    // Predicated region
    $region9: #{transformer_layer_pallas.6} parent=5 // pred_check
      _
    $region10: #{transformer_layer_pallas.6} parent=5 // pred_check_branch
      %304 = sbr.rel (%p301) target = $region12
    $region11: #{transformer_layer_pallas.6} parent=5 // pred_region
      %s305 = ssub.s32 %s14, 1
    $region12: #{transformer_layer_pallas.6} parent=5 // pred_fallthru
      _
    %p306 = scmp.lt.s32.totalorder %s14, 2
    // Predicated region
    $region13: #{transformer_layer_pallas.6} parent=5 // pred_check
      %p307 = pneg %p306
    $region14: #{transformer_layer_pallas.6} parent=5 // pred_check_branch
      %309 = sbr.rel (%p307) target = $region16
    $region15: #{transformer_layer_pallas.6} parent=5 // pred_region
      // Predicated region
      $region17: #{transformer_layer_pallas.6} parent=15 // pred_check
        %p310 = pneg %p55
      $region18: #{transformer_layer_pallas.6} parent=15 // pred_check_branch
        %312 = sbr.rel (%p310) target = $region20
      $region19: #{transformer_layer_pallas.6} parent=15 // pred_region
        %p313 = scmp.lt.s32.totalorder %s21, 1
        %s314 = scalar_select %p313, %s21, 1
        %p315 = scmp.lt.s32.totalorder %s22, 0
        %s316 = scalar_select %p315, %s22, 0
        %s317 = sadd.s32 %s316, %s314
        %s318 = smul.addr %s317, 4
        %s319 = scalar_lea.vmem %s0, %s318
      $region20: #{transformer_layer_pallas.6} parent=15 // pred_fallthru
        _
      // Predicated region
      $region21: #{transformer_layer_pallas.6} parent=15 // pred_check
        %p320 = pneg %p83
      $region22: #{transformer_layer_pallas.6} parent=15 // pred_check_branch
        %322 = sbr.rel (%p320) target = $region24
      $region23: #{transformer_layer_pallas.6} parent=15 // pred_region
        %p323 = scmp.lt.s32.totalorder %s21, 1
        %s324 = scalar_select %p323, %s21, 1
        %p325 = scmp.lt.s32.totalorder %s23, 0
        %s326 = scalar_select %p325, %s23, 0
        %s327 = sadd.s32 %s326, %s324
        %s328 = smul.addr %s327, 4
        %s329 = scalar_lea.vmem %s1, %s328
      $region24: #{transformer_layer_pallas.6} parent=15 // pred_fallthru
        _
      // Predicated region
      $region25: #{transformer_layer_pallas.6} parent=15 // pred_check
        %p330 = pneg %p111
      $region26: #{transformer_layer_pallas.6} parent=15 // pred_check_branch
        %332 = sbr.rel (%p330) target = $region28
      $region27: #{transformer_layer_pallas.6} parent=15 // pred_region
        %p333 = scmp.lt.s32.totalorder %s21, 1
        %s334 = scalar_select %p333, %s21, 1
        %p335 = scmp.lt.s32.totalorder %s23, 0
        %s336 = scalar_select %p335, %s23, 0
        %s337 = sadd.s32 %s336, %s334
        %s338 = smul.addr %s337, 4
        %s339 = scalar_lea.vmem %s2, %s338
      $region28: #{transformer_layer_pallas.6} parent=15 // pred_fallthru
        _
      // Predicated region
      $region29: #{transformer_layer_pallas.6} parent=15 // pred_check
        %p340 = pneg %p139
      $region30: #{transformer_layer_pallas.6} parent=15 // pred_check_branch
        %342 = sbr.rel (%p340) target = $region32
      $region31: #{transformer_layer_pallas.6} parent=15 // pred_region
        %p343 = scmp.lt.s32.totalorder %s21, 1
        %s344 = scalar_select %p343, %s21, 1
        %p345 = scmp.lt.s32.totalorder %s23, 0
        %s346 = scalar_select %p345, %s23, 0
        %s347 = sadd.s32 %s346, %s344
        %s348 = smul.addr %s347, 4
        %s349 = scalar_lea.vmem %s3, %s348
      $region32: #{transformer_layer_pallas.6} parent=15 // pred_fallthru
        _
      // Predicated region
      $region33: #{transformer_layer_pallas.6} parent=15 // pred_check
        %p350 = pneg %p167
      $region34: #{transformer_layer_pallas.6} parent=15 // pred_check_branch
        %352 = sbr.rel (%p350) target = $region36
      $region35: #{transformer_layer_pallas.6} parent=15 // pred_region
        %s353 = smul.u32 8, %s22
        %p354 = scmp.lt.s32.totalorder %s21, 1
        %s355 = scalar_select %p354, %s21, 1
        %p356 = scmp.lt.s32.totalorder %s353, 7
        %s357 = scalar_select %p356, %s353, 7
        %s358 = smul.addr %s355, 8
        %s359 = sadd.s32 %s357, %s358
        %s360 = smul.addr %s359, 2
        %s361 = scalar_lea.vmem %s4, %s360
        %s362 = smul.u32 8, %s22
      $region36: #{transformer_layer_pallas.6} parent=15 // pred_fallthru
        _
      // Predicated region
      $region37: #{transformer_layer_pallas.6} parent=15 // pred_check
        %p363 = pneg %p197
      $region38: #{transformer_layer_pallas.6} parent=15 // pred_check_branch
        %365 = sbr.rel (%p363) target = $region40
      $region39: #{transformer_layer_pallas.6} parent=15 // pred_region
        %s366 = smul.u32 8, %s22
        %p367 = scmp.lt.s32.totalorder %s21, 1
        %s368 = scalar_select %p367, %s21, 1
        %p369 = scmp.lt.s32.totalorder %s366, 7
        %s370 = scalar_select %p369, %s366, 7
        %p371 = scmp.lt.s32.totalorder %s23, 0
        %s372 = scalar_select %p371, %s23, 0
        %s373 = sadd.s32 %s372, %s370
        %s374 = smul.addr %s368, 8
        %s375 = sadd.s32 %s373, %s374
        %s376 = smul.addr %s375, 8
        %s377 = scalar_lea.vmem %s5, %s376
        %s378 = smul.u32 8, %s22
      $region40: #{transformer_layer_pallas.6} parent=15 // pred_fallthru
        _
      // Predicated region
      $region41: #{transformer_layer_pallas.6} parent=15 // pred_check
        %p379 = pneg %p227
      $region42: #{transformer_layer_pallas.6} parent=15 // pred_check_branch
        %381 = sbr.rel (%p379) target = $region44
      $region43: #{transformer_layer_pallas.6} parent=15 // pred_region
        %p382 = scmp.lt.s32.totalorder %s21, 1
        %s383 = scalar_select %p382, %s21, 1
        %p384 = scmp.lt.s32.totalorder %s22, 0
        %s385 = scalar_select %p384, %s22, 0
        %p386 = scmp.lt.s32.totalorder %s23, 0
        %s387 = scalar_select %p386, %s23, 0
        %s388 = sadd.s32 %s387, %s385
        %s389 = smul.addr %s383, 4
        %s390 = sadd.s32 %s388, %s389
        %s391 = smul.addr %s390, 8
        %s392 = scalar_lea.vmem %s6, %s391
      $region44: #{transformer_layer_pallas.6} parent=15 // pred_fallthru
        _
      // Predicated region
      $region45: #{transformer_layer_pallas.6} parent=15 // pred_check
        %p393 = pneg %p257
      $region46: #{transformer_layer_pallas.6} parent=15 // pred_check_branch
        %395 = sbr.rel (%p393) target = $region48
      $region47: #{transformer_layer_pallas.6} parent=15 // pred_region
        %p396 = scmp.lt.s32.totalorder %s21, 1
        %s397 = scalar_select %p396, %s21, 1
        %p398 = scmp.lt.s32.totalorder %s22, 0
        %s399 = scalar_select %p398, %s22, 0
        %p400 = scmp.lt.s32.totalorder %s23, 0
        %s401 = scalar_select %p400, %s23, 0
        %s402 = sadd.s32 %s401, %s399
        %s403 = smul.addr %s397, 4
        %s404 = sadd.s32 %s402, %s403
        %s405 = smul.addr %s404, 8
        %s406 = scalar_lea.vmem %s7, %s405
      $region48: #{transformer_layer_pallas.6} parent=15 // pred_fallthru
        _
    $region16: #{transformer_layer_pallas.6} parent=5 // pred_fallthru
      _
    %p407 = scmp.le.s32.totalorder 1, %s14
    %p408 = scmp.lt.s32.totalorder %s14, 3
    %p409 = pnand %p407, %p408
    %p410 = pneg %p409
    // Predicated region
    $region49: #{transformer_layer_pallas.6} parent=5 // pred_check
      _
    $region50: #{transformer_layer_pallas.6} parent=5 // pred_check_branch
      %412 = sbr.rel (%p409) target = $region52
    $region51: #{transformer_layer_pallas.6} parent=5 // pred_region
      %s413 = ssub.s32 %s14, 1
      %p414 = scmp.lt.s32.totalorder %s24, 1
      %s415 = scalar_select %p414, %s24, 1
      %p416 = scmp.lt.s32.totalorder %s25, 0
      %s417 = scalar_select %p416, %s25, 0
      %s418 = sadd.s32 %s417, %s415
      %s419 = smul.addr %s418, 4
      %s420 = scalar_lea.vmem %s0, %s419
      %p421 = pneg %p61
      %p422 = pneg %p58
      %p423 = scmp.lt.s32.totalorder %s24, 1
      %s424 = scalar_select %p423, %s24, 1
      %p425 = scmp.lt.s32.totalorder %s26, 0
      %s426 = scalar_select %p425, %s26, 0
      %s427 = sadd.s32 %s426, %s424
      %s428 = smul.addr %s427, 4
      %s429 = scalar_lea.vmem %s1, %s428
      %p430 = pneg %p89
      %p431 = pneg %p86
      %p432 = scmp.lt.s32.totalorder %s24, 1
      %s433 = scalar_select %p432, %s24, 1
      %p434 = scmp.lt.s32.totalorder %s26, 0
      %s435 = scalar_select %p434, %s26, 0
      %s436 = sadd.s32 %s435, %s433
      %s437 = smul.addr %s436, 4
      %s438 = scalar_lea.vmem %s2, %s437
      %p439 = pneg %p117
      %p440 = pneg %p114
      %p441 = scmp.lt.s32.totalorder %s24, 1
      %s442 = scalar_select %p441, %s24, 1
      %p443 = scmp.lt.s32.totalorder %s26, 0
      %s444 = scalar_select %p443, %s26, 0
      %s445 = sadd.s32 %s444, %s442
      %s446 = smul.addr %s445, 4
      %s447 = scalar_lea.vmem %s3, %s446
      %p448 = pneg %p145
      %p449 = pneg %p142
      %s450 = smul.u32 8, %s25
      %p451 = scmp.lt.s32.totalorder %s24, 1
      %s452 = scalar_select %p451, %s24, 1
      %p453 = scmp.lt.s32.totalorder %s450, 7
      %s454 = scalar_select %p453, %s450, 7
      %s455 = smul.addr %s452, 8
      %s456 = sadd.s32 %s454, %s455
      %s457 = smul.addr %s456, 2
      %s458 = scalar_lea.vmem %s4, %s457
      %p459 = pneg %p173
      %p460 = pneg %p170
      %s461 = smul.u32 8, %s25
      %p462 = scmp.lt.s32.totalorder %s24, 1
      %s463 = scalar_select %p462, %s24, 1
      %p464 = scmp.lt.s32.totalorder %s461, 7
      %s465 = scalar_select %p464, %s461, 7
      %p466 = scmp.lt.s32.totalorder %s26, 0
      %s467 = scalar_select %p466, %s26, 0
      %s468 = sadd.s32 %s467, %s465
      %s469 = smul.addr %s463, 8
      %s470 = sadd.s32 %s468, %s469
      %s471 = smul.addr %s470, 8
      %s472 = scalar_lea.vmem %s5, %s471
      %p473 = pneg %p203
      %p474 = pneg %p200
      %p475 = scmp.lt.s32.totalorder %s24, 1
      %s476 = scalar_select %p475, %s24, 1
      %p477 = scmp.lt.s32.totalorder %s25, 0
      %s478 = scalar_select %p477, %s25, 0
      %p479 = scmp.lt.s32.totalorder %s26, 0
      %s480 = scalar_select %p479, %s26, 0
      %s481 = sadd.s32 %s480, %s478
      %s482 = smul.addr %s476, 4
      %s483 = sadd.s32 %s481, %s482
      %s484 = smul.addr %s483, 8
      %s485 = scalar_lea.vmem %s6, %s484
      %p486 = pneg %p233
      %p487 = pneg %p230
      %p488 = scmp.lt.s32.totalorder %s24, 1
      %s489 = scalar_select %p488, %s24, 1
      %p490 = scmp.lt.s32.totalorder %s25, 0
      %s491 = scalar_select %p490, %s25, 0
      %p492 = scmp.lt.s32.totalorder %s26, 0
      %s493 = scalar_select %p492, %s26, 0
      %s494 = sadd.s32 %s493, %s491
      %s495 = smul.addr %s489, 4
      %s496 = sadd.s32 %s494, %s495
      %s497 = smul.addr %s496, 8
      %s498 = scalar_lea.vmem %s7, %s497
      %p499 = pneg %p263
      %p500 = pneg %p260
      %p501 = pneg %p291
      %p502 = pneg %p288
      %p503 = scmp.lt.s32.totalorder %s24, 1
      %s504 = scalar_select %p503, %s24, 1
      %p505 = scmp.lt.s32.totalorder %s25, 0
      %s506 = scalar_select %p505, %s25, 0
      %s507 = sadd.s32 %s506, %s504
      %s508 = smul.addr %s507, 4
      %s509 = scalar_lea.vmem %s8, %s508
      %p510 = scmp.lt.s32.totalorder %s24, 1
      %s511 = scalar_select %p510, %s24, 1
      %p512 = scmp.lt.s32.totalorder %s25, 0
      %s513 = scalar_select %p512, %s25, 0
      %s514 = sadd.s32 %s513, %s511
      %s515 = smul.addr %s514, 4
      %s516 = scalar_lea.vmem %s0, %s515
      %p517 = scmp.lt.s32.totalorder %s24, 1
      %s518 = scalar_select %p517, %s24, 1
      %p519 = scmp.lt.s32.totalorder %s26, 0
      %s520 = scalar_select %p519, %s26, 0
      %s521 = sadd.s32 %s520, %s518
      %s522 = smul.addr %s521, 4
      %s523 = scalar_lea.vmem %s1, %s522
      %p524 = scmp.lt.s32.totalorder %s24, 1
      %s525 = scalar_select %p524, %s24, 1
      %p526 = scmp.lt.s32.totalorder %s26, 0
      %s527 = scalar_select %p526, %s26, 0
      %s528 = sadd.s32 %s527, %s525
      %s529 = smul.addr %s528, 4
      %s530 = scalar_lea.vmem %s2, %s529
      %p531 = scmp.lt.s32.totalorder %s24, 1
      %s532 = scalar_select %p531, %s24, 1
      %p533 = scmp.lt.s32.totalorder %s26, 0
      %s534 = scalar_select %p533, %s26, 0
      %s535 = sadd.s32 %s534, %s532
      %s536 = smul.addr %s535, 4
      %s537 = scalar_lea.vmem %s3, %s536
      %s538 = smul.u32 8, %s25
      %p539 = scmp.lt.s32.totalorder %s24, 1
      %s540 = scalar_select %p539, %s24, 1
      %p541 = scmp.lt.s32.totalorder %s538, 7
      %s542 = scalar_select %p541, %s538, 7
      %s543 = smul.addr %s540, 8
      %s544 = sadd.s32 %s542, %s543
      %s545 = smul.addr %s544, 2
      %s546 = scalar_lea.vmem %s4, %s545
      %s547 = smul.u32 8, %s25
      %s548 = smul.u32 8, %s25
      %p549 = scmp.lt.s32.totalorder %s24, 1
      %s550 = scalar_select %p549, %s24, 1
      %p551 = scmp.lt.s32.totalorder %s548, 7
      %s552 = scalar_select %p551, %s548, 7
      %p553 = scmp.lt.s32.totalorder %s26, 0
      %s554 = scalar_select %p553, %s26, 0
      %s555 = sadd.s32 %s554, %s552
      %s556 = smul.addr %s550, 8
      %s557 = sadd.s32 %s555, %s556
      %s558 = smul.addr %s557, 8
      %s559 = scalar_lea.vmem %s5, %s558
      %s560 = smul.u32 8, %s25
      %p561 = scmp.lt.s32.totalorder %s24, 1
      %s562 = scalar_select %p561, %s24, 1
      %p563 = scmp.lt.s32.totalorder %s25, 0
      %s564 = scalar_select %p563, %s25, 0
      %p565 = scmp.lt.s32.totalorder %s26, 0
      %s566 = scalar_select %p565, %s26, 0
      %s567 = sadd.s32 %s566, %s564
      %s568 = smul.addr %s562, 4
      %s569 = sadd.s32 %s567, %s568
      %s570 = smul.addr %s569, 8
      %s571 = scalar_lea.vmem %s6, %s570
      %p572 = scmp.lt.s32.totalorder %s24, 1
      %s573 = scalar_select %p572, %s24, 1
      %p574 = scmp.lt.s32.totalorder %s25, 0
      %s575 = scalar_select %p574, %s25, 0
      %p576 = scmp.lt.s32.totalorder %s26, 0
      %s577 = scalar_select %p576, %s26, 0
      %s578 = sadd.s32 %s577, %s575
      %s579 = smul.addr %s573, 4
      %s580 = sadd.s32 %s578, %s579
      %s581 = smul.addr %s580, 8
      %s582 = scalar_lea.vmem %s7, %s581
      %p583 = scmp.lt.s32.totalorder %s24, 1
      %s584 = scalar_select %p583, %s24, 1
      %p585 = scmp.lt.s32.totalorder %s25, 0
      %s586 = scalar_select %p585, %s25, 0
      %s587 = sadd.s32 %s586, %s584
      %s588 = smul.addr %s587, 4
      %s589 = scalar_lea.vmem %s8, %s588
      %p591 = scmp.eq.s32.totalorder %s26, 0
      // Predicated region
      $region53: #{transformer_layer_pallas.6} parent=51 // pred_check
        %p592 = pneg %p591
      $region54: #{transformer_layer_pallas.6} parent=51 // pred_check_branch
        %594 = sbr.rel (%p592) target = $region56
      $region55: #{transformer_layer_pallas.6} parent=51 // pred_region
        %vm595 = vcmask 7168
        %596 = vst.msk [vmem:[#allocation2] sm:$0xff] %vm595, -inf
        %597 = vst.msk [vmem:[#allocation2 + $0x8] sm:$0xff] %vm595, -inf
        %598 = vst.msk [vmem:[#allocation2 + $0x10] sm:$0xff] %vm595, -inf
        %599 = vst.msk [vmem:[#allocation2 + $0x18] sm:$0xff] %vm595, -inf
        %600 = vst.msk [vmem:[#allocation3] sm:$0xff] %vm595, 0.0
        %601 = vst.msk [vmem:[#allocation3 + $0x8] sm:$0xff] %vm595, 0.0
        %602 = vst.msk [vmem:[#allocation3 + $0x10] sm:$0xff] %vm595, 0.0
        %603 = vst.msk [vmem:[#allocation3 + $0x18] sm:$0xff] %vm595, 0.0
        %vm604 = vcmask 261120
        %605 = vst.msk [vmem:[#allocation4] sm:$0xff] %vm604, 0.0
      $region56: #{transformer_layer_pallas.6} parent=51 // pred_fallthru
        _
      %v606 = vld [vmem:[%s516] sm:$0xf]
      %v607 = vld [vmem:[%s523] sm:$0xf]
      %v608 = vld [vmem:[%s530] sm:$0xf]
      %v609 = vld [vmem:[%s537] sm:$0xf]
      %v610 = vld [vmem:[%s546] sm:$0x3]
      %v611 = vld [vmem:[%s546 + $0x2] sm:$0x3]
      %v612 = vld [vmem:[%s546 + $0x4] sm:$0x3]
      %v613 = vld [vmem:[%s546 + $0x6] sm:$0x3]
      %v614 = vld [vmem:[%s546 + $0x8] sm:$0x3]
      %v615 = vld [vmem:[%s546 + $0xa] sm:$0x3]
      %v616 = vld [vmem:[%s546 + $0xc] sm:$0x3]
      %v617 = vld [vmem:[%s546 + $0xe] sm:$0x3]
      %v618 = vld [vmem:[%s559] sm:$0xff]
      %v619 = vld [vmem:[%s559 + $0x8] sm:$0xff]
      %v620 = vld [vmem:[%s559 + $0x10] sm:$0xff]
      %v621 = vld [vmem:[%s559 + $0x18] sm:$0xff]
      %v622 = vld [vmem:[%s559 + $0x20] sm:$0xff]
      %v623 = vld [vmem:[%s559 + $0x28] sm:$0xff]
      %v624 = vld [vmem:[%s559 + $0x30] sm:$0xff]
      %v625 = vld [vmem:[%s559 + $0x38] sm:$0xff]
      %v626 = vpack.c.bf16 %v618, %v618
      %v627 = vpack.c.bf16 %v619, %v619
      %v628 = vpack.c.bf16 %v620, %v620
      %v629 = vpack.c.bf16 %v621, %v621
      %v630 = vpack.c.bf16 %v622, %v622
      %v631 = vpack.c.bf16 %v623, %v623
      %v632 = vpack.c.bf16 %v624, %v624
      %v633 = vpack.c.bf16 %v625, %v625
      %vm634 = vcmask 261120
      %v636 = vsel %vm634, %v626, 0
      %v639 = vsel %vm634, %v610, 0
      %641 = vmatprep.subr.bf16.mxu0 0
      %642 = vmatpush1.bf16.xpose.msra.mxu0 0
      %643 = vmatprep.subr.bf16.mxu0 0
      %644 = vmatpush1.bf16.xpose.msra.mxu0 0
      %645 = vmatprep.subr.bf16.mxu0 0
      %646 = vmatpush1.bf16.xpose.msra.mxu0 0
      %647 = vmatprep.subr.bf16.mxu0 0
      %648 = vmatpush1.bf16.xpose.msra.mxu0 0
      %649 = vmatprep.subr.bf16.mxu0 0
      %650 = vmatpush1.bf16.xpose.msra.mxu0 0
      %651 = vmatprep.subr.bf16.mxu0 0
      %652 = vmatpush1.bf16.xpose.msra.mxu0 0
      %653 = vmatprep.subr.bf16.mxu0 0
      %654 = vmatpush1.bf16.xpose.msra.mxu0 0
      %655 = vmatprep.subr.bf16.mxu0 0
      %656 = vmatpush1.bf16.xpose.msra.mxu0 %v639
      %657 = vmatprep.subr.bf16.mxu0 0
      %658 = vmatpush2.bf16.xpose.msra.mxu0 0
      %659 = vmatprep.subr.bf16.mxu0 0
      %660 = vmatpush2.bf16.xpose.msra.mxu0 0
      %661 = vmatprep.subr.bf16.mxu0 0
      %662 = vmatpush2.bf16.xpose.msra.mxu0 0
      %663 = vmatprep.subr.bf16.mxu0 0
      %664 = vmatpush2.bf16.xpose.msra.mxu0 0
      %665 = vmatprep.subr.bf16.mxu0 0
      %666 = vmatpush2.bf16.xpose.msra.mxu0 0
      %667 = vmatprep.subr.bf16.mxu0 0
      %668 = vmatpush2.bf16.xpose.msra.mxu0 0
      %669 = vmatprep.subr.bf16.mxu0 0
      %670 = vmatpush2.bf16.xpose.msra.mxu0 0
      %671 = vmatprep.subr.bf16.mxu0 0
      %672 = vmatpush2.bf16.xpose.msra.mxu0 0
      %673 = vmatprep.mubr.bf16.mxu0 0
      %674 = vmatmul.mubr.bf16.gmra.mxu0 %v636
      %v675 = vpop.f32.mrf.mxu0
      %v676 = vadd.f32 0.0, %v675
      %v677 = vpop.f32.mrf.mxu0
      %v678 = vpop.f32.mrf.mxu0
      %v679 = vpop.f32.mrf.mxu0
      %680 = vdwg.mxu0
      %v682 = vsel %vm634, %v627, 0
      %v685 = vsel %vm634, %v611, 0
      %687 = vmatprep.subr.bf16.mxu0 0
      %688 = vmatpush1.bf16.xpose.msra.mxu0 0
      %689 = vmatprep.subr.bf16.mxu0 0
      %690 = vmatpush1.bf16.xpose.msra.mxu0 0
      %691 = vmatprep.subr.bf16.mxu0 0
      %692 = vmatpush1.bf16.xpose.msra.mxu0 0
      %693 = vmatprep.subr.bf16.mxu0 0
      %694 = vmatpush1.bf16.xpose.msra.mxu0 0
      %695 = vmatprep.subr.bf16.mxu0 0
      %696 = vmatpush1.bf16.xpose.msra.mxu0 0
      %697 = vmatprep.subr.bf16.mxu0 0
      %698 = vmatpush1.bf16.xpose.msra.mxu0 0
      %699 = vmatprep.subr.bf16.mxu0 0
      %700 = vmatpush1.bf16.xpose.msra.mxu0 0
      %701 = vmatprep.subr.bf16.mxu0 0
      %702 = vmatpush1.bf16.xpose.msra.mxu0 %v685
      %703 = vmatprep.subr.bf16.mxu0 0
      %704 = vmatpush2.bf16.xpose.msra.mxu0 0
      %705 = vmatprep.subr.bf16.mxu0 0
      %706 = vmatpush2.bf16.xpose.msra.mxu0 0
      %707 = vmatprep.subr.bf16.mxu0 0
      %708 = vmatpush2.bf16.xpose.msra.mxu0 0
      %709 = vmatprep.subr.bf16.mxu0 0
      %710 = vmatpush2.bf16.xpose.msra.mxu0 0
      %711 = vmatprep.subr.bf16.mxu0 0
      %712 = vmatpush2.bf16.xpose.msra.mxu0 0
      %713 = vmatprep.subr.bf16.mxu0 0
      %714 = vmatpush2.bf16.xpose.msra.mxu0 0
      %715 = vmatprep.subr.bf16.mxu0 0
      %716 = vmatpush2.bf16.xpose.msra.mxu0 0
      %717 = vmatprep.subr.bf16.mxu0 0
      %718 = vmatpush2.bf16.xpose.msra.mxu0 0
      %719 = vmatprep.mubr.bf16.mxu0 0
      %720 = vmatmul.mubr.bf16.gmra.mxu0 %v682
      %v721 = vpop.f32.mrf.mxu0
      %v722 = vadd.f32 0.0, %v721
      %v723 = vpop.f32.mrf.mxu0
      %v724 = vpop.f32.mrf.mxu0
      %v725 = vpop.f32.mrf.mxu0
      %726 = vdwg.mxu0
      %v728 = vsel %vm634, %v628, 0
      %v731 = vsel %vm634, %v612, 0
      %733 = vmatprep.subr.bf16.mxu0 0
      %734 = vmatpush1.bf16.xpose.msra.mxu0 0
      %735 = vmatprep.subr.bf16.mxu0 0
      %736 = vmatpush1.bf16.xpose.msra.mxu0 0
      %737 = vmatprep.subr.bf16.mxu0 0
      %738 = vmatpush1.bf16.xpose.msra.mxu0 0
      %739 = vmatprep.subr.bf16.mxu0 0
      %740 = vmatpush1.bf16.xpose.msra.mxu0 0
      %741 = vmatprep.subr.bf16.mxu0 0
      %742 = vmatpush1.bf16.xpose.msra.mxu0 0
      %743 = vmatprep.subr.bf16.mxu0 0
      %744 = vmatpush1.bf16.xpose.msra.mxu0 0
      %745 = vmatprep.subr.bf16.mxu0 0
      %746 = vmatpush1.bf16.xpose.msra.mxu0 0
      %747 = vmatprep.subr.bf16.mxu0 0
      %748 = vmatpush1.bf16.xpose.msra.mxu0 %v731
      %749 = vmatprep.subr.bf16.mxu0 0
      %750 = vmatpush2.bf16.xpose.msra.mxu0 0
      %751 = vmatprep.subr.bf16.mxu0 0
      %752 = vmatpush2.bf16.xpose.msra.mxu0 0
      %753 = vmatprep.subr.bf16.mxu0 0
      %754 = vmatpush2.bf16.xpose.msra.mxu0 0
      %755 = vmatprep.subr.bf16.mxu0 0
      %756 = vmatpush2.bf16.xpose.msra.mxu0 0
      %757 = vmatprep.subr.bf16.mxu0 0
      %758 = vmatpush2.bf16.xpose.msra.mxu0 0
      %759 = vmatprep.subr.bf16.mxu0 0
      %760 = vmatpush2.bf16.xpose.msra.mxu0 0
      %761 = vmatprep.subr.bf16.mxu0 0
      %762 = vmatpush2.bf16.xpose.msra.mxu0 0
      %763 = vmatprep.subr.bf16.mxu0 0
      %764 = vmatpush2.bf16.xpose.msra.mxu0 0
      %765 = vmatprep.mubr.bf16.mxu0 0
      %766 = vmatmul.mubr.bf16.gmra.mxu0 %v728
      %v767 = vpop.f32.mrf.mxu0
      %v768 = vadd.f32 0.0, %v767
      %v769 = vpop.f32.mrf.mxu0
      %v770 = vpop.f32.mrf.mxu0
      %v771 = vpop.f32.mrf.mxu0
      %772 = vdwg.mxu0
      %v774 = vsel %vm634, %v629, 0
      %v777 = vsel %vm634, %v613, 0
      %779 = vmatprep.subr.bf16.mxu0 0
      %780 = vmatpush1.bf16.xpose.msra.mxu0 0
      %781 = vmatprep.subr.bf16.mxu0 0
      %782 = vmatpush1.bf16.xpose.msra.mxu0 0
      %783 = vmatprep.subr.bf16.mxu0 0
      %784 = vmatpush1.bf16.xpose.msra.mxu0 0
      %785 = vmatprep.subr.bf16.mxu0 0
      %786 = vmatpush1.bf16.xpose.msra.mxu0 0
      %787 = vmatprep.subr.bf16.mxu0 0
      %788 = vmatpush1.bf16.xpose.msra.mxu0 0
      %789 = vmatprep.subr.bf16.mxu0 0
      %790 = vmatpush1.bf16.xpose.msra.mxu0 0
      %791 = vmatprep.subr.bf16.mxu0 0
      %792 = vmatpush1.bf16.xpose.msra.mxu0 0
      %793 = vmatprep.subr.bf16.mxu0 0
      %794 = vmatpush1.bf16.xpose.msra.mxu0 %v777
      %795 = vmatprep.subr.bf16.mxu0 0
      %796 = vmatpush2.bf16.xpose.msra.mxu0 0
      %797 = vmatprep.subr.bf16.mxu0 0
      %798 = vmatpush2.bf16.xpose.msra.mxu0 0
      %799 = vmatprep.subr.bf16.mxu0 0
      %800 = vmatpush2.bf16.xpose.msra.mxu0 0
      %801 = vmatprep.subr.bf16.mxu0 0
      %802 = vmatpush2.bf16.xpose.msra.mxu0 0
      %803 = vmatprep.subr.bf16.mxu0 0
      %804 = vmatpush2.bf16.xpose.msra.mxu0 0
      %805 = vmatprep.subr.bf16.mxu0 0
      %806 = vmatpush2.bf16.xpose.msra.mxu0 0
      %807 = vmatprep.subr.bf16.mxu0 0
      %808 = vmatpush2.bf16.xpose.msra.mxu0 0
      %809 = vmatprep.subr.bf16.mxu0 0
      %810 = vmatpush2.bf16.xpose.msra.mxu0 0
      %811 = vmatprep.mubr.bf16.mxu0 0
      %812 = vmatmul.mubr.bf16.gmra.mxu0 %v774
      %v813 = vpop.f32.mrf.mxu0
      %v814 = vadd.f32 0.0, %v813
      %v815 = vpop.f32.mrf.mxu0
      %v816 = vpop.f32.mrf.mxu0
      %v817 = vpop.f32.mrf.mxu0
      %818 = vdwg.mxu0
      %v820 = vsel %vm634, %v630, 0
      %v823 = vsel %vm634, %v614, 0
      %825 = vmatprep.subr.bf16.mxu0 0
      %826 = vmatpush1.bf16.xpose.msra.mxu0 0
      %827 = vmatprep.subr.bf16.mxu0 0
      %828 = vmatpush1.bf16.xpose.msra.mxu0 0
      %829 = vmatprep.subr.bf16.mxu0 0
      %830 = vmatpush1.bf16.xpose.msra.mxu0 0
      %831 = vmatprep.subr.bf16.mxu0 0
      %832 = vmatpush1.bf16.xpose.msra.mxu0 0
      %833 = vmatprep.subr.bf16.mxu0 0
      %834 = vmatpush1.bf16.xpose.msra.mxu0 0
      %835 = vmatprep.subr.bf16.mxu0 0
      %836 = vmatpush1.bf16.xpose.msra.mxu0 0
      %837 = vmatprep.subr.bf16.mxu0 0
      %838 = vmatpush1.bf16.xpose.msra.mxu0 0
      %839 = vmatprep.subr.bf16.mxu0 0
      %840 = vmatpush1.bf16.xpose.msra.mxu0 %v823
      %841 = vmatprep.subr.bf16.mxu0 0
      %842 = vmatpush2.bf16.xpose.msra.mxu0 0
      %843 = vmatprep.subr.bf16.mxu0 0
      %844 = vmatpush2.bf16.xpose.msra.mxu0 0
      %845 = vmatprep.subr.bf16.mxu0 0
      %846 = vmatpush2.bf16.xpose.msra.mxu0 0
      %847 = vmatprep.subr.bf16.mxu0 0
      %848 = vmatpush2.bf16.xpose.msra.mxu0 0
      %849 = vmatprep.subr.bf16.mxu0 0
      %850 = vmatpush2.bf16.xpose.msra.mxu0 0
      %851 = vmatprep.subr.bf16.mxu0 0
      %852 = vmatpush2.bf16.xpose.msra.mxu0 0
      %853 = vmatprep.subr.bf16.mxu0 0
      %854 = vmatpush2.bf16.xpose.msra.mxu0 0
      %855 = vmatprep.subr.bf16.mxu0 0
      %856 = vmatpush2.bf16.xpose.msra.mxu0 0
      %857 = vmatprep.mubr.bf16.mxu0 0
      %858 = vmatmul.mubr.bf16.gmra.mxu0 %v820
      %v859 = vpop.f32.mrf.mxu0
      %v860 = vadd.f32 0.0, %v859
      %v861 = vpop.f32.mrf.mxu0
      %v862 = vpop.f32.mrf.mxu0
      %v863 = vpop.f32.mrf.mxu0
      %864 = vdwg.mxu0
      %v866 = vsel %vm634, %v631, 0
      %v869 = vsel %vm634, %v615, 0
      %871 = vmatprep.subr.bf16.mxu0 0
      %872 = vmatpush1.bf16.xpose.msra.mxu0 0
      %873 = vmatprep.subr.bf16.mxu0 0
      %874 = vmatpush1.bf16.xpose.msra.mxu0 0
      %875 = vmatprep.subr.bf16.mxu0 0
      %876 = vmatpush1.bf16.xpose.msra.mxu0 0
      %877 = vmatprep.subr.bf16.mxu0 0
      %878 = vmatpush1.bf16.xpose.msra.mxu0 0
      %879 = vmatprep.subr.bf16.mxu0 0
      %880 = vmatpush1.bf16.xpose.msra.mxu0 0
      %881 = vmatprep.subr.bf16.mxu0 0
      %882 = vmatpush1.bf16.xpose.msra.mxu0 0
      %883 = vmatprep.subr.bf16.mxu0 0
      %884 = vmatpush1.bf16.xpose.msra.mxu0 0
      %885 = vmatprep.subr.bf16.mxu0 0
      %886 = vmatpush1.bf16.xpose.msra.mxu0 %v869
      %887 = vmatprep.subr.bf16.mxu0 0
      %888 = vmatpush2.bf16.xpose.msra.mxu0 0
      %889 = vmatprep.subr.bf16.mxu0 0
      %890 = vmatpush2.bf16.xpose.msra.mxu0 0
      %891 = vmatprep.subr.bf16.mxu0 0
      %892 = vmatpush2.bf16.xpose.msra.mxu0 0
      %893 = vmatprep.subr.bf16.mxu0 0
      %894 = vmatpush2.bf16.xpose.msra.mxu0 0
      %895 = vmatprep.subr.bf16.mxu0 0
      %896 = vmatpush2.bf16.xpose.msra.mxu0 0
      %897 = vmatprep.subr.bf16.mxu0 0
      %898 = vmatpush2.bf16.xpose.msra.mxu0 0
      %899 = vmatprep.subr.bf16.mxu0 0
      %900 = vmatpush2.bf16.xpose.msra.mxu0 0
      %901 = vmatprep.subr.bf16.mxu0 0
      %902 = vmatpush2.bf16.xpose.msra.mxu0 0
      %903 = vmatprep.mubr.bf16.mxu0 0
      %904 = vmatmul.mubr.bf16.gmra.mxu0 %v866
      %v905 = vpop.f32.mrf.mxu0
      %v906 = vadd.f32 0.0, %v905
      %v907 = vpop.f32.mrf.mxu0
      %v908 = vpop.f32.mrf.mxu0
      %v909 = vpop.f32.mrf.mxu0
      %910 = vdwg.mxu0
      %v912 = vsel %vm634, %v632, 0
      %v915 = vsel %vm634, %v616, 0
      %917 = vmatprep.subr.bf16.mxu0 0
      %918 = vmatpush1.bf16.xpose.msra.mxu0 0
      %919 = vmatprep.subr.bf16.mxu0 0
      %920 = vmatpush1.bf16.xpose.msra.mxu0 0
      %921 = vmatprep.subr.bf16.mxu0 0
      %922 = vmatpush1.bf16.xpose.msra.mxu0 0
      %923 = vmatprep.subr.bf16.mxu0 0
      %924 = vmatpush1.bf16.xpose.msra.mxu0 0
      %925 = vmatprep.subr.bf16.mxu0 0
      %926 = vmatpush1.bf16.xpose.msra.mxu0 0
      %927 = vmatprep.subr.bf16.mxu0 0
      %928 = vmatpush1.bf16.xpose.msra.mxu0 0
      %929 = vmatprep.subr.bf16.mxu0 0
      %930 = vmatpush1.bf16.xpose.msra.mxu0 0
      %931 = vmatprep.subr.bf16.mxu0 0
      %932 = vmatpush1.bf16.xpose.msra.mxu0 %v915
      %933 = vmatprep.subr.bf16.mxu0 0
      %934 = vmatpush2.bf16.xpose.msra.mxu0 0
      %935 = vmatprep.subr.bf16.mxu0 0
      %936 = vmatpush2.bf16.xpose.msra.mxu0 0
      %937 = vmatprep.subr.bf16.mxu0 0
      %938 = vmatpush2.bf16.xpose.msra.mxu0 0
      %939 = vmatprep.subr.bf16.mxu0 0
      %940 = vmatpush2.bf16.xpose.msra.mxu0 0
      %941 = vmatprep.subr.bf16.mxu0 0
      %942 = vmatpush2.bf16.xpose.msra.mxu0 0
      %943 = vmatprep.subr.bf16.mxu0 0
      %944 = vmatpush2.bf16.xpose.msra.mxu0 0
      %945 = vmatprep.subr.bf16.mxu0 0
      %946 = vmatpush2.bf16.xpose.msra.mxu0 0
      %947 = vmatprep.subr.bf16.mxu0 0
      %948 = vmatpush2.bf16.xpose.msra.mxu0 0
      %949 = vmatprep.mubr.bf16.mxu0 0
      %950 = vmatmul.mubr.bf16.gmra.mxu0 %v912
      %v951 = vpop.f32.mrf.mxu0
      %v952 = vadd.f32 0.0, %v951
      %v953 = vpop.f32.mrf.mxu0
      %v954 = vpop.f32.mrf.mxu0
      %v955 = vpop.f32.mrf.mxu0
      %956 = vdwg.mxu0
      %v958 = vsel %vm634, %v633, 0
      %v961 = vsel %vm634, %v617, 0
      %963 = vmatprep.subr.bf16.mxu0 0
      %964 = vmatpush1.bf16.xpose.msra.mxu0 0
      %965 = vmatprep.subr.bf16.mxu0 0
      %966 = vmatpush1.bf16.xpose.msra.mxu0 0
      %967 = vmatprep.subr.bf16.mxu0 0
      %968 = vmatpush1.bf16.xpose.msra.mxu0 0
      %969 = vmatprep.subr.bf16.mxu0 0
      %970 = vmatpush1.bf16.xpose.msra.mxu0 0
      %971 = vmatprep.subr.bf16.mxu0 0
      %972 = vmatpush1.bf16.xpose.msra.mxu0 0
      %973 = vmatprep.subr.bf16.mxu0 0
      %974 = vmatpush1.bf16.xpose.msra.mxu0 0
      %975 = vmatprep.subr.bf16.mxu0 0
      %976 = vmatpush1.bf16.xpose.msra.mxu0 0
      %977 = vmatprep.subr.bf16.mxu0 0
      %978 = vmatpush1.bf16.xpose.msra.mxu0 %v961
      %979 = vmatprep.subr.bf16.mxu0 0
      %980 = vmatpush2.bf16.xpose.msra.mxu0 0
      %981 = vmatprep.subr.bf16.mxu0 0
      %982 = vmatpush2.bf16.xpose.msra.mxu0 0
      %983 = vmatprep.subr.bf16.mxu0 0
      %984 = vmatpush2.bf16.xpose.msra.mxu0 0
      %985 = vmatprep.subr.bf16.mxu0 0
      %986 = vmatpush2.bf16.xpose.msra.mxu0 0
      %987 = vmatprep.subr.bf16.mxu0 0
      %988 = vmatpush2.bf16.xpose.msra.mxu0 0
      %989 = vmatprep.subr.bf16.mxu0 0
      %990 = vmatpush2.bf16.xpose.msra.mxu0 0
      %991 = vmatprep.subr.bf16.mxu0 0
      %992 = vmatpush2.bf16.xpose.msra.mxu0 0
      %993 = vmatprep.subr.bf16.mxu0 0
      %994 = vmatpush2.bf16.xpose.msra.mxu0 0
      %995 = vmatprep.mubr.bf16.mxu0 0
      %996 = vmatmul.mubr.bf16.gmra.mxu0 %v958
      %v997 = vpop.f32.mrf.mxu0
      %v998 = vadd.f32 0.0, %v997
      %v999 = vpop.f32.mrf.mxu0
      %v1000 = vpop.f32.mrf.mxu0
      %v1001 = vpop.f32.mrf.mxu0
      %1002 = vdwg.mxu0
      %1011 = vset.pattern.permute.xlu0 0
      %1012 = vperm.xlu0 %1011, %v676
      %v1013 = vpop.permute.xlu0 %1012
      %1014 = vset.pattern.permute.xlu0 0
      %1015 = vperm.xlu0 %1014, %v722
      %v1016 = vpop.permute.xlu0 %1015
      %1017 = vset.pattern.permute.xlu0 0
      %1018 = vperm.xlu0 %1017, %v768
      %v1019 = vpop.permute.xlu0 %1018
      %1020 = vset.pattern.permute.xlu0 0
      %1021 = vperm.xlu0 %1020, %v814
      %v1022 = vpop.permute.xlu0 %1021
      %1023 = vset.pattern.permute.xlu0 0
      %1024 = vperm.xlu0 %1023, %v860
      %v1025 = vpop.permute.xlu0 %1024
      %1026 = vset.pattern.permute.xlu0 0
      %1027 = vperm.xlu0 %1026, %v906
      %v1028 = vpop.permute.xlu0 %1027
      %1029 = vset.pattern.permute.xlu0 0
      %1030 = vperm.xlu0 %1029, %v952
      %v1031 = vpop.permute.xlu0 %1030
      %1032 = vset.pattern.permute.xlu0 0
      %1033 = vperm.xlu0 %1032, %v998
      %v1034 = vpop.permute.xlu0 %1033
      %v1035 = vlaneseq
      %v1036 = vand.u32 %v1035, 127
      %v1037 = vlaneseq
      %v1038 = vshrl.u32 %v1037, 7
      %v1039 = vsub.s32 %v1036, %v1038
      %v1040 = vrot.slane %v1013, %v1039
      %v1041 = vlaneseq
      %v1042 = vshrl.u32 %v1041, 7
      %v1043 = vsub.s32 %v1036, %v1042
      %v1044 = vrot.slane %v1016, %v1043
      %v1045 = vlaneseq
      %v1046 = vshrl.u32 %v1045, 7
      %v1047 = vsub.s32 %v1036, %v1046
      %v1048 = vrot.slane %v1019, %v1047
      %v1049 = vlaneseq
      %v1050 = vshrl.u32 %v1049, 7
      %v1051 = vsub.s32 %v1036, %v1050
      %v1052 = vrot.slane %v1022, %v1051
      %v1053 = vlaneseq
      %v1054 = vshrl.u32 %v1053, 7
      %v1055 = vsub.s32 %v1036, %v1054
      %v1056 = vrot.slane %v1025, %v1055
      %v1057 = vlaneseq
      %v1058 = vshrl.u32 %v1057, 7
      %v1059 = vsub.s32 %v1036, %v1058
      %v1060 = vrot.slane %v1028, %v1059
      %v1061 = vlaneseq
      %v1062 = vshrl.u32 %v1061, 7
      %v1063 = vsub.s32 %v1036, %v1062
      %v1064 = vrot.slane %v1031, %v1063
      %v1065 = vlaneseq
      %v1066 = vshrl.u32 %v1065, 7
      %v1067 = vsub.s32 %v1036, %v1066
      %v1068 = vrot.slane %v1034, %v1067
      %vm1069 = vcmask 1041409
      %v1070 = vsel %vm1069, %v1044, %v1040
      %vm1071 = vcmask 1042434
      %v1072 = vsel %vm1071, %v1048, %v1070
      %vm1073 = vcmask 1043459
      %v1074 = vsel %vm1073, %v1052, %v1072
      %vm1075 = vcmask 1044484
      %v1076 = vsel %vm1075, %v1056, %v1074
      %vm1077 = vcmask 1045509
      %v1078 = vsel %vm1077, %v1060, %v1076
      %vm1079 = vcmask 1046534
      %v1080 = vsel %vm1079, %v1064, %v1078
      %vm1081 = vcmask 1047559
      %v1082 = vsel %vm1081, %v1068, %v1080
      %vm1084 = vcmask 64512
      %v1086 = vsel %vm1084, %v606, 0
      %v1089 = vsel %vm1084, %v607, 0
      %1091 = vmatprep.subr.bf16.mxu0 0
      %1092 = vmatpush1.bf16.xpose.msra.mxu0 0
      %1093 = vmatprep.subr.bf16.mxu0 0
      %1094 = vmatpush1.bf16.xpose.msra.mxu0 0
      %1095 = vmatprep.subr.bf16.mxu0 0
      %1096 = vmatpush1.bf16.xpose.msra.mxu0 0
      %1097 = vmatprep.subr.bf16.mxu0 0
      %1098 = vmatpush1.bf16.xpose.msra.mxu0 0
      %1099 = vmatprep.subr.bf16.mxu0 0
      %1100 = vmatpush1.bf16.xpose.msra.mxu0 0
      %1101 = vmatprep.subr.bf16.mxu0 0
      %1102 = vmatpush1.bf16.xpose.msra.mxu0 0
      %1103 = vmatprep.subr.bf16.mxu0 0
      %1104 = vmatpush1.bf16.xpose.msra.mxu0 0
      %1105 = vmatprep.subr.bf16.mxu0 0
      %1106 = vmatpush1.bf16.xpose.msra.mxu0 %v1089
      %1107 = vmatprep.subr.bf16.mxu0 0
      %1108 = vmatpush2.bf16.xpose.msra.mxu0 0
      %1109 = vmatprep.subr.bf16.mxu0 0
      %1110 = vmatpush2.bf16.xpose.msra.mxu0 0
      %1111 = vmatprep.subr.bf16.mxu0 0
      %1112 = vmatpush2.bf16.xpose.msra.mxu0 0
      %1113 = vmatprep.subr.bf16.mxu0 0
      %1114 = vmatpush2.bf16.xpose.msra.mxu0 0
      %1115 = vmatprep.subr.bf16.mxu0 0
      %1116 = vmatpush2.bf16.xpose.msra.mxu0 0
      %1117 = vmatprep.subr.bf16.mxu0 0
      %1118 = vmatpush2.bf16.xpose.msra.mxu0 0
      %1119 = vmatprep.subr.bf16.mxu0 0
      %1120 = vmatpush2.bf16.xpose.msra.mxu0 0
      %1121 = vmatprep.subr.bf16.mxu0 0
      %1122 = vmatpush2.bf16.xpose.msra.mxu0 0
      %1123 = vmatprep.mubr.bf16.mxu0 0
      %1124 = vmatmul.mubr.bf16.gmra.mxu0 %v1086
      %v1125 = vpop.f32.mrf.mxu0
      %v1126 = vadd.f32 %v1082, %v1125
      %v1127 = vpop.f32.mrf.mxu0
      %v1128 = vpop.f32.mrf.mxu0
      %v1129 = vpop.f32.mrf.mxu0
      %1130 = vdwg.mxu0
      %v1131 = vmul.f32 %v1126, 0.35355338
      %v1132 = vld [vmem:[%s571] sm:$0xff]
      %vm1133 = vcmp.gt.f32.partialorder %v1132, 0.0
      %v1134 = vsub.f32 %v1131, 1e+30
      %v1135 = vsel %vm1133, %v1131, %v1134
      %v1136 = vld [vmem:[#allocation2] sm:$0xff]
      %v1137 = vsel %vm1084, %v1135, -inf
      %1138 = vmax.xlane.f32.xlu0 %v1137
      %v1139 = vpop.xlane.xlu0 %1138
      %v1140 = vmax.f32 %v1136, %v1139
      %v1141 = vsub.f32 %v1136, %v1140
      %v1142 = vmul.f32 %v1141, 1.442695
      %v1143 = vpow.pop %v1142
      %1145 = vset.pattern.permute.xlu0 0
      %1146 = vperm.xlu0 %1145, %v1140
      %v1147 = vpop.permute.xlu0 %1146
      %v1149 = vsub.f32 %v1135, %v1147
      %v1150 = vmul.f32 %v1149, 1.442695
      %v1151 = vpow.pop %v1150
      %v1152 = vld [vmem:[#allocation3] sm:$0xff]
      %v1153 = vmul.f32 %v1143, %v1152
      %v1154 = vsel %vm1084, %v1151, 0.0
      %1155 = vadd.xlane.f32.xlu0 %v1154
      %v1156 = vpop.xlane.xlu0 %1155
      %v1157 = vadd.f32 %v1153, %v1156
      %vm1158 = vcmask 7168
      %1159 = vst.msk [vmem:[#allocation3] sm:$0xff] %vm1158, %v1157
      %v1160 = vld [vmem:[%s582] sm:$0xff]
      %v1161 = vmul.f32 %v1151, %v1160
      %v1162 = vpack.c.bf16 %v1161, %v1161
      %v1163 = vsub.f32 1.0, %v1160
      %v1164 = vmul.f32 %v1151, %v1163
      %v1165 = vpack.c.bf16 %v1164, %v1164
      %v1167 = vsel %vm1084, %v1165, 0
      %vm1169 = vcmask 1043456
      %v1171 = vsel %vm1169, %v609, 0
      %1173 = vmatprep.subr.bf16.mxu0 0
      %1174 = vmatpush1.bf16.msra.mxu0 0
      %1175 = vmatprep.subr.bf16.mxu0 0
      %1176 = vmatpush1.bf16.msra.mxu0 0
      %1177 = vmatprep.subr.bf16.mxu0 0
      %1178 = vmatpush1.bf16.msra.mxu0 0
      %1179 = vmatprep.subr.bf16.mxu0 0
      %1180 = vmatpush1.bf16.msra.mxu0 0
      %1181 = vmatprep.subr.bf16.mxu0 0
      %1182 = vmatpush1.bf16.msra.mxu0 0
      %1183 = vmatprep.subr.bf16.mxu0 0
      %1184 = vmatpush1.bf16.msra.mxu0 0
      %1185 = vmatprep.subr.bf16.mxu0 0
      %1186 = vmatpush1.bf16.msra.mxu0 0
      %1187 = vmatprep.subr.bf16.mxu0 0
      %1188 = vmatpush1.bf16.msra.mxu0 %v1171
      %1189 = vmatprep.subr.bf16.mxu0 0
      %1190 = vmatpush2.bf16.msra.mxu0 0
      %1191 = vmatprep.subr.bf16.mxu0 0
      %1192 = vmatpush2.bf16.msra.mxu0 0
      %1193 = vmatprep.subr.bf16.mxu0 0
      %1194 = vmatpush2.bf16.msra.mxu0 0
      %1195 = vmatprep.subr.bf16.mxu0 0
      %1196 = vmatpush2.bf16.msra.mxu0 0
      %1197 = vmatprep.subr.bf16.mxu0 0
      %1198 = vmatpush2.bf16.msra.mxu0 0
      %1199 = vmatprep.subr.bf16.mxu0 0
      %1200 = vmatpush2.bf16.msra.mxu0 0
      %1201 = vmatprep.subr.bf16.mxu0 0
      %1202 = vmatpush2.bf16.msra.mxu0 0
      %1203 = vmatprep.subr.bf16.mxu0 0
      %1204 = vmatpush2.bf16.msra.mxu0 0
      %1205 = vmatprep.mubr.bf16.mxu0 0
      %1206 = vmatmul.mubr.bf16.gmra.mxu0 %v1167
      %v1207 = vpop.f32.mrf.mxu0
      %v1208 = vadd.f32 0.0, %v1207
      %v1209 = vpop.f32.mrf.mxu0
      %v1210 = vpop.f32.mrf.mxu0
      %v1211 = vpop.f32.mrf.mxu0
      %1212 = vdwg.mxu0
      %v1214 = vsel %vm1084, %v1162, 0
      %v1217 = vsel %vm1169, %v608, 0
      %1219 = vmatprep.subr.bf16.mxu0 0
      %1220 = vmatpush1.bf16.msra.mxu0 0
      %1221 = vmatprep.subr.bf16.mxu0 0
      %1222 = vmatpush1.bf16.msra.mxu0 0
      %1223 = vmatprep.subr.bf16.mxu0 0
      %1224 = vmatpush1.bf16.msra.mxu0 0
      %1225 = vmatprep.subr.bf16.mxu0 0
      %1226 = vmatpush1.bf16.msra.mxu0 0
      %1227 = vmatprep.subr.bf16.mxu0 0
      %1228 = vmatpush1.bf16.msra.mxu0 0
      %1229 = vmatprep.subr.bf16.mxu0 0
      %1230 = vmatpush1.bf16.msra.mxu0 0
      %1231 = vmatprep.subr.bf16.mxu0 0
      %1232 = vmatpush1.bf16.msra.mxu0 0
      %1233 = vmatprep.subr.bf16.mxu0 0
      %1234 = vmatpush1.bf16.msra.mxu0 %v1217
      %1235 = vmatprep.subr.bf16.mxu0 0
      %1236 = vmatpush2.bf16.msra.mxu0 0
      %1237 = vmatprep.subr.bf16.mxu0 0
      %1238 = vmatpush2.bf16.msra.mxu0 0
      %1239 = vmatprep.subr.bf16.mxu0 0
      %1240 = vmatpush2.bf16.msra.mxu0 0
      %1241 = vmatprep.subr.bf16.mxu0 0
      %1242 = vmatpush2.bf16.msra.mxu0 0
      %1243 = vmatprep.subr.bf16.mxu0 0
      %1244 = vmatpush2.bf16.msra.mxu0 0
      %1245 = vmatprep.subr.bf16.mxu0 0
      %1246 = vmatpush2.bf16.msra.mxu0 0
      %1247 = vmatprep.subr.bf16.mxu0 0
      %1248 = vmatpush2.bf16.msra.mxu0 0
      %1249 = vmatprep.subr.bf16.mxu0 0
      %1250 = vmatpush2.bf16.msra.mxu0 0
      %1251 = vmatprep.mubr.bf16.mxu0 0
      %1252 = vmatmul.mubr.bf16.gmra.mxu0 %v1214
      %v1253 = vpop.f32.mrf.mxu0
      %v1254 = vadd.f32 %v1208, %v1253
      %v1255 = vpop.f32.mrf.mxu0
      %v1256 = vpop.f32.mrf.mxu0
      %v1257 = vpop.f32.mrf.mxu0
      %1258 = vdwg.mxu0
      %v1259 = vld [vmem:[#allocation4] sm:$0xff]
      %1261 = vset.pattern.permute.xlu0 0
      %1262 = vperm.xlu0 %1261, %v1143
      %v1263 = vpop.permute.xlu0 %1262
      %v1265 = vmul.f32 %v1263, %v1259
      %v1266 = vadd.f32 %v1265, %v1254
      %1267 = vst.msk [vmem:[#allocation4] sm:$0xff] %vm1084, %v1266
      %1268 = vst.msk [vmem:[#allocation2] sm:$0xff] %vm1158, %v1140
      %v1270 = vunpack.c.l.b16 %v606
      %v1271 = vpack.c.b16 %v1270, %v1270
      %1272 = vrot.lane.b32.xlu0 %v1271, 120
      %v1273 = vpop.permute.xlu0 %1272
      %v1275 = vunpack.c.l.b16 %v607
      %v1276 = vpack.c.b16 %v1275, %v1275
      %1277 = vrot.lane.b32.xlu0 %v1276, 120
      %v1278 = vpop.permute.xlu0 %1277
      %1279 = vset.pattern.permute.xlu0 1
      %1280 = vperm.xlu0 %1279, %v676
      %v1281 = vpop.permute.xlu0 %1280
      %1282 = vset.pattern.permute.xlu0 1
      %1283 = vperm.xlu0 %1282, %v722
      %v1284 = vpop.permute.xlu0 %1283
      %1285 = vset.pattern.permute.xlu0 1
      %1286 = vperm.xlu0 %1285, %v768
      %v1287 = vpop.permute.xlu0 %1286
      %1288 = vset.pattern.permute.xlu0 1
      %1289 = vperm.xlu0 %1288, %v814
      %v1290 = vpop.permute.xlu0 %1289
      %1291 = vset.pattern.permute.xlu0 1
      %1292 = vperm.xlu0 %1291, %v860
      %v1293 = vpop.permute.xlu0 %1292
      %1294 = vset.pattern.permute.xlu0 1
      %1295 = vperm.xlu0 %1294, %v906
      %v1296 = vpop.permute.xlu0 %1295
      %1297 = vset.pattern.permute.xlu0 1
      %1298 = vperm.xlu0 %1297, %v952
      %v1299 = vpop.permute.xlu0 %1298
      %1300 = vset.pattern.permute.xlu0 1
      %1301 = vperm.xlu0 %1300, %v998
      %v1302 = vpop.permute.xlu0 %1301
      %v1303 = vlaneseq
      %v1304 = vshrl.u32 %v1303, 7
      %v1305 = vsub.s32 %v1036, %v1304
      %v1306 = vrot.slane %v1281, %v1305
      %v1307 = vlaneseq
      %v1308 = vshrl.u32 %v1307, 7
      %v1309 = vsub.s32 %v1036, %v1308
      %v1310 = vrot.slane %v1284, %v1309
      %v1311 = vlaneseq
      %v1312 = vshrl.u32 %v1311, 7
      %v1313 = vsub.s32 %v1036, %v1312
      %v1314 = vrot.slane %v1287, %v1313
      %v1315 = vlaneseq
      %v1316 = vshrl.u32 %v1315, 7
      %v1317 = vsub.s32 %v1036, %v1316
      %v1318 = vrot.slane %v1290, %v1317
      %v1319 = vlaneseq
      %v1320 = vshrl.u32 %v1319, 7
      %v1321 = vsub.s32 %v1036, %v1320
      %v1322 = vrot.slane %v1293, %v1321
      %v1323 = vlaneseq
      %v1324 = vshrl.u32 %v1323, 7
      %v1325 = vsub.s32 %v1036, %v1324
      %v1326 = vrot.slane %v1296, %v1325
      %v1327 = vlaneseq
      %v1328 = vshrl.u32 %v1327, 7
      %v1329 = vsub.s32 %v1036, %v1328
      %v1330 = vrot.slane %v1299, %v1329
      %v1331 = vlaneseq
      %v1332 = vshrl.u32 %v1331, 7
      %v1333 = vsub.s32 %v1036, %v1332
      %v1334 = vrot.slane %v1302, %v1333
      %v1335 = vsel %vm1069, %v1310, %v1306
      %v1336 = vsel %vm1071, %v1314, %v1335
      %v1337 = vsel %vm1073, %v1318, %v1336
      %v1338 = vsel %vm1075, %v1322, %v1337
      %v1339 = vsel %vm1077, %v1326, %v1338
      %v1340 = vsel %vm1079, %v1330, %v1339
      %v1341 = vsel %vm1081, %v1334, %v1340
      %v1344 = vsel %vm1084, %v1273, 0
      %v1347 = vsel %vm1084, %v1278, 0
      %1349 = vmatprep.subr.bf16.mxu0 0
      %1350 = vmatpush1.bf16.xpose.msra.mxu0 0
      %1351 = vmatprep.subr.bf16.mxu0 0
      %1352 = vmatpush1.bf16.xpose.msra.mxu0 0
      %1353 = vmatprep.subr.bf16.mxu0 0
      %1354 = vmatpush1.bf16.xpose.msra.mxu0 0
      %1355 = vmatprep.subr.bf16.mxu0 0
      %1356 = vmatpush1.bf16.xpose.msra.mxu0 0
      %1357 = vmatprep.subr.bf16.mxu0 0
      %1358 = vmatpush1.bf16.xpose.msra.mxu0 0
      %1359 = vmatprep.subr.bf16.mxu0 0
      %1360 = vmatpush1.bf16.xpose.msra.mxu0 0
      %1361 = vmatprep.subr.bf16.mxu0 0
      %1362 = vmatpush1.bf16.xpose.msra.mxu0 0
      %1363 = vmatprep.subr.bf16.mxu0 0
      %1364 = vmatpush1.bf16.xpose.msra.mxu0 %v1347
      %1365 = vmatprep.subr.bf16.mxu0 0
      %1366 = vmatpush2.bf16.xpose.msra.mxu0 0
      %1367 = vmatprep.subr.bf16.mxu0 0
      %1368 = vmatpush2.bf16.xpose.msra.mxu0 0
      %1369 = vmatprep.subr.bf16.mxu0 0
      %1370 = vmatpush2.bf16.xpose.msra.mxu0 0
      %1371 = vmatprep.subr.bf16.mxu0 0
      %1372 = vmatpush2.bf16.xpose.msra.mxu0 0
      %1373 = vmatprep.subr.bf16.mxu0 0
      %1374 = vmatpush2.bf16.xpose.msra.mxu0 0
      %1375 = vmatprep.subr.bf16.mxu0 0
      %1376 = vmatpush2.bf16.xpose.msra.mxu0 0
      %1377 = vmatprep.subr.bf16.mxu0 0
      %1378 = vmatpush2.bf16.xpose.msra.mxu0 0
      %1379 = vmatprep.subr.bf16.mxu0 0
      %1380 = vmatpush2.bf16.xpose.msra.mxu0 0
      %1381 = vmatprep.mubr.bf16.mxu0 0
      %1382 = vmatmul.mubr.bf16.gmra.mxu0 %v1344
      %v1383 = vpop.f32.mrf.mxu0
      %v1384 = vadd.f32 %v1341, %v1383
      %v1385 = vpop.f32.mrf.mxu0
      %v1386 = vpop.f32.mrf.mxu0
      %v1387 = vpop.f32.mrf.mxu0
      %1388 = vdwg.mxu0
      %v1389 = vmul.f32 %v1384, 0.35355338
      %s1390 = scalar_lea.vmem %s571, 8
      %v1391 = vld [vmem:[%s1390] sm:$0xff]
      %vm1392 = vcmp.gt.f32.partialorder %v1391, 0.0
      %v1393 = vsub.f32 %v1389, 1e+30
      %v1394 = vsel %vm1392, %v1389, %v1393
      %s1395 = scalar_lea.vmem [#allocation2], 8
      %v1396 = vld [vmem:[%s1395] sm:$0xff]
      %v1397 = vsel %vm1084, %v1394, -inf
      %1398 = vmax.xlane.f32.xlu0 %v1397
      %v1399 = vpop.xlane.xlu0 %1398
      %v1400 = vmax.f32 %v1396, %v1399
      %v1401 = vsub.f32 %v1396, %v1400
      %v1402 = vmul.f32 %v1401, 1.442695
      %v1403 = vpow.pop %v1402
      %1405 = vset.pattern.permute.xlu0 0
      %1406 = vperm.xlu0 %1405, %v1400
      %v1407 = vpop.permute.xlu0 %1406
      %v1409 = vsub.f32 %v1394, %v1407
      %v1410 = vmul.f32 %v1409, 1.442695
      %v1411 = vpow.pop %v1410
      %s1412 = scalar_lea.vmem [#allocation3], 8
      %v1413 = vld [vmem:[%s1412] sm:$0xff]
      %v1414 = vmul.f32 %v1403, %v1413
      %v1415 = vsel %vm1084, %v1411, 0.0
      %1416 = vadd.xlane.f32.xlu0 %v1415
      %v1417 = vpop.xlane.xlu0 %1416
      %v1418 = vadd.f32 %v1414, %v1417
      %1419 = vst.msk [vmem:[%s1412] sm:$0xff] %vm1158, %v1418
      %s1420 = scalar_lea.vmem %s582, 8
      %v1421 = vld [vmem:[%s1420] sm:$0xff]
      %v1422 = vmul.f32 %v1411, %v1421
      %v1423 = vpack.c.bf16 %v1422, %v1422
      %v1424 = vsub.f32 1.0, %v1421
      %v1425 = vmul.f32 %v1411, %v1424
      %v1426 = vpack.c.bf16 %v1425, %v1425
      %v1428 = vunpack.c.l.b16 %v609
      %v1429 = vpack.c.b16 %v1428, %v1428
      %1430 = vrot.lane.b32.xlu0 %v1429, 120
      %v1431 = vpop.permute.xlu0 %1430
      %v1433 = vsel %vm1084, %v1426, 0
      %v1436 = vsel %vm1169, %v1431, 0
      %1438 = vmatprep.subr.bf16.mxu0 0
      %1439 = vmatpush1.bf16.msra.mxu0 0
      %1440 = vmatprep.subr.bf16.mxu0 0
      %1441 = vmatpush1.bf16.msra.mxu0 0
      %1442 = vmatprep.subr.bf16.mxu0 0
      %1443 = vmatpush1.bf16.msra.mxu0 0
      %1444 = vmatprep.subr.bf16.mxu0 0
      %1445 = vmatpush1.bf16.msra.mxu0 0
      %1446 = vmatprep.subr.bf16.mxu0 0
      %1447 = vmatpush1.bf16.msra.mxu0 0
      %1448 = vmatprep.subr.bf16.mxu0 0
      %1449 = vmatpush1.bf16.msra.mxu0 0
      %1450 = vmatprep.subr.bf16.mxu0 0
      %1451 = vmatpush1.bf16.msra.mxu0 0
      %1452 = vmatprep.subr.bf16.mxu0 0
      %1453 = vmatpush1.bf16.msra.mxu0 %v1436
      %1454 = vmatprep.subr.bf16.mxu0 0
      %1455 = vmatpush2.bf16.msra.mxu0 0
      %1456 = vmatprep.subr.bf16.mxu0 0
      %1457 = vmatpush2.bf16.msra.mxu0 0
      %1458 = vmatprep.subr.bf16.mxu0 0
      %1459 = vmatpush2.bf16.msra.mxu0 0
      %1460 = vmatprep.subr.bf16.mxu0 0
      %1461 = vmatpush2.bf16.msra.mxu0 0
      %1462 = vmatprep.subr.bf16.mxu0 0
      %1463 = vmatpush2.bf16.msra.mxu0 0
      %1464 = vmatprep.subr.bf16.mxu0 0
      %1465 = vmatpush2.bf16.msra.mxu0 0
      %1466 = vmatprep.subr.bf16.mxu0 0
      %1467 = vmatpush2.bf16.msra.mxu0 0
      %1468 = vmatprep.subr.bf16.mxu0 0
      %1469 = vmatpush2.bf16.msra.mxu0 0
      %1470 = vmatprep.mubr.bf16.mxu0 0
      %1471 = vmatmul.mubr.bf16.gmra.mxu0 %v1433
      %v1472 = vpop.f32.mrf.mxu0
      %v1473 = vadd.f32 0.0, %v1472
      %v1474 = vpop.f32.mrf.mxu0
      %v1475 = vpop.f32.mrf.mxu0
      %v1476 = vpop.f32.mrf.mxu0
      %1477 = vdwg.mxu0
      %v1479 = vunpack.c.l.b16 %v608
      %v1480 = vpack.c.b16 %v1479, %v1479
      %1481 = vrot.lane.b32.xlu0 %v1480, 120
      %v1482 = vpop.permute.xlu0 %1481
      %v1484 = vsel %vm1084, %v1423, 0
      %v1487 = vsel %vm1169, %v1482, 0
      %1489 = vmatprep.subr.bf16.mxu0 0
      %1490 = vmatpush1.bf16.msra.mxu0 0
      %1491 = vmatprep.subr.bf16.mxu0 0
      %1492 = vmatpush1.bf16.msra.mxu0 0
      %1493 = vmatprep.subr.bf16.mxu0 0
      %1494 = vmatpush1.bf16.msra.mxu0 0
      %1495 = vmatprep.subr.bf16.mxu0 0
      %1496 = vmatpush1.bf16.msra.mxu0 0
      %1497 = vmatprep.subr.bf16.mxu0 0
      %1498 = vmatpush1.bf16.msra.mxu0 0
      %1499 = vmatprep.subr.bf16.mxu0 0
      %1500 = vmatpush1.bf16.msra.mxu0 0
      %1501 = vmatprep.subr.bf16.mxu0 0
      %1502 = vmatpush1.bf16.msra.mxu0 0
      %1503 = vmatprep.subr.bf16.mxu0 0
      %1504 = vmatpush1.bf16.msra.mxu0 %v1487
      %1505 = vmatprep.subr.bf16.mxu0 0
      %1506 = vmatpush2.bf16.msra.mxu0 0
      %1507 = vmatprep.subr.bf16.mxu0 0
      %1508 = vmatpush2.bf16.msra.mxu0 0
      %1509 = vmatprep.subr.bf16.mxu0 0
      %1510 = vmatpush2.bf16.msra.mxu0 0
      %1511 = vmatprep.subr.bf16.mxu0 0
      %1512 = vmatpush2.bf16.msra.mxu0 0
      %1513 = vmatprep.subr.bf16.mxu0 0
      %1514 = vmatpush2.bf16.msra.mxu0 0
      %1515 = vmatprep.subr.bf16.mxu0 0
      %1516 = vmatpush2.bf16.msra.mxu0 0
      %1517 = vmatprep.subr.bf16.mxu0 0
      %1518 = vmatpush2.bf16.msra.mxu0 0
      %1519 = vmatprep.subr.bf16.mxu0 0
      %1520 = vmatpush2.bf16.msra.mxu0 0
      %1521 = vmatprep.mubr.bf16.mxu0 0
      %1522 = vmatmul.mubr.bf16.gmra.mxu0 %v1484
      %v1523 = vpop.f32.mrf.mxu0
      %v1524 = vadd.f32 %v1473, %v1523
      %v1525 = vpop.f32.mrf.mxu0
      %v1526 = vpop.f32.mrf.mxu0
      %v1527 = vpop.f32.mrf.mxu0
      %1528 = vdwg.mxu0
      %v1529 = vld [vmem:[#allocation4] sm:$0xff]
      %1531 = vset.pattern.permute.xlu0 0
      %1532 = vperm.xlu0 %1531, %v1403
      %v1533 = vpop.permute.xlu0 %1532
      %v1535 = vmul.f32 %v1533, %v1529
      %1537 = vrot.lane.b32.xlu0 %v1524, 8
      %v1538 = vpop.permute.xlu0 %1537
      %v1540 = vadd.f32 %v1535, %v1538
      %vm1541 = vcmask 130112
      %1542 = vst.msk [vmem:[#allocation4] sm:$0xff] %vm1541, %v1540
      %1543 = vst.msk [vmem:[%s1395] sm:$0xff] %vm1158, %v1400
      %1544 = vrot.lane.b32.xlu0 %v1271, 112
      %v1545 = vpop.permute.xlu0 %1544
      %1546 = vrot.lane.b32.xlu0 %v1276, 112
      %v1547 = vpop.permute.xlu0 %1546
      %1548 = vset.pattern.permute.xlu0 2
      %1549 = vperm.xlu0 %1548, %v676
      %v1550 = vpop.permute.xlu0 %1549
      %1551 = vset.pattern.permute.xlu0 2
      %1552 = vperm.xlu0 %1551, %v722
      %v1553 = vpop.permute.xlu0 %1552
      %1554 = vset.pattern.permute.xlu0 2
      %1555 = vperm.xlu0 %1554, %v768
      %v1556 = vpop.permute.xlu0 %1555
      %1557 = vset.pattern.permute.xlu0 2
      %1558 = vperm.xlu0 %1557, %v814
      %v1559 = vpop.permute.xlu0 %1558
      %1560 = vset.pattern.permute.xlu0 2
      %1561 = vperm.xlu0 %1560, %v860
      %v1562 = vpop.permute.xlu0 %1561
      %1563 = vset.pattern.permute.xlu0 2
      %1564 = vperm.xlu0 %1563, %v906
      %v1565 = vpop.permute.xlu0 %1564
      %1566 = vset.pattern.permute.xlu0 2
      %1567 = vperm.xlu0 %1566, %v952
      %v1568 = vpop.permute.xlu0 %1567
      %1569 = vset.pattern.permute.xlu0 2
      %1570 = vperm.xlu0 %1569, %v998
      %v1571 = vpop.permute.xlu0 %1570
      %v1572 = vlaneseq
      %v1573 = vshrl.u32 %v1572, 7
      %v1574 = vsub.s32 %v1036, %v1573
      %v1575 = vrot.slane %v1550, %v1574
      %v1576 = vlaneseq
      %v1577 = vshrl.u32 %v1576, 7
      %v1578 = vsub.s32 %v1036, %v1577
      %v1579 = vrot.slane %v1553, %v1578
      %v1580 = vlaneseq
      %v1581 = vshrl.u32 %v1580, 7
      %v1582 = vsub.s32 %v1036, %v1581
      %v1583 = vrot.slane %v1556, %v1582
      %v1584 = vlaneseq
      %v1585 = vshrl.u32 %v1584, 7
      %v1586 = vsub.s32 %v1036, %v1585
      %v1587 = vrot.slane %v1559, %v1586
      %v1588 = vlaneseq
      %v1589 = vshrl.u32 %v1588, 7
      %v1590 = vsub.s32 %v1036, %v1589
      %v1591 = vrot.slane %v1562, %v1590
      %v1592 = vlaneseq
      %v1593 = vshrl.u32 %v1592, 7
      %v1594 = vsub.s32 %v1036, %v1593
      %v1595 = vrot.slane %v1565, %v1594
      %v1596 = vlaneseq
      %v1597 = vshrl.u32 %v1596, 7
      %v1598 = vsub.s32 %v1036, %v1597
      %v1599 = vrot.slane %v1568, %v1598
      %v1600 = vlaneseq
      %v1601 = vshrl.u32 %v1600, 7
      %v1602 = vsub.s32 %v1036, %v1601
      %v1603 = vrot.slane %v1571, %v1602
      %v1604 = vsel %vm1069, %v1579, %v1575
      %v1605 = vsel %vm1071, %v1583, %v1604
      %v1606 = vsel %vm1073, %v1587, %v1605
      %v1607 = vsel %vm1075, %v1591, %v1606
      %v1608 = vsel %vm1077, %v1595, %v1607
      %v1609 = vsel %vm1079, %v1599, %v1608
      %v1610 = vsel %vm1081, %v1603, %v1609
      %v1613 = vsel %vm1084, %v1545, 0
      %v1616 = vsel %vm1084, %v1547, 0
      %1618 = vmatprep.subr.bf16.mxu0 0
      %1619 = vmatpush1.bf16.xpose.msra.mxu0 0
      %1620 = vmatprep.subr.bf16.mxu0 0
      %1621 = vmatpush1.bf16.xpose.msra.mxu0 0
      %1622 = vmatprep.subr.bf16.mxu0 0
      %1623 = vmatpush1.bf16.xpose.msra.mxu0 0
      %1624 = vmatprep.subr.bf16.mxu0 0
      %1625 = vmatpush1.bf16.xpose.msra.mxu0 0
      %1626 = vmatprep.subr.bf16.mxu0 0
      %1627 = vmatpush1.bf16.xpose.msra.mxu0 0
      %1628 = vmatprep.subr.bf16.mxu0 0
      %1629 = vmatpush1.bf16.xpose.msra.mxu0 0
      %1630 = vmatprep.subr.bf16.mxu0 0
      %1631 = vmatpush1.bf16.xpose.msra.mxu0 0
      %1632 = vmatprep.subr.bf16.mxu0 0
      %1633 = vmatpush1.bf16.xpose.msra.mxu0 %v1616
      %1634 = vmatprep.subr.bf16.mxu0 0
      %1635 = vmatpush2.bf16.xpose.msra.mxu0 0
      %1636 = vmatprep.subr.bf16.mxu0 0
      %1637 = vmatpush2.bf16.xpose.msra.mxu0 0
      %1638 = vmatprep.subr.bf16.mxu0 0
      %1639 = vmatpush2.bf16.xpose.msra.mxu0 0
      %1640 = vmatprep.subr.bf16.mxu0 0
      %1641 = vmatpush2.bf16.xpose.msra.mxu0 0
      %1642 = vmatprep.subr.bf16.mxu0 0
      %1643 = vmatpush2.bf16.xpose.msra.mxu0 0
      %1644 = vmatprep.subr.bf16.mxu0 0
      %1645 = vmatpush2.bf16.xpose.msra.mxu0 0
      %1646 = vmatprep.subr.bf16.mxu0 0
      %1647 = vmatpush2.bf16.xpose.msra.mxu0 0
      %1648 = vmatprep.subr.bf16.mxu0 0
      %1649 = vmatpush2.bf16.xpose.msra.mxu0 0
      %1650 = vmatprep.mubr.bf16.mxu0 0
      %1651 = vmatmul.mubr.bf16.gmra.mxu0 %v1613
      %v1652 = vpop.f32.mrf.mxu0
      %v1653 = vadd.f32 %v1610, %v1652
      %v1654 = vpop.f32.mrf.mxu0
      %v1655 = vpop.f32.mrf.mxu0
      %v1656 = vpop.f32.mrf.mxu0
      %1657 = vdwg.mxu0
      %v1658 = vmul.f32 %v1653, 0.35355338
      %s1659 = scalar_lea.vmem %s571, 16
      %v1660 = vld [vmem:[%s1659] sm:$0xff]
      %vm1661 = vcmp.gt.f32.partialorder %v1660, 0.0
      %v1662 = vsub.f32 %v1658, 1e+30
      %v1663 = vsel %vm1661, %v1658, %v1662
      %s1664 = scalar_lea.vmem [#allocation2], 16
      %v1665 = vld [vmem:[%s1664] sm:$0xff]
      %v1666 = vsel %vm1084, %v1663, -inf
      %1667 = vmax.xlane.f32.xlu0 %v1666
      %v1668 = vpop.xlane.xlu0 %1667
      %v1669 = vmax.f32 %v1665, %v1668
      %v1670 = vsub.f32 %v1665, %v1669
      %v1671 = vmul.f32 %v1670, 1.442695
      %v1672 = vpow.pop %v1671
      %1674 = vset.pattern.permute.xlu0 0
      %1675 = vperm.xlu0 %1674, %v1669
      %v1676 = vpop.permute.xlu0 %1675
      %v1678 = vsub.f32 %v1663, %v1676
      %v1679 = vmul.f32 %v1678, 1.442695
      %v1680 = vpow.pop %v1679
      %s1681 = scalar_lea.vmem [#allocation3], 16
      %v1682 = vld [vmem:[%s1681] sm:$0xff]
      %v1683 = vmul.f32 %v1672, %v1682
      %v1684 = vsel %vm1084, %v1680, 0.0
      %1685 = vadd.xlane.f32.xlu0 %v1684
      %v1686 = vpop.xlane.xlu0 %1685
      %v1687 = vadd.f32 %v1683, %v1686
      %1688 = vst.msk [vmem:[%s1681] sm:$0xff] %vm1158, %v1687
      %s1689 = scalar_lea.vmem %s582, 16
      %v1690 = vld [vmem:[%s1689] sm:$0xff]
      %v1691 = vmul.f32 %v1680, %v1690
      %v1692 = vpack.c.bf16 %v1691, %v1691
      %v1693 = vsub.f32 1.0, %v1690
      %v1694 = vmul.f32 %v1680, %v1693
      %v1695 = vpack.c.bf16 %v1694, %v1694
      %1696 = vrot.lane.b32.xlu0 %v1429, 112
      %v1697 = vpop.permute.xlu0 %1696
      %v1699 = vsel %vm1084, %v1695, 0
      %v1702 = vsel %vm1169, %v1697, 0
      %1704 = vmatprep.subr.bf16.mxu0 0
      %1705 = vmatpush1.bf16.msra.mxu0 0
      %1706 = vmatprep.subr.bf16.mxu0 0
      %1707 = vmatpush1.bf16.msra.mxu0 0
      %1708 = vmatprep.subr.bf16.mxu0 0
      %1709 = vmatpush1.bf16.msra.mxu0 0
      %1710 = vmatprep.subr.bf16.mxu0 0
      %1711 = vmatpush1.bf16.msra.mxu0 0
      %1712 = vmatprep.subr.bf16.mxu0 0
      %1713 = vmatpush1.bf16.msra.mxu0 0
      %1714 = vmatprep.subr.bf16.mxu0 0
      %1715 = vmatpush1.bf16.msra.mxu0 0
      %1716 = vmatprep.subr.bf16.mxu0 0
      %1717 = vmatpush1.bf16.msra.mxu0 0
      %1718 = vmatprep.subr.bf16.mxu0 0
      %1719 = vmatpush1.bf16.msra.mxu0 %v1702
      %1720 = vmatprep.subr.bf16.mxu0 0
      %1721 = vmatpush2.bf16.msra.mxu0 0
      %1722 = vmatprep.subr.bf16.mxu0 0
      %1723 = vmatpush2.bf16.msra.mxu0 0
      %1724 = vmatprep.subr.bf16.mxu0 0
      %1725 = vmatpush2.bf16.msra.mxu0 0
      %1726 = vmatprep.subr.bf16.mxu0 0
      %1727 = vmatpush2.bf16.msra.mxu0 0
      %1728 = vmatprep.subr.bf16.mxu0 0
      %1729 = vmatpush2.bf16.msra.mxu0 0
      %1730 = vmatprep.subr.bf16.mxu0 0
      %1731 = vmatpush2.bf16.msra.mxu0 0
      %1732 = vmatprep.subr.bf16.mxu0 0
      %1733 = vmatpush2.bf16.msra.mxu0 0
      %1734 = vmatprep.subr.bf16.mxu0 0
      %1735 = vmatpush2.bf16.msra.mxu0 0
      %1736 = vmatprep.mubr.bf16.mxu0 0
      %1737 = vmatmul.mubr.bf16.gmra.mxu0 %v1699
      %v1738 = vpop.f32.mrf.mxu0
      %v1739 = vadd.f32 0.0, %v1738
      %v1740 = vpop.f32.mrf.mxu0
      %v1741 = vpop.f32.mrf.mxu0
      %v1742 = vpop.f32.mrf.mxu0
      %1743 = vdwg.mxu0
      %1744 = vrot.lane.b32.xlu0 %v1480, 112
      %v1745 = vpop.permute.xlu0 %1744
      %v1747 = vsel %vm1084, %v1692, 0
      %v1750 = vsel %vm1169, %v1745, 0
      %1752 = vmatprep.subr.bf16.mxu0 0
      %1753 = vmatpush1.bf16.msra.mxu0 0
      %1754 = vmatprep.subr.bf16.mxu0 0
      %1755 = vmatpush1.bf16.msra.mxu0 0
      %1756 = vmatprep.subr.bf16.mxu0 0
      %1757 = vmatpush1.bf16.msra.mxu0 0
      %1758 = vmatprep.subr.bf16.mxu0 0
      %1759 = vmatpush1.bf16.msra.mxu0 0
      %1760 = vmatprep.subr.bf16.mxu0 0
      %1761 = vmatpush1.bf16.msra.mxu0 0
      %1762 = vmatprep.subr.bf16.mxu0 0
      %1763 = vmatpush1.bf16.msra.mxu0 0
      %1764 = vmatprep.subr.bf16.mxu0 0
      %1765 = vmatpush1.bf16.msra.mxu0 0
      %1766 = vmatprep.subr.bf16.mxu0 0
      %1767 = vmatpush1.bf16.msra.mxu0 %v1750
      %1768 = vmatprep.subr.bf16.mxu0 0
      %1769 = vmatpush2.bf16.msra.mxu0 0
      %1770 = vmatprep.subr.bf16.mxu0 0
      %1771 = vmatpush2.bf16.msra.mxu0 0
      %1772 = vmatprep.subr.bf16.mxu0 0
      %1773 = vmatpush2.bf16.msra.mxu0 0
      %1774 = vmatprep.subr.bf16.mxu0 0
      %1775 = vmatpush2.bf16.msra.mxu0 0
      %1776 = vmatprep.subr.bf16.mxu0 0
      %1777 = vmatpush2.bf16.msra.mxu0 0
      %1778 = vmatprep.subr.bf16.mxu0 0
      %1779 = vmatpush2.bf16.msra.mxu0 0
      %1780 = vmatprep.subr.bf16.mxu0 0
      %1781 = vmatpush2.bf16.msra.mxu0 0
      %1782 = vmatprep.subr.bf16.mxu0 0
      %1783 = vmatpush2.bf16.msra.mxu0 0
      %1784 = vmatprep.mubr.bf16.mxu0 0
      %1785 = vmatmul.mubr.bf16.gmra.mxu0 %v1747
      %v1786 = vpop.f32.mrf.mxu0
      %v1787 = vadd.f32 %v1739, %v1786
      %v1788 = vpop.f32.mrf.mxu0
      %v1789 = vpop.f32.mrf.mxu0
      %v1790 = vpop.f32.mrf.mxu0
      %1791 = vdwg.mxu0
      %v1792 = vld [vmem:[#allocation4] sm:$0xff]
      %1794 = vset.pattern.permute.xlu0 0
      %1795 = vperm.xlu0 %1794, %v1672
      %v1796 = vpop.permute.xlu0 %1795
      %v1798 = vmul.f32 %v1796, %v1792
      %1800 = vrot.lane.b32.xlu0 %v1787, 16
      %v1801 = vpop.permute.xlu0 %1800
      %v1803 = vadd.f32 %v1798, %v1801
      %vm1804 = vcmask 195712
      %1805 = vst.msk [vmem:[#allocation4] sm:$0xff] %vm1804, %v1803
      %1806 = vst.msk [vmem:[%s1664] sm:$0xff] %vm1158, %v1669
      %1807 = vrot.lane.b32.xlu0 %v1271, 104
      %v1808 = vpop.permute.xlu0 %1807
      %1809 = vrot.lane.b32.xlu0 %v1276, 104
      %v1810 = vpop.permute.xlu0 %1809
      %1811 = vset.pattern.permute.xlu0 3
      %1812 = vperm.xlu0 %1811, %v676
      %v1813 = vpop.permute.xlu0 %1812
      %1814 = vset.pattern.permute.xlu0 3
      %1815 = vperm.xlu0 %1814, %v722
      %v1816 = vpop.permute.xlu0 %1815
      %1817 = vset.pattern.permute.xlu0 3
      %1818 = vperm.xlu0 %1817, %v768
      %v1819 = vpop.permute.xlu0 %1818
      %1820 = vset.pattern.permute.xlu0 3
      %1821 = vperm.xlu0 %1820, %v814
      %v1822 = vpop.permute.xlu0 %1821
      %1823 = vset.pattern.permute.xlu0 3
      %1824 = vperm.xlu0 %1823, %v860
      %v1825 = vpop.permute.xlu0 %1824
      %1826 = vset.pattern.permute.xlu0 3
      %1827 = vperm.xlu0 %1826, %v906
      %v1828 = vpop.permute.xlu0 %1827
      %1829 = vset.pattern.permute.xlu0 3
      %1830 = vperm.xlu0 %1829, %v952
      %v1831 = vpop.permute.xlu0 %1830
      %1832 = vset.pattern.permute.xlu0 3
      %1833 = vperm.xlu0 %1832, %v998
      %v1834 = vpop.permute.xlu0 %1833
      %v1835 = vlaneseq
      %v1836 = vshrl.u32 %v1835, 7
      %v1837 = vsub.s32 %v1036, %v1836
      %v1838 = vrot.slane %v1813, %v1837
      %v1839 = vlaneseq
      %v1840 = vshrl.u32 %v1839, 7
      %v1841 = vsub.s32 %v1036, %v1840
      %v1842 = vrot.slane %v1816, %v1841
      %v1843 = vlaneseq
      %v1844 = vshrl.u32 %v1843, 7
      %v1845 = vsub.s32 %v1036, %v1844
      %v1846 = vrot.slane %v1819, %v1845
      %v1847 = vlaneseq
      %v1848 = vshrl.u32 %v1847, 7
      %v1849 = vsub.s32 %v1036, %v1848
      %v1850 = vrot.slane %v1822, %v1849
      %v1851 = vlaneseq
      %v1852 = vshrl.u32 %v1851, 7
      %v1853 = vsub.s32 %v1036, %v1852
      %v1854 = vrot.slane %v1825, %v1853
      %v1855 = vlaneseq
      %v1856 = vshrl.u32 %v1855, 7
      %v1857 = vsub.s32 %v1036, %v1856
      %v1858 = vrot.slane %v1828, %v1857
      %v1859 = vlaneseq
      %v1860 = vshrl.u32 %v1859, 7
      %v1861 = vsub.s32 %v1036, %v1860
      %v1862 = vrot.slane %v1831, %v1861
      %v1863 = vlaneseq
      %v1864 = vshrl.u32 %v1863, 7
      %v1865 = vsub.s32 %v1036, %v1864
      %v1866 = vrot.slane %v1834, %v1865
      %v1867 = vsel %vm1069, %v1842, %v1838
      %v1868 = vsel %vm1071, %v1846, %v1867
      %v1869 = vsel %vm1073, %v1850, %v1868
      %v1870 = vsel %vm1075, %v1854, %v1869
      %v1871 = vsel %vm1077, %v1858, %v1870
      %v1872 = vsel %vm1079, %v1862, %v1871
      %v1873 = vsel %vm1081, %v1866, %v1872
      %v1876 = vsel %vm1084, %v1808, 0
      %v1879 = vsel %vm1084, %v1810, 0
      %1881 = vmatprep.subr.bf16.mxu0 0
      %1882 = vmatpush1.bf16.xpose.msra.mxu0 0
      %1883 = vmatprep.subr.bf16.mxu0 0
      %1884 = vmatpush1.bf16.xpose.msra.mxu0 0
      %1885 = vmatprep.subr.bf16.mxu0 0
      %1886 = vmatpush1.bf16.xpose.msra.mxu0 0
      %1887 = vmatprep.subr.bf16.mxu0 0
      %1888 = vmatpush1.bf16.xpose.msra.mxu0 0
      %1889 = vmatprep.subr.bf16.mxu0 0
      %1890 = vmatpush1.bf16.xpose.msra.mxu0 0
      %1891 = vmatprep.subr.bf16.mxu0 0
      %1892 = vmatpush1.bf16.xpose.msra.mxu0 0
      %1893 = vmatprep.subr.bf16.mxu0 0
      %1894 = vmatpush1.bf16.xpose.msra.mxu0 0
      %1895 = vmatprep.subr.bf16.mxu0 0
      %1896 = vmatpush1.bf16.xpose.msra.mxu0 %v1879
      %1897 = vmatprep.subr.bf16.mxu0 0
      %1898 = vmatpush2.bf16.xpose.msra.mxu0 0
      %1899 = vmatprep.subr.bf16.mxu0 0
      %1900 = vmatpush2.bf16.xpose.msra.mxu0 0
      %1901 = vmatprep.subr.bf16.mxu0 0
      %1902 = vmatpush2.bf16.xpose.msra.mxu0 0
      %1903 = vmatprep.subr.bf16.mxu0 0
      %1904 = vmatpush2.bf16.xpose.msra.mxu0 0
      %1905 = vmatprep.subr.bf16.mxu0 0
      %1906 = vmatpush2.bf16.xpose.msra.mxu0 0
      %1907 = vmatprep.subr.bf16.mxu0 0
      %1908 = vmatpush2.bf16.xpose.msra.mxu0 0
      %1909 = vmatprep.subr.bf16.mxu0 0
      %1910 = vmatpush2.bf16.xpose.msra.mxu0 0
      %1911 = vmatprep.subr.bf16.mxu0 0
      %1912 = vmatpush2.bf16.xpose.msra.mxu0 0
      %1913 = vmatprep.mubr.bf16.mxu0 0
      %1914 = vmatmul.mubr.bf16.gmra.mxu0 %v1876
      %v1915 = vpop.f32.mrf.mxu0
      %v1916 = vadd.f32 %v1873, %v1915
      %v1917 = vpop.f32.mrf.mxu0
      %v1918 = vpop.f32.mrf.mxu0
      %v1919 = vpop.f32.mrf.mxu0
      %1920 = vdwg.mxu0
      %v1921 = vmul.f32 %v1916, 0.35355338
      %s1922 = scalar_lea.vmem %s571, 24
      %v1923 = vld [vmem:[%s1922] sm:$0xff]
      %vm1924 = vcmp.gt.f32.partialorder %v1923, 0.0
      %v1925 = vsub.f32 %v1921, 1e+30
      %v1926 = vsel %vm1924, %v1921, %v1925
      %s1927 = scalar_lea.vmem [#allocation2], 24
      %v1928 = vld [vmem:[%s1927] sm:$0xff]
      %v1929 = vsel %vm1084, %v1926, -inf
      %1930 = vmax.xlane.f32.xlu0 %v1929
      %v1931 = vpop.xlane.xlu0 %1930
      %v1932 = vmax.f32 %v1928, %v1931
      %v1933 = vsub.f32 %v1928, %v1932
      %v1934 = vmul.f32 %v1933, 1.442695
      %v1935 = vpow.pop %v1934
      %1937 = vset.pattern.permute.xlu0 0
      %1938 = vperm.xlu0 %1937, %v1932
      %v1939 = vpop.permute.xlu0 %1938
      %v1941 = vsub.f32 %v1926, %v1939
      %v1942 = vmul.f32 %v1941, 1.442695
      %v1943 = vpow.pop %v1942
      %s1944 = scalar_lea.vmem [#allocation3], 24
      %v1945 = vld [vmem:[%s1944] sm:$0xff]
      %v1946 = vmul.f32 %v1935, %v1945
      %v1947 = vsel %vm1084, %v1943, 0.0
      %1948 = vadd.xlane.f32.xlu0 %v1947
      %v1949 = vpop.xlane.xlu0 %1948
      %v1950 = vadd.f32 %v1946, %v1949
      %1951 = vst.msk [vmem:[%s1944] sm:$0xff] %vm1158, %v1950
      %s1952 = scalar_lea.vmem %s582, 24
      %v1953 = vld [vmem:[%s1952] sm:$0xff]
      %v1954 = vmul.f32 %v1943, %v1953
      %v1955 = vpack.c.bf16 %v1954, %v1954
      %v1956 = vsub.f32 1.0, %v1953
      %v1957 = vmul.f32 %v1943, %v1956
      %v1958 = vpack.c.bf16 %v1957, %v1957
      %1959 = vrot.lane.b32.xlu0 %v1429, 104
      %v1960 = vpop.permute.xlu0 %1959
      %v1962 = vsel %vm1084, %v1958, 0
      %v1965 = vsel %vm1169, %v1960, 0
      %1967 = vmatprep.subr.bf16.mxu0 0
      %1968 = vmatpush1.bf16.msra.mxu0 0
      %1969 = vmatprep.subr.bf16.mxu0 0
      %1970 = vmatpush1.bf16.msra.mxu0 0
      %1971 = vmatprep.subr.bf16.mxu0 0
      %1972 = vmatpush1.bf16.msra.mxu0 0
      %1973 = vmatprep.subr.bf16.mxu0 0
      %1974 = vmatpush1.bf16.msra.mxu0 0
      %1975 = vmatprep.subr.bf16.mxu0 0
      %1976 = vmatpush1.bf16.msra.mxu0 0
      %1977 = vmatprep.subr.bf16.mxu0 0
      %1978 = vmatpush1.bf16.msra.mxu0 0
      %1979 = vmatprep.subr.bf16.mxu0 0
      %1980 = vmatpush1.bf16.msra.mxu0 0
      %1981 = vmatprep.subr.bf16.mxu0 0
      %1982 = vmatpush1.bf16.msra.mxu0 %v1965
      %1983 = vmatprep.subr.bf16.mxu0 0
      %1984 = vmatpush2.bf16.msra.mxu0 0
      %1985 = vmatprep.subr.bf16.mxu0 0
      %1986 = vmatpush2.bf16.msra.mxu0 0
      %1987 = vmatprep.subr.bf16.mxu0 0
      %1988 = vmatpush2.bf16.msra.mxu0 0
      %1989 = vmatprep.subr.bf16.mxu0 0
      %1990 = vmatpush2.bf16.msra.mxu0 0
      %1991 = vmatprep.subr.bf16.mxu0 0
      %1992 = vmatpush2.bf16.msra.mxu0 0
      %1993 = vmatprep.subr.bf16.mxu0 0
      %1994 = vmatpush2.bf16.msra.mxu0 0
      %1995 = vmatprep.subr.bf16.mxu0 0
      %1996 = vmatpush2.bf16.msra.mxu0 0
      %1997 = vmatprep.subr.bf16.mxu0 0
      %1998 = vmatpush2.bf16.msra.mxu0 0
      %1999 = vmatprep.mubr.bf16.mxu0 0
      %2000 = vmatmul.mubr.bf16.gmra.mxu0 %v1962
      %v2001 = vpop.f32.mrf.mxu0
      %v2002 = vadd.f32 0.0, %v2001
      %v2003 = vpop.f32.mrf.mxu0
      %v2004 = vpop.f32.mrf.mxu0
      %v2005 = vpop.f32.mrf.mxu0
      %2006 = vdwg.mxu0
      %2007 = vrot.lane.b32.xlu0 %v1480, 104
      %v2008 = vpop.permute.xlu0 %2007
      %v2010 = vsel %vm1084, %v1955, 0
      %v2013 = vsel %vm1169, %v2008, 0
      %2015 = vmatprep.subr.bf16.mxu0 0
      %2016 = vmatpush1.bf16.msra.mxu0 0
      %2017 = vmatprep.subr.bf16.mxu0 0
      %2018 = vmatpush1.bf16.msra.mxu0 0
      %2019 = vmatprep.subr.bf16.mxu0 0
      %2020 = vmatpush1.bf16.msra.mxu0 0
      %2021 = vmatprep.subr.bf16.mxu0 0
      %2022 = vmatpush1.bf16.msra.mxu0 0
      %2023 = vmatprep.subr.bf16.mxu0 0
      %2024 = vmatpush1.bf16.msra.mxu0 0
      %2025 = vmatprep.subr.bf16.mxu0 0
      %2026 = vmatpush1.bf16.msra.mxu0 0
      %2027 = vmatprep.subr.bf16.mxu0 0
      %2028 = vmatpush1.bf16.msra.mxu0 0
      %2029 = vmatprep.subr.bf16.mxu0 0
      %2030 = vmatpush1.bf16.msra.mxu0 %v2013
      %2031 = vmatprep.subr.bf16.mxu0 0
      %2032 = vmatpush2.bf16.msra.mxu0 0
      %2033 = vmatprep.subr.bf16.mxu0 0
      %2034 = vmatpush2.bf16.msra.mxu0 0
      %2035 = vmatprep.subr.bf16.mxu0 0
      %2036 = vmatpush2.bf16.msra.mxu0 0
      %2037 = vmatprep.subr.bf16.mxu0 0
      %2038 = vmatpush2.bf16.msra.mxu0 0
      %2039 = vmatprep.subr.bf16.mxu0 0
      %2040 = vmatpush2.bf16.msra.mxu0 0
      %2041 = vmatprep.subr.bf16.mxu0 0
      %2042 = vmatpush2.bf16.msra.mxu0 0
      %2043 = vmatprep.subr.bf16.mxu0 0
      %2044 = vmatpush2.bf16.msra.mxu0 0
      %2045 = vmatprep.subr.bf16.mxu0 0
      %2046 = vmatpush2.bf16.msra.mxu0 0
      %2047 = vmatprep.mubr.bf16.mxu0 0
      %2048 = vmatmul.mubr.bf16.gmra.mxu0 %v2010
      %v2049 = vpop.f32.mrf.mxu0
      %v2050 = vadd.f32 %v2002, %v2049
      %v2051 = vpop.f32.mrf.mxu0
      %v2052 = vpop.f32.mrf.mxu0
      %v2053 = vpop.f32.mrf.mxu0
      %2054 = vdwg.mxu0
      %v2055 = vld [vmem:[#allocation4] sm:$0xff]
      %2057 = vset.pattern.permute.xlu0 0
      %2058 = vperm.xlu0 %2057, %v1935
      %v2059 = vpop.permute.xlu0 %2058
      %v2061 = vmul.f32 %v2059, %v2055
      %2063 = vrot.lane.b32.xlu0 %v2050, 24
      %v2064 = vpop.permute.xlu0 %2063
      %v2066 = vadd.f32 %v2061, %v2064
      %vm2067 = vcmask 261312
      %2068 = vst.msk [vmem:[#allocation4] sm:$0xff] %vm2067, %v2066
      %2069 = vst.msk [vmem:[%s1927] sm:$0xff] %vm1158, %v1932
      // Predicated region
      $region57: #{transformer_layer_pallas.6} parent=51 // pred_check
        %p2070 = pneg %p591
      $region58: #{transformer_layer_pallas.6} parent=51 // pred_check_branch
        %2072 = sbr.rel (%p2070) target = $region60
      $region59: #{transformer_layer_pallas.6} parent=51 // pred_region
        %v2073 = vld [vmem:[#allocation3] sm:$0xff]
        %2075 = vset.pattern.permute.xlu0 0
        %2076 = vperm.xlu0 %2075, %v2073
        %v2077 = vpop.permute.xlu0 %2076
        %v2079 = vld [vmem:[%s1412] sm:$0xff]
        %2081 = vset.pattern.permute.xlu0 0
        %2082 = vperm.xlu0 %2081, %v2079
        %v2083 = vpop.permute.xlu0 %2082
        %v2085 = vld [vmem:[%s1681] sm:$0xff]
        %2087 = vset.pattern.permute.xlu0 0
        %2088 = vperm.xlu0 %2087, %v2085
        %v2089 = vpop.permute.xlu0 %2088
        %v2091 = vld [vmem:[%s1944] sm:$0xff]
        %2093 = vset.pattern.permute.xlu0 0
        %2094 = vperm.xlu0 %2093, %v2091
        %v2095 = vpop.permute.xlu0 %2094
        %v2097 = vsel %vm1084, %v2077, %v2083
        %vm2098 = vcmask 130048
        %v2099 = vsel %vm2098, %v2097, %v2089
        %vm2100 = vcmask 195584
        %v2101 = vsel %vm2100, %v2099, %v2095
        %v2102 = vrcp.pop %v2101
        %v2103 = vld [vmem:[#allocation4] sm:$0xff]
        %v2104 = vmul.f32 %v2103, %v2102
        %v2105 = vpack.c.bf16 %v2104, %v2104
        %vm2106 = vcmask 257024
        %2107 = vst.msk [vmem:[%s589] sm:$0xf] %vm2106, %v2105
      $region60: #{transformer_layer_pallas.6} parent=51 // pred_fallthru
        _
      %p2108 = scmp.lt.s32.totalorder %s24, 1
      %s2109 = scalar_select %p2108, %s24, 1
      %p2110 = scmp.lt.s32.totalorder %s25, 0
      %s2111 = scalar_select %p2110, %s25, 0
      %s2112 = sadd.s32 %s2111, %s2109
      %s2113 = smul.addr %s2112, 4
      %s2114 = scalar_lea.vmem %s8, %s2113
      // Predicated region
      $region61: #{transformer_layer_pallas.6} parent=51 // pred_check
        %p2115 = pneg %p288
      $region62: #{transformer_layer_pallas.6} parent=51 // pred_check_branch
        %2117 = sbr.rel (%p2115) target = $region64
      $region63: #{transformer_layer_pallas.6} parent=51 // pred_region
        _
      $region64: #{transformer_layer_pallas.6} parent=51 // pred_fallthru
        _
    $region52: #{transformer_layer_pallas.6} parent=5 // pred_fallthru
      _
    %p2118 = scmp.le.s32.totalorder 2, %s14
    // Predicated region
    $region65: #{transformer_layer_pallas.6} parent=5 // pred_check
      %p2119 = pneg %p2118
    $region66: #{transformer_layer_pallas.6} parent=5 // pred_check_branch
      %2121 = sbr.rel (%p2119) target = $region68
    $region67: #{transformer_layer_pallas.6} parent=5 // pred_region
      %s2122 = ssub.s32 %s14, 2
      // Predicated region
      $region69: #{transformer_layer_pallas.6} parent=67 // pred_check
        %p2123 = pneg %p294
      $region70: #{transformer_layer_pallas.6} parent=67 // pred_check_branch
        %2125 = sbr.rel (%p2123) target = $region72
      $region71: #{transformer_layer_pallas.6} parent=67 // pred_region
        %p2126 = scmp.lt.s32.totalorder %s27, 1
        %s2127 = scalar_select %p2126, %s27, 1
        %p2128 = scmp.lt.s32.totalorder %s28, 0
        %s2129 = scalar_select %p2128, %s28, 0
        %s2130 = sadd.s32 %s2129, %s2127
        %s2131 = smul.addr %s2130, 4
        %s2132 = scalar_lea.vmem %s8, %s2131
      $region72: #{transformer_layer_pallas.6} parent=67 // pred_fallthru
        _
    $region68: #{transformer_layer_pallas.6} parent=5 // pred_fallthru
      _
  $region6: #{transformer_layer_pallas.6} parent=0 // loop_footer
    %s18 = sadd.s32 1, %s14
  $region7: #{transformer_layer_pallas.6} parent=0 // loop_footer_branch
    %13 = sbr.rel target = $region3
  $region8: #{transformer_layer_pallas.6} parent=0 // loop_exit
    _

</llo_original>
